<compile_context>
chip_gen: v6e
topology: v6e:2x2x1
jax: 0.10.0
libtpu: 0.0.40
codegen_flags: <defaults>
</compile_context>

<pallas_src>
import functools

import jax
import jax.numpy as jnp
from jax.experimental import pallas as pl
from jax.experimental.pallas import tpu as pltpu

HIDDEN = 64
BN_EPS = 1e-5
LANE = 128

# Conservative cross-generation VMEM budget (v7x has 64 MiB/TC physical).
_VMEM_SOFT_CAP = 48 * 1024 * 1024


def _round_up(n, m):
    return -(-n // m) * m


def _fraud_kernel(x_ref, w1_ref, b1_ref, gamma_ref, beta_ref, w2_ref, b2_ref,
                  o_ref, sum_ref, aux_ref, hc_ref=None, *, batch, eps, cache_h):
    phase = pl.program_id(0)
    tile = pl.program_id(1)
    tb = o_ref.shape[1]

    # Rows >= batch belong to the (unspecified-valued) partial last tile; keep
    # them out of the batch statistics.  Their outputs are sliced off outside.
    row = tile * tb + jax.lax.broadcasted_iota(jnp.int32, (tb, 1), 0)
    valid = row < batch
    inv_n = 1.0 / batch

    def compute_h():
        # Linear(input_dim, 64) + ReLU: bf16 operands, f32 accumulation (MXU).
        xb = x_ref[...].astype(w1_ref.dtype)
        h = jnp.dot(xb, w1_ref[...], preferred_element_type=jnp.float32)
        return jnp.maximum(h + b1_ref[...], 0.0)                   # (tb, H) f32

    def normalize_project_store(h, mean, var):
        inv_std = jax.lax.rsqrt(var + eps)
        scale = gamma_ref[...] * inv_std
        shift = beta_ref[...] - mean * scale
        h_norm = h * scale + shift                                 # (tb, H)
        # Linear(64, 1) as VPU multiply + lane reduction (XLU) + Sigmoid (EUP).
        z = jnp.sum(h_norm * w2_ref[...], axis=-1) + b2_ref[0, 0]  # (tb,)
        sig = pl.reciprocal(1.0 + jnp.exp(-z), approx=True)
        o_ref[...] = sig[None, :]                                  # lane-dense (1, tb)

    if cache_h:
        # ---- phase 0: h once per row -> VMEM cache, accumulate sum(h) ----
        @pl.when(phase == 0)
        def _():
            @pl.when(tile == 0)
            def _():
                sum_ref[...] = jnp.zeros_like(sum_ref)
            hm = jnp.where(valid, compute_h(), 0.0)
            start = pl.multiple_of(tile * tb, tb)
            hc_ref[pl.ds(start, tb), :] = hm
            sum_ref[...] += jnp.sum(hm, axis=0, keepdims=True)

        # ---- phase 1: second stats pass (VMEM only): sum((h - mean)^2) ----
        @pl.when(phase == 1)
        def _():
            @pl.when(tile == 0)
            def _():
                aux_ref[...] = jnp.zeros_like(aux_ref)
            start = pl.multiple_of(tile * tb, tb)
            hm = hc_ref[pl.ds(start, tb), :]
            d = jnp.where(valid, hm - sum_ref[...] * inv_n, 0.0)
            aux_ref[...] += jnp.sum(d * d, axis=0, keepdims=True)

        # ---- phase 2: normalize with global stats + project (VMEM only) ----
        @pl.when(phase == 2)
        def _():
            start = pl.multiple_of(tile * tb, tb)
            hm = hc_ref[pl.ds(start, tb), :]
            mean = sum_ref[...] * inv_n
            var = aux_ref[...] * inv_n                 # biased var (training BN)
            normalize_project_store(hm, mean, var)
    else:
        # ---- fallback (h cache would not fit VMEM): recompute h in phase 1 ----
        @pl.when(phase == 0)
        def _():
            @pl.when(tile == 0)
            def _():
                sum_ref[...] = jnp.zeros_like(sum_ref)
                aux_ref[...] = jnp.zeros_like(aux_ref)
            hm = jnp.where(valid, compute_h(), 0.0)
            sum_ref[...] += jnp.sum(hm, axis=0, keepdims=True)
            aux_ref[...] += jnp.sum(hm * hm, axis=0, keepdims=True)

        @pl.when(phase == 1)
        def _():
            h = compute_h()
            mean = sum_ref[...] * inv_n
            var = jnp.maximum(aux_ref[...] * inv_n - mean * mean, 0.0)
            normalize_project_store(h, mean, var)


def fraud_detector_forward(x, w1, b1, gamma, beta, w2, b2, *,
                           block_batch=512, matmul_dtype=jnp.bfloat16,
                           eps=BN_EPS, use_h_cache=None):
    """x: (B, input_dim) f32 -> (B, 1) f32 probabilities (training-mode BN)."""
    f32 = jnp.float32
    B, D = x.shape
    H = w1.shape[1]

    tb = min(_round_up(max(block_batch, LANE), LANE), _round_up(B, LANE))
    num_tiles = pl.cdiv(B, tb)
    b_pad = num_tiles * tb
    h_lanes = _round_up(H, LANE)            # physical lane padding inside VMEM

    # Working-set estimate (bytes): resident weights, double-buffered x / out
    # blocks, BN scratch, optional f32 h cache.
    fixed = (D * h_lanes * 2 + 4 * h_lanes * 4 + 8     # W1 bf16 + param rows + b2
             + 2 * tb * _round_up(D, LANE) * 4         # x double buffer
             + 2 * tb * 4                              # out double buffer
             + 2 * 8 * LANE * 4)                       # BN sum / aux scratch
    cache_bytes = b_pad * h_lanes * 4
    if use_h_cache is None:
        use_h_cache = fixed + cache_bytes <= int(0.75 * _VMEM_SOFT_CAP)
    need = fixed + (cache_bytes if use_h_cache else 0)
    vmem_limit = int(min(max(2 * need, 32 * 1024 * 1024), _VMEM_SOFT_CAP))

    # x stays in its natural (B, D) f32 layout: no host-side pad/cast pass; the
    # in-kernel bf16 cast rides under the DMA.  Parameters are tiny, cast here.
    w1_p = w1.astype(matmul_dtype)                      # (D, H)
    b1_p = b1.reshape(1, H).astype(f32)
    gamma_p = gamma.reshape(1, H).astype(f32)
    beta_p = beta.reshape(1, H).astype(f32)
    w2_p = w2.reshape(1, H).astype(f32)
    b2_s = jnp.asarray(b2, f32).reshape(1, 1)

    n_phases = 3 if use_h_cache else 2
    last = n_phases - 1

    if use_h_cache:
        # x is only needed in phase 0; pin later phases to block 0 (no re-DMA).
        x_map = lambda p, i: (i * jnp.maximum(1 - p, 0), 0)
    else:
        x_map = lambda p, i: (i, 0)
    const = lambda p, i: (0, 0)
    # Only the last phase writes output; earlier phases pin block (0,0) so no
    # per-step zero writeback is needed.
    out_map = lambda p, i: (0, i * jnp.maximum(p - (last - 1), 0))

    scratch = [pltpu.VMEM((1, H), f32),     # sum(h)
               pltpu.VMEM((1, H), f32)]     # sum((h-mean)^2) or sum(h*h)
    if use_h_cache:
        scratch.append(pltpu.VMEM((b_pad, H), f32))   # cached post-ReLU h

    kernel = functools.partial(_fraud_kernel, batch=B, eps=eps,
                               cache_h=use_h_cache)

    out = pl.pallas_call(
        kernel,
        out_shape=jax.ShapeDtypeStruct((1, b_pad), f32),
        grid=(n_phases, num_tiles),                    # (phase, batch tile)
        in_specs=[
            pl.BlockSpec((tb, D), x_map),              # x tile (partial last ok)
            pl.BlockSpec((D, H), const),               # W1 (VMEM-resident)
            pl.BlockSpec((1, H), const),               # b1
            pl.BlockSpec((1, H), const),               # gamma
            pl.BlockSpec((1, H), const),               # beta
            pl.BlockSpec((1, H), const),               # W2 as a row
            pl.BlockSpec(memory_space=pltpu.MemorySpace.SMEM),   # b2 scalar
        ],
        out_specs=pl.BlockSpec((1, tb), out_map),
        scratch_shapes=scratch,
        compiler_params=pltpu.CompilerParams(
            dimension_semantics=("arbitrary", "arbitrary"),
            vmem_limit_bytes=vmem_limit,
        ),
    )(x.astype(f32), w1_p, b1_p, gamma_p, beta_p, w2_p, b2_s)

    return out[0, :B].reshape(B, 1)


def init_params(key, input_dim):
    """Deterministic init mimicking PyTorch Linear defaults (uniform +-1/sqrt(fan_in))."""
    k1, k2, k3, k4 = jax.random.split(key, 4)
    lim1 = 1.0 / jnp.sqrt(input_dim)
    w1 = jax.random.uniform(k1, (input_dim, HIDDEN), jnp.float32, -lim1, lim1)
    b1 = jax.random.uniform(k2, (1, HIDDEN), jnp.float32, -lim1, lim1)
    gamma = jnp.ones((1, HIDDEN), jnp.float32)
    beta = jnp.zeros((1, HIDDEN), jnp.float32)
    lim2 = 1.0 / jnp.sqrt(HIDDEN)
    w2 = jax.random.uniform(k3, (HIDDEN, 1), jnp.float32, -lim2, lim2)
    b2 = jax.random.uniform(k4, (1, 1), jnp.float32, -lim2, lim2)
    return w1, b1, gamma, beta, w2, b2


def _reference(x, params):
    # Pure-JAX reference (same bf16 matmul operands / f32 accumulation,
    # training-mode BatchNorm with biased variance).
    w1, b1, gamma, beta, w2, b2 = params
    h = jnp.maximum(
        jnp.dot(x.astype(jnp.bfloat16), w1.astype(jnp.bfloat16),
                preferred_element_type=jnp.float32) + b1, 0.0)
    mean = h.mean(axis=0, keepdims=True)
    var = ((h - mean) ** 2).mean(axis=0, keepdims=True)
    hn = (h - mean) / jnp.sqrt(var + BN_EPS) * gamma + beta
    return jax.nn.sigmoid(hn @ w2 + b2)


if __name__ == "__main__":
    key = jax.random.PRNGKey(0)
    k_x, k_p = jax.random.split(key)

    input_dim = 32
    params = init_params(k_p, input_dim)

    # Configs: default cached single tile; cached multi-tile with a partial
    # last tile; and the no-cache recompute fallback.
    configs = [
        (200, dict()),
        (300, dict(block_batch=128)),
        (300, dict(block_batch=128, use_h_cache=False)),
    ]
    for batch, kwargs in configs:
        x = jax.random.normal(jax.random.fold_in(k_x, batch),
                              (batch, input_dim), jnp.float32)
        out = fraud_detector_forward(x, *params, **kwargs)
        jax.block_until_ready(out)

        ref = _reference(x, params)
        assert out.shape == (batch, 1), out.shape
        max_err = float(jnp.max(jnp.abs(out - ref)))
        assert jnp.allclose(out, ref, atol=3e-3, rtol=0.0), (batch, kwargs, max_err)

    print("KERNEL_OK")
</pallas_src>

<mosaic_0001>
module attributes {stable_mosaic.version = 11 : i64} {
  func.func @_fraud_kernel(%arg0: i32, %arg1: i32, %arg2: memref<256x32xf32, #tpu.memory_space<vmem>>, %arg3: memref<32x64xbf16, #tpu.memory_space<vmem>>, %arg4: memref<1x64xf32, #tpu.memory_space<vmem>>, %arg5: memref<1x64xf32, #tpu.memory_space<vmem>>, %arg6: memref<1x64xf32, #tpu.memory_space<vmem>>, %arg7: memref<1x64xf32, #tpu.memory_space<vmem>>, %arg8: memref<1x1xf32, #tpu.memory_space<smem>>, %arg9: memref<1x256xf32, #tpu.memory_space<vmem>>, %arg10: memref<1x64xf32, #tpu.memory_space<vmem>>, %arg11: memref<1x64xf32, #tpu.memory_space<vmem>>, %arg12: memref<256x64xf32, #tpu.memory_space<vmem>>) attributes {dimension_semantics = [#tpu.dimension_semantics<arbitrary>, #tpu.dimension_semantics<arbitrary>], iteration_bounds = array<i64: 3, 1>, scalar_prefetch = 0 : i64, scratch_operands = 3 : i64, tpu.core_type = #tpu.core_type<tc>, window_params = [{transform_indices = @transform_0, window_bounds = array<i64: 256, 32>}, {pipeline_mode = #tpu.pipeline_mode<synchronous>, transform_indices = @transform_1, window_bounds = array<i64: 32, 64>}, {pipeline_mode = #tpu.pipeline_mode<synchronous>, transform_indices = @transform_2, window_bounds = array<i64: 1, 64>}, {pipeline_mode = #tpu.pipeline_mode<synchronous>, transform_indices = @transform_3, window_bounds = array<i64: 1, 64>}, {pipeline_mode = #tpu.pipeline_mode<synchronous>, transform_indices = @transform_4, window_bounds = array<i64: 1, 64>}, {pipeline_mode = #tpu.pipeline_mode<synchronous>, transform_indices = @transform_5, window_bounds = array<i64: 1, 64>}, {transform_indices = @transform_6, window_bounds = array<i64: 1, 1>}, {transform_indices = @transform_7, window_bounds = array<i64: 1, 256>}]} {
    %c256_i32 = arith.constant 256 : i32
    %0 = arith.muli %arg1, %c256_i32 : i32
    %1 = tpu.iota {dimensions = array<i32: 0>} : vector<256x1xi32>
    %2 = vector.broadcast %0 : i32 to vector<256x1xi32>
    %3 = arith.addi %2, %1 : vector<256x1xi32>
    %c200_i32 = arith.constant 200 : i32
    %4 = vector.broadcast %c200_i32 : i32 to vector<256x1xi32>
    %5 = arith.cmpi slt, %3, %4 : vector<256x1xi32>
    %c0_i32 = arith.constant 0 : i32
    %6 = arith.cmpi eq, %arg0, %c0_i32 : i32
    %7 = arith.extui %6 : i1 to i32
    %c0_i32_0 = arith.constant 0 : i32
    %8 = arith.cmpi ne, %7, %c0_i32_0 : i32
    scf.if %8 {
      %c0_i32_3 = arith.constant 0 : i32
      %15 = arith.cmpi eq, %arg1, %c0_i32_3 : i32
      %16 = arith.extui %15 : i1 to i32
      %c0_i32_4 = arith.constant 0 : i32
      %17 = arith.cmpi ne, %16, %c0_i32_4 : i32
      scf.if %17 {
        %cst_19 = arith.constant 0.000000e+00 : f32
        %40 = vector.broadcast %cst_19 : f32 to vector<1x64xf32>
        %c0_20 = arith.constant 0 : index
        %c0_21 = arith.constant 0 : index
        %41 = vector.load %arg10[%c0_20, %c0_21] : memref<1x64xf32, #tpu.memory_space<vmem>>, vector<1x64xf32>
        tpu.vector_store %arg10[%c0_20, %c0_21], %40 {strides = array<i32>} : memref<1x64xf32, #tpu.memory_space<vmem>>, vector<1x64xf32>,
      } else {
      }
      %c0 = arith.constant 0 : index
      %c0_5 = arith.constant 0 : index
      %18 = vector.load %arg2[%c0, %c0_5] : memref<256x32xf32, #tpu.memory_space<vmem>>, vector<256x32xf32>
      %19 = arith.truncf %18 : vector<256x32xf32> to vector<256x32xbf16>
      %c0_6 = arith.constant 0 : index
      %c0_7 = arith.constant 0 : index
      %20 = vector.load %arg3[%c0_6, %c0_7] : memref<32x64xbf16, #tpu.memory_space<vmem>>, vector<32x64xbf16>
      %cst = arith.constant dense<0.000000e+00> : vector<256x64xf32>
      %21 = tpu.matmul %19, %20, %cst {dimension_numbers = #tpu.dot_dimension_numbers<[1], [0], [0], [1], [0, 0, 1, 1], [], []>} : vector<256x32xbf16>, vector<32x64xbf16>, vector<256x64xf32> -> vector<256x64xf32>
      %c0_8 = arith.constant 0 : index
      %c0_9 = arith.constant 0 : index
      %22 = vector.load %arg4[%c0_8, %c0_9] : memref<1x64xf32, #tpu.memory_space<vmem>>, vector<1x64xf32>
      %23 = vector.broadcast %22 : vector<1x64xf32> to vector<256x64xf32>
      %24 = arith.addf %21, %23 : vector<256x64xf32>
      %cst_10 = arith.constant 0.000000e+00 : f32
      %25 = vector.broadcast %cst_10 : f32 to vector<256x64xf32>
      %26 = arith.maximumf %24, %25 : vector<256x64xf32>
      %cst_11 = arith.constant 0.000000e+00 : f32
      %27 = vector.shape_cast %5 : vector<256x1xi1> to vector<256x1xi1>
      %28 = vector.broadcast %27 : vector<256x1xi1> to vector<256x64xi1>
      %29 = vector.broadcast %cst_11 : f32 to vector<256x64xf32>
      %30 = arith.select %28, %26, %29 : vector<256x64xi1>, vector<256x64xf32>
      %c256_i32_12 = arith.constant 256 : i32
      %31 = arith.muli %arg1, %c256_i32_12 : i32
      %32 = tpu.assume_multiple %31, 256 : i32
      %33 = arith.index_cast %32 : i32 to index
      %c0_13 = arith.constant 0 : index
      %34 = vector.load %arg12[%33, %c0_13] : memref<256x64xf32, #tpu.memory_space<vmem>>, vector<256x64xf32>
      tpu.vector_store %arg12[%33, %c0_13], %30 {strides = array<i32>} : memref<256x64xf32, #tpu.memory_space<vmem>>, vector<256x64xf32>,
      %c0_14 = arith.constant 0 : index
      %c0_15 = arith.constant 0 : index
      %35 = vector.load %arg10[%c0_14, %c0_15] : memref<1x64xf32, #tpu.memory_space<vmem>>, vector<1x64xf32>
      %cst_16 = arith.constant dense<0.000000e+00> : vector<64xf32>
      %36 = vector.multi_reduction <add>, %30, %cst_16 [0] : vector<256x64xf32> to vector<64xf32>
      %37 = vector.shape_cast %36 : vector<64xf32> to vector<1x64xf32>
      %38 = arith.addf %35, %37 : vector<1x64xf32>
      %c0_17 = arith.constant 0 : index
      %c0_18 = arith.constant 0 : index
      %39 = vector.load %arg10[%c0_17, %c0_18] : memref<1x64xf32, #tpu.memory_space<vmem>>, vector<1x64xf32>
      tpu.vector_store %arg10[%c0_17, %c0_18], %38 {strides = array<i32>} : memref<1x64xf32, #tpu.memory_space<vmem>>, vector<1x64xf32>,
    } else {
    }
    %c1_i32 = arith.constant 1 : i32
    %9 = arith.cmpi eq, %arg0, %c1_i32 : i32
    %10 = arith.extui %9 : i1 to i32
    %c0_i32_1 = arith.constant 0 : i32
    %11 = arith.cmpi ne, %10, %c0_i32_1 : i32
    scf.if %11 {
      %c0_i32_3 = arith.constant 0 : i32
      %15 = arith.cmpi eq, %arg1, %c0_i32_3 : i32
      %16 = arith.extui %15 : i1 to i32
      %c0_i32_4 = arith.constant 0 : i32
      %17 = arith.cmpi ne, %16, %c0_i32_4 : i32
      scf.if %17 {
        %cst_14 = arith.constant 0.000000e+00 : f32
        %37 = vector.broadcast %cst_14 : f32 to vector<1x64xf32>
        %c0_15 = arith.constant 0 : index
        %c0_16 = arith.constant 0 : index
        %38 = vector.load %arg11[%c0_15, %c0_16] : memref<1x64xf32, #tpu.memory_space<vmem>>, vector<1x64xf32>
        tpu.vector_store %arg11[%c0_15, %c0_16], %37 {strides = array<i32>} : memref<1x64xf32, #tpu.memory_space<vmem>>, vector<1x64xf32>,
      } else {
      }
      %c256_i32_5 = arith.constant 256 : i32
      %18 = arith.muli %arg1, %c256_i32_5 : i32
      %19 = tpu.assume_multiple %18, 256 : i32
      %20 = arith.index_cast %19 : i32 to index
      %c0 = arith.constant 0 : index
      %21 = vector.load %arg12[%20, %c0] : memref<256x64xf32, #tpu.memory_space<vmem>>, vector<256x64xf32>
      %c0_6 = arith.constant 0 : index
      %c0_7 = arith.constant 0 : index
      %22 = vector.load %arg10[%c0_6, %c0_7] : memref<1x64xf32, #tpu.memory_space<vmem>>, vector<1x64xf32>
      %cst = arith.constant 5.000000e-03 : f32
      %23 = vector.broadcast %cst : f32 to vector<1x64xf32>
      %24 = arith.mulf %22, %23 : vector<1x64xf32>
      %25 = vector.broadcast %24 : vector<1x64xf32> to vector<256x64xf32>
      %26 = arith.subf %21, %25 : vector<256x64xf32>
      %cst_8 = arith.constant 0.000000e+00 : f32
      %27 = vector.shape_cast %5 : vector<256x1xi1> to vector<256x1xi1>
      %28 = vector.broadcast %27 : vector<256x1xi1> to vector<256x64xi1>
      %29 = vector.broadcast %cst_8 : f32 to vector<256x64xf32>
      %30 = arith.select %28, %26, %29 : vector<256x64xi1>, vector<256x64xf32>
      %c0_9 = arith.constant 0 : index
      %c0_10 = arith.constant 0 : index
      %31 = vector.load %arg11[%c0_9, %c0_10] : memref<1x64xf32, #tpu.memory_space<vmem>>, vector<1x64xf32>
      %32 = arith.mulf %30, %30 : vector<256x64xf32>
      %cst_11 = arith.constant dense<0.000000e+00> : vector<64xf32>
      %33 = vector.multi_reduction <add>, %32, %cst_11 [0] : vector<256x64xf32> to vector<64xf32>
      %34 = vector.shape_cast %33 : vector<64xf32> to vector<1x64xf32>
      %35 = arith.addf %31, %34 : vector<1x64xf32>
      %c0_12 = arith.constant 0 : index
      %c0_13 = arith.constant 0 : index
      %36 = vector.load %arg11[%c0_12, %c0_13] : memref<1x64xf32, #tpu.memory_space<vmem>>, vector<1x64xf32>
      tpu.vector_store %arg11[%c0_12, %c0_13], %35 {strides = array<i32>} : memref<1x64xf32, #tpu.memory_space<vmem>>, vector<1x64xf32>,
    } else {
    }
    %c2_i32 = arith.constant 2 : i32
    %12 = arith.cmpi eq, %arg0, %c2_i32 : i32
    %13 = arith.extui %12 : i1 to i32
    %c0_i32_2 = arith.constant 0 : i32
    %14 = arith.cmpi ne, %13, %c0_i32_2 : i32
    scf.if %14 {
      %c256_i32_3 = arith.constant 256 : i32
      %15 = arith.muli %arg1, %c256_i32_3 : i32
      %16 = tpu.assume_multiple %15, 256 : i32
      %17 = arith.index_cast %16 : i32 to index
      %c0 = arith.constant 0 : index
      %18 = vector.load %arg12[%17, %c0] : memref<256x64xf32, #tpu.memory_space<vmem>>, vector<256x64xf32>
      %c0_4 = arith.constant 0 : index
      %c0_5 = arith.constant 0 : index
      %19 = vector.load %arg10[%c0_4, %c0_5] : memref<1x64xf32, #tpu.memory_space<vmem>>, vector<1x64xf32>
      %cst = arith.constant 5.000000e-03 : f32
      %20 = vector.broadcast %cst : f32 to vector<1x64xf32>
      %21 = arith.mulf %19, %20 : vector<1x64xf32>
      %c0_6 = arith.constant 0 : index
      %c0_7 = arith.constant 0 : index
      %22 = vector.load %arg11[%c0_6, %c0_7] : memref<1x64xf32, #tpu.memory_space<vmem>>, vector<1x64xf32>
      %cst_8 = arith.constant 5.000000e-03 : f32
      %23 = vector.broadcast %cst_8 : f32 to vector<1x64xf32>
      %24 = arith.mulf %22, %23 : vector<1x64xf32>
      %cst_9 = arith.constant 9.99999974E-6 : f32
      %25 = vector.broadcast %cst_9 : f32 to vector<1x64xf32>
      %26 = arith.addf %24, %25 : vector<1x64xf32>
      %27 = math.rsqrt %26 : vector<1x64xf32>
      %c0_10 = arith.constant 0 : index
      %c0_11 = arith.constant 0 : index
      %28 = vector.load %arg5[%c0_10, %c0_11] : memref<1x64xf32, #tpu.memory_space<vmem>>, vector<1x64xf32>
      %29 = arith.mulf %28, %27 : vector<1x64xf32>
      %c0_12 = arith.constant 0 : index
      %c0_13 = arith.constant 0 : index
      %30 = vector.load %arg6[%c0_12, %c0_13] : memref<1x64xf32, #tpu.memory_space<vmem>>, vector<1x64xf32>
      %31 = arith.mulf %21, %29 : vector<1x64xf32>
      %32 = arith.subf %30, %31 : vector<1x64xf32>
      %33 = vector.broadcast %29 : vector<1x64xf32> to vector<256x64xf32>
      %34 = arith.mulf %18, %33 : vector<256x64xf32>
      %35 = vector.broadcast %32 : vector<1x64xf32> to vector<256x64xf32>
      %36 = arith.addf %34, %35 : vector<256x64xf32>
      %c0_14 = arith.constant 0 : index
      %c0_15 = arith.constant 0 : index
      %37 = vector.load %arg7[%c0_14, %c0_15] : memref<1x64xf32, #tpu.memory_space<vmem>>, vector<1x64xf32>
      %38 = vector.broadcast %37 : vector<1x64xf32> to vector<256x64xf32>
      %39 = arith.mulf %36, %38 : vector<256x64xf32>
      %cst_16 = arith.constant dense<0.000000e+00> : vector<256xf32>
      %40 = vector.multi_reduction <add>, %39, %cst_16 [1] : vector<256x64xf32> to vector<256xf32>
      %c0_17 = arith.constant 0 : index
      %c0_18 = arith.constant 0 : index
      %41 = memref.load %arg8[%c0_17, %c0_18] : memref<1x1xf32, #tpu.memory_space<smem>>
      %42 = vector.broadcast %41 : f32 to vector<256xf32>
      %43 = arith.addf %40, %42 : vector<256xf32>
      %cst_19 = arith.constant 0.000000e+00 : f32
      %44 = vector.broadcast %cst_19 : f32 to vector<256xf32>
      %45 = arith.subf %44, %43 : vector<256xf32>
      %46 = math.exp %45 : vector<256xf32>
      %cst_20 = arith.constant 1.000000e+00 : f32
      %47 = vector.broadcast %cst_20 : f32 to vector<256xf32>
      %48 = arith.addf %47, %46 : vector<256xf32>
      %49 = tpu.reciprocal %48 {approx = true} : vector<256xf32> -> vector<256xf32>
      %50 = vector.shape_cast %49 : vector<256xf32> to vector<1x256xf32>
      %c0_21 = arith.constant 0 : index
      %c0_22 = arith.constant 0 : index
      %51 = vector.load %arg9[%c0_21, %c0_22] : memref<1x256xf32, #tpu.memory_space<vmem>>, vector<1x256xf32>
      tpu.vector_store %arg9[%c0_21, %c0_22], %50 {strides = array<i32>} : memref<1x256xf32, #tpu.memory_space<vmem>>, vector<1x256xf32>,
    } else {
    }
    return
  }
  func.func @transform_0(%arg0: i32, %arg1: i32) -> (i32, i32) {
    %c1_i32 = arith.constant 1 : i32
    %0 = arith.subi %c1_i32, %arg0 : i32
    %c0_i32 = arith.constant 0 : i32
    %1 = arith.maxsi %0, %c0_i32 : i32
    %2 = arith.muli %arg1, %1 : i32
    %c0_i32_0 = arith.constant 0 : i32
    %c0_i32_1 = arith.constant 0 : i32
    return %2, %c0_i32_0 : i32, i32
  }
  func.func @transform_1(%arg0: i32, %arg1: i32) -> (i32, i32) {
    %c0_i32 = arith.constant 0 : i32
    %c0_i32_0 = arith.constant 0 : i32
    %c0_i32_1 = arith.constant 0 : i32
    return %c0_i32, %c0_i32_0 : i32, i32
  }
  func.func @transform_2(%arg0: i32, %arg1: i32) -> (i32, i32) {
    %c0_i32 = arith.constant 0 : i32
    %c0_i32_0 = arith.constant 0 : i32
    %c0_i32_1 = arith.constant 0 : i32
    return %c0_i32, %c0_i32_0 : i32, i32
  }
  func.func @transform_3(%arg0: i32, %arg1: i32) -> (i32, i32) {
    %c0_i32 = arith.constant 0 : i32
    %c0_i32_0 = arith.constant 0 : i32
    %c0_i32_1 = arith.constant 0 : i32
    return %c0_i32, %c0_i32_0 : i32, i32
  }
  func.func @transform_4(%arg0: i32, %arg1: i32) -> (i32, i32) {
    %c0_i32 = arith.constant 0 : i32
    %c0_i32_0 = arith.constant 0 : i32
    %c0_i32_1 = arith.constant 0 : i32
    return %c0_i32, %c0_i32_0 : i32, i32
  }
  func.func @transform_5(%arg0: i32, %arg1: i32) -> (i32, i32) {
    %c0_i32 = arith.constant 0 : i32
    %c0_i32_0 = arith.constant 0 : i32
    %c0_i32_1 = arith.constant 0 : i32
    return %c0_i32, %c0_i32_0 : i32, i32
  }
  func.func @transform_6(%arg0: i32, %arg1: i32) -> (i32, i32) {
    %c0_i32 = arith.constant 0 : i32
    %c0_i32_0 = arith.constant 0 : i32
    %c0_i32_1 = arith.constant 0 : i32
    return %c0_i32, %c0_i32_0 : i32, i32
  }
  func.func @transform_7(%arg0: i32, %arg1: i32) -> (i32, i32) {
    %c1_i32 = arith.constant 1 : i32
    %0 = arith.subi %arg0, %c1_i32 : i32
    %c0_i32 = arith.constant 0 : i32
    %1 = arith.maxsi %0, %c0_i32 : i32
    %2 = arith.muli %arg1, %1 : i32
    %c0_i32_0 = arith.constant 0 : i32
    %c0_i32_1 = arith.constant 0 : i32
    return %c0_i32_0, %2 : i32, i32
  }
}

</mosaic_0001>

<llo_original>
// kernel: tpu_custom_call.1
$region0: #{tpu_custom_call.1}
  #allocation0 [shape = 'u32[]', space=smem, size = 0x4, offset = 0x4, fixed_abs, tag = 'smem constant byte address 0x4 - core index']
  #allocation1 [shape = 'u32[144,128]{1,0:T(1,128)}', space=vmem, size = 0x12000, scoped, tag = 'internal scratch']
  #allocation2 [shape = 'f32[1,64]{1,0:T(1,128)}', space=vmem, size = 0x200, scoped, tag = 'scratch operand']
  #allocation3 [shape = 'f32[1,64]{1,0:T(1,128)}', space=vmem, size = 0x200, scoped, tag = 'scratch operand']
  #allocation4 [shape = 'f32[256,64]{1,0:T(8,128)}', space=vmem, size = 0x20000, scoped, tag = 'scratch operand']
  #allocation5 [shape = 'f32[1,1]{1,0:T(1,128)S(6)}', space=smem, size = 0x200, scoped, tag = 'scoped memory for tpu_custom_call.1']
  %s0 = inlined_call_operand.vmem [shape: f32[200,32], index: 0, kind: input, shape index: {}]
  %s1 = inlined_call_operand.vmem [shape: bf16[32,64], index: 1, kind: input, shape index: {}]
  %s2 = inlined_call_operand.vmem [shape: f32[1,64], index: 2, kind: input, shape index: {}]
  %s3 = inlined_call_operand.vmem [shape: f32[1,64], index: 3, kind: input, shape index: {}]
  %s4 = inlined_call_operand.vmem [shape: f32[1,64], index: 4, kind: input, shape index: {}]
  %s5 = inlined_call_operand.vmem [shape: f32[1,64], index: 5, kind: input, shape index: {}]
  %s6 = inlined_call_operand.<no memory space> [shape: f32[1,1], index: 6, kind: input, shape index: {}]
  %s7 = inlined_call_operand.hbm [shape: f32[1,256], index: 7, kind: output, shape index: {}]
  %s8 = sld [smem:[#allocation0]]
  $region81: #{tpu_custom_call.1} parent=0
    _
  %s10 = ssub.s32 1, %s8
  %s11 = scalar_select 0, %s10, %s8
  %12 = sst [smem:[#allocation5]] %s6
  $region1: #{tpu_custom_call.1} parent=0
    #allocation6 [shape = 'u8[2048]{0}', space=vmem, size = 0x800, scoped, tag = 'output window, operand 0']
    #allocation7 [shape = 's32[2]{0}', space=sflag, size = 0x8, scoped, tag = 'scoped memory for tpu_custom_call.1']
    %13 = vsyncpa [#allocation7], 0
    %s14 = scalar_lea.sflag [#allocation7], 1
    %15 = vsyncpa %s14, 0
    loop: start=0, step=1, limit=5
    $region2: #{tpu_custom_call.1} parent=1 // loop_pre_header
      _
    $region3: #{tpu_custom_call.1} parent=1 // loop_header
      %s17 = sphi 0, %s21
      %p18 = scmp.ge.s32.totalorder %s17, 5
      %s24 = sphi 0, %s36
      %s25 = sphi 0, %s32
      %s26 = sphi 0, %s24
      %s27 = sphi 0, %s25
      %s28 = sphi 0, %s26
      %s29 = sphi 0, %s27
      %s47 = sphi 0, %s49
      %s50 = sphi 0, %s47
      %s51 = sphi 0, %s50
      %s67 = sphi 0, %s51
      %s71 = sphi 0, %s71
      %s73 = sphi 0, %s71
      %s74 = sphi 0, %s73
      %s88 = sphi 0, %s74
      %s92 = sphi 0, %s92
      %s94 = sphi 0, %s92
      %s95 = sphi 0, %s94
      %s109 = sphi 0, %s95
      %s113 = sphi 0, %s113
      %s115 = sphi 0, %s113
      %s116 = sphi 0, %s115
      %s130 = sphi 0, %s116
      %s134 = sphi 0, %s134
      %s136 = sphi 0, %s134
      %s137 = sphi 0, %s136
      %s151 = sphi 0, %s137
      %s155 = sphi 0, %s155
      %s157 = sphi 0, %s155
      %s158 = sphi 0, %s157
      %s172 = sphi 0, %s158
      %s176 = sphi 0, %s176
      %s178 = sphi 0, %s176
      %s179 = sphi 0, %s178
      %s193 = sphi 0, %s179
      %s207 = sphi 0, %s209
      %s210 = sphi 0, %s207
      %s211 = sphi 0, %s210
      %s227 = sphi 0, %s211
    $region4: #{tpu_custom_call.1} parent=1 // loop_header_branch
      %20 = sbr.rel (%p18) target = $region8
    $region5: #{tpu_custom_call.1} parent=1 // loop_body
      %s22 = ssub.s32 %s17, 1
      %s23 = ssub.s32 %s17, 2
      %s30 = sadd.s32 1, %s25
      %p31 = scmp.ge.s32.totalorder %s30, 1
      %s32 = scalar_select %p31, 0, %s30
      %s33 = sadd.s32 1, %s24
      %s34 = scalar_select %p31, %s33, %s24
      %p35 = scmp.ge.s32.totalorder %s34, 3
      %s36 = scalar_select %p35, 0, %s34
      %s37 = ssub.s32 1, %s24
      %p38 = scmp.gt.s32.totalorder %s37, 0
      %s39 = scalar_select %p38, %s37, 0
      %s40 = smul.u32 %s25, %s39
      %s41 = ssub.s32 1, %s36
      %p42 = scmp.gt.s32.totalorder %s41, 0
      %s43 = scalar_select %p42, %s41, 0
      %s44 = smul.u32 %s32, %s43
      %s45 = ssub.s32 %s40, %s44
      %p46 = scmp.eq.s32.totalorder %s45, 0
      %s48 = sadd.s32 %s47, 1
      %s49 = scalar_select %p46, %s47, %s48
      %p52 = pneg %p46
      %p53 = scmp.eq.s32.totalorder %s17, 2
      %p54 = por %p52, %p53
      %p55 = scmp.ne.s32.totalorder %s47, %s50
      %p56 = scmp.eq.s32.totalorder %s17, 0
      %p57 = por %p55, %p56
      %p58 = scmp.ne.s32.totalorder %s47, %s50
      %p59 = scmp.eq.s32.totalorder %s22, 2
      %p60 = por %p58, %p59
      %p61 = scmp.ne.s32.totalorder %s50, %s51
      %p62 = scmp.eq.s32.totalorder %s22, 0
      %p63 = por %p61, %p62
      %p64 = scmp.ne.s32.totalorder %s50, %s51
      %p65 = scmp.eq.s32.totalorder %s23, 2
      %p66 = por %p64, %p65
      %p68 = scmp.ne.s32.totalorder %s51, %s67
      %p69 = scmp.eq.s32.totalorder %s23, 0
      %p70 = por %p68, %p69
      %s72 = sadd.s32 %s71, 1
      %p75 = scmp.eq.s32.totalorder %s17, 2
      %p76 = scmp.ne.s32.totalorder %s71, %s73
      %p77 = scmp.eq.s32.totalorder %s17, 0
      %p78 = por %p76, %p77
      %p79 = scmp.ne.s32.totalorder %s71, %s73
      %p80 = scmp.eq.s32.totalorder %s22, 2
      %p81 = por %p79, %p80
      %p82 = scmp.ne.s32.totalorder %s73, %s74
      %p83 = scmp.eq.s32.totalorder %s22, 0
      %p84 = por %p82, %p83
      %p85 = scmp.ne.s32.totalorder %s73, %s74
      %p86 = scmp.eq.s32.totalorder %s23, 2
      %p87 = por %p85, %p86
      %p89 = scmp.ne.s32.totalorder %s74, %s88
      %p90 = scmp.eq.s32.totalorder %s23, 0
      %p91 = por %p89, %p90
      %s93 = sadd.s32 %s92, 1
      %p96 = scmp.eq.s32.totalorder %s17, 2
      %p97 = scmp.ne.s32.totalorder %s92, %s94
      %p98 = scmp.eq.s32.totalorder %s17, 0
      %p99 = por %p97, %p98
      %p100 = scmp.ne.s32.totalorder %s92, %s94
      %p101 = scmp.eq.s32.totalorder %s22, 2
      %p102 = por %p100, %p101
      %p103 = scmp.ne.s32.totalorder %s94, %s95
      %p104 = scmp.eq.s32.totalorder %s22, 0
      %p105 = por %p103, %p104
      %p106 = scmp.ne.s32.totalorder %s94, %s95
      %p107 = scmp.eq.s32.totalorder %s23, 2
      %p108 = por %p106, %p107
      %p110 = scmp.ne.s32.totalorder %s95, %s109
      %p111 = scmp.eq.s32.totalorder %s23, 0
      %p112 = por %p110, %p111
      %s114 = sadd.s32 %s113, 1
      %p117 = scmp.eq.s32.totalorder %s17, 2
      %p118 = scmp.ne.s32.totalorder %s113, %s115
      %p119 = scmp.eq.s32.totalorder %s17, 0
      %p120 = por %p118, %p119
      %p121 = scmp.ne.s32.totalorder %s113, %s115
      %p122 = scmp.eq.s32.totalorder %s22, 2
      %p123 = por %p121, %p122
      %p124 = scmp.ne.s32.totalorder %s115, %s116
      %p125 = scmp.eq.s32.totalorder %s22, 0
      %p126 = por %p124, %p125
      %p127 = scmp.ne.s32.totalorder %s115, %s116
      %p128 = scmp.eq.s32.totalorder %s23, 2
      %p129 = por %p127, %p128
      %p131 = scmp.ne.s32.totalorder %s116, %s130
      %p132 = scmp.eq.s32.totalorder %s23, 0
      %p133 = por %p131, %p132
      %s135 = sadd.s32 %s134, 1
      %p138 = scmp.eq.s32.totalorder %s17, 2
      %p139 = scmp.ne.s32.totalorder %s134, %s136
      %p140 = scmp.eq.s32.totalorder %s17, 0
      %p141 = por %p139, %p140
      %p142 = scmp.ne.s32.totalorder %s134, %s136
      %p143 = scmp.eq.s32.totalorder %s22, 2
      %p144 = por %p142, %p143
      %p145 = scmp.ne.s32.totalorder %s136, %s137
      %p146 = scmp.eq.s32.totalorder %s22, 0
      %p147 = por %p145, %p146
      %p148 = scmp.ne.s32.totalorder %s136, %s137
      %p149 = scmp.eq.s32.totalorder %s23, 2
      %p150 = por %p148, %p149
      %p152 = scmp.ne.s32.totalorder %s137, %s151
      %p153 = scmp.eq.s32.totalorder %s23, 0
      %p154 = por %p152, %p153
      %s156 = sadd.s32 %s155, 1
      %p159 = scmp.eq.s32.totalorder %s17, 2
      %p160 = scmp.ne.s32.totalorder %s155, %s157
      %p161 = scmp.eq.s32.totalorder %s17, 0
      %p162 = por %p160, %p161
      %p163 = scmp.ne.s32.totalorder %s155, %s157
      %p164 = scmp.eq.s32.totalorder %s22, 2
      %p165 = por %p163, %p164
      %p166 = scmp.ne.s32.totalorder %s157, %s158
      %p167 = scmp.eq.s32.totalorder %s22, 0
      %p168 = por %p166, %p167
      %p169 = scmp.ne.s32.totalorder %s157, %s158
      %p170 = scmp.eq.s32.totalorder %s23, 2
      %p171 = por %p169, %p170
      %p173 = scmp.ne.s32.totalorder %s158, %s172
      %p174 = scmp.eq.s32.totalorder %s23, 0
      %p175 = por %p173, %p174
      %s177 = sadd.s32 %s176, 1
      %p180 = scmp.eq.s32.totalorder %s17, 2
      %p181 = scmp.ne.s32.totalorder %s176, %s178
      %p182 = scmp.eq.s32.totalorder %s17, 0
      %p183 = por %p181, %p182
      %p184 = scmp.ne.s32.totalorder %s176, %s178
      %p185 = scmp.eq.s32.totalorder %s22, 2
      %p186 = por %p184, %p185
      %p187 = scmp.ne.s32.totalorder %s178, %s179
      %p188 = scmp.eq.s32.totalorder %s22, 0
      %p189 = por %p187, %p188
      %p190 = scmp.ne.s32.totalorder %s178, %s179
      %p191 = scmp.eq.s32.totalorder %s23, 2
      %p192 = por %p190, %p191
      %p194 = scmp.ne.s32.totalorder %s179, %s193
      %p195 = scmp.eq.s32.totalorder %s23, 0
      %p196 = por %p194, %p195
      %s197 = ssub.s32 %s24, 1
      %p198 = scmp.gt.s32.totalorder %s197, 0
      %s199 = scalar_select %p198, %s197, 0
      %s200 = smul.u32 %s25, %s199
      %s201 = ssub.s32 %s36, 1
      %p202 = scmp.gt.s32.totalorder %s201, 0
      %s203 = scalar_select %p202, %s201, 0
      %s204 = smul.u32 %s32, %s203
      %s205 = ssub.s32 %s200, %s204
      %p206 = scmp.eq.s32.totalorder %s205, 0
      %s208 = sadd.s32 %s207, 1
      %s209 = scalar_select %p206, %s207, %s208
      %p212 = pneg %p206
      %p213 = scmp.eq.s32.totalorder %s17, 2
      %p214 = por %p212, %p213
      %p215 = scmp.ne.s32.totalorder %s207, %s210
      %p216 = scmp.eq.s32.totalorder %s17, 0
      %p217 = por %p215, %p216
      %p218 = scmp.ne.s32.totalorder %s207, %s210
      %p219 = scmp.eq.s32.totalorder %s22, 2
      %p220 = por %p218, %p219
      %p221 = scmp.ne.s32.totalorder %s210, %s211
      %p222 = scmp.eq.s32.totalorder %s22, 0
      %p223 = por %p221, %p222
      %p224 = scmp.ne.s32.totalorder %s210, %s211
      %p225 = scmp.eq.s32.totalorder %s23, 2
      %p226 = por %p224, %p225
      %p228 = scmp.ne.s32.totalorder %s211, %s227
      %p229 = scmp.eq.s32.totalorder %s23, 0
      %p230 = por %p228, %p229
      %p231 = scmp.le.s32.totalorder 1, %s17
      %p232 = scmp.lt.s32.totalorder %s17, 4
      %p233 = pnand %p231, %p232
      %p234 = pneg %p233
      // Predicated region
      $region9: #{tpu_custom_call.1} parent=5 // pred_check
        _
      $region10: #{tpu_custom_call.1} parent=5 // pred_check_branch
        %236 = sbr.rel (%p233) target = $region12
      $region11: #{tpu_custom_call.1} parent=5 // pred_region
        %s237 = ssub.s32 %s17, 1
        // Predicated region
        $region13: #{tpu_custom_call.1} parent=11 // pred_check
          %p238 = pneg %p84
        $region14: #{tpu_custom_call.1} parent=11 // pred_check_branch
          %240 = sbr.rel (%p238) target = $region16
        $region15: #{tpu_custom_call.1} parent=11 // pred_region
          _
        $region16: #{tpu_custom_call.1} parent=11 // pred_fallthru
          _
        // Predicated region
        $region17: #{tpu_custom_call.1} parent=11 // pred_check
          %p241 = pneg %p105
        $region18: #{tpu_custom_call.1} parent=11 // pred_check_branch
          %243 = sbr.rel (%p241) target = $region20
        $region19: #{tpu_custom_call.1} parent=11 // pred_region
          _
        $region20: #{tpu_custom_call.1} parent=11 // pred_fallthru
          _
        // Predicated region
        $region21: #{tpu_custom_call.1} parent=11 // pred_check
          %p244 = pneg %p126
        $region22: #{tpu_custom_call.1} parent=11 // pred_check_branch
          %246 = sbr.rel (%p244) target = $region24
        $region23: #{tpu_custom_call.1} parent=11 // pred_region
          _
        $region24: #{tpu_custom_call.1} parent=11 // pred_fallthru
          _
        // Predicated region
        $region25: #{tpu_custom_call.1} parent=11 // pred_check
          %p247 = pneg %p147
        $region26: #{tpu_custom_call.1} parent=11 // pred_check_branch
          %249 = sbr.rel (%p247) target = $region28
        $region27: #{tpu_custom_call.1} parent=11 // pred_region
          _
        $region28: #{tpu_custom_call.1} parent=11 // pred_fallthru
          _
        // Predicated region
        $region29: #{tpu_custom_call.1} parent=11 // pred_check
          %p250 = pneg %p168
        $region30: #{tpu_custom_call.1} parent=11 // pred_check_branch
          %252 = sbr.rel (%p250) target = $region32
        $region31: #{tpu_custom_call.1} parent=11 // pred_region
          _
        $region32: #{tpu_custom_call.1} parent=11 // pred_fallthru
          _
        // Predicated region
        $region33: #{tpu_custom_call.1} parent=11 // pred_check
          %p253 = pneg %p189
        $region34: #{tpu_custom_call.1} parent=11 // pred_check_branch
          %255 = sbr.rel (%p253) target = $region36
        $region35: #{tpu_custom_call.1} parent=11 // pred_region
          _
        $region36: #{tpu_custom_call.1} parent=11 // pred_fallthru
          _
      $region12: #{tpu_custom_call.1} parent=5 // pred_fallthru
        _
      %p256 = scmp.lt.s32.totalorder %s17, 3
      // Predicated region
      $region37: #{tpu_custom_call.1} parent=5 // pred_check
        %p257 = pneg %p256
      $region38: #{tpu_custom_call.1} parent=5 // pred_check_branch
        %259 = sbr.rel (%p257) target = $region40
      $region39: #{tpu_custom_call.1} parent=5 // pred_region
        // Predicated region
        $region41: #{tpu_custom_call.1} parent=39 // pred_check
          %p260 = pneg %p57
        $region42: #{tpu_custom_call.1} parent=39 // pred_check_branch
          %262 = sbr.rel (%p260) target = $region44
        $region43: #{tpu_custom_call.1} parent=39 // pred_region
          %s263 = ssub.s32 1, %s24
          %p264 = scmp.gt.s32.totalorder %s263, 0
          %s265 = scalar_select %p264, %s263, 0
          %s266 = smul.u32 %s25, %s265
          %s267 = smul.u32 32, %s266
          %s268 = ssub.s32 25, %s267
          %s269 = smul.u32 128, %s268
          %p270 = scmp.lt.s32.totalorder %s267, 24
          %s271 = scalar_select %p270, %s267, 24
          %s272 = smul.addr %s271, 8
          %s273 = scalar_lea.vmem %s0, %s272
          %s274 = ssub.s32 1, %s24
          %p275 = scmp.gt.s32.totalorder %s274, 0
          %s276 = scalar_select %p275, %s274, 0
          %s277 = smul.u32 %s25, %s276
          %s278 = smul.u32 32, %s277
          %s279 = ssub.s32 25, %s278
          %s280 = smul.u32 128, %s279
        $region44: #{tpu_custom_call.1} parent=39 // pred_fallthru
          _
      $region40: #{tpu_custom_call.1} parent=5 // pred_fallthru
        _
      %p281 = scmp.le.s32.totalorder 1, %s17
      %p282 = scmp.lt.s32.totalorder %s17, 4
      %p283 = pnand %p281, %p282
      %p284 = pneg %p283
      // Predicated region
      $region45: #{tpu_custom_call.1} parent=5 // pred_check
        _
      $region46: #{tpu_custom_call.1} parent=5 // pred_check_branch
        %286 = sbr.rel (%p283) target = $region48
      $region47: #{tpu_custom_call.1} parent=5 // pred_region
        %s287 = ssub.s32 %s17, 1
        %s288 = ssub.s32 1, %s26
        %p289 = scmp.gt.s32.totalorder %s288, 0
        %s290 = scalar_select %p289, %s288, 0
        %s291 = smul.u32 %s27, %s290
        %s292 = smul.u32 32, %s291
        %s293 = ssub.s32 25, %s292
        %s294 = smul.u32 128, %s293
        %p295 = scmp.lt.s32.totalorder %s292, 24
        %s296 = scalar_select %p295, %s292, 24
        %s297 = smul.addr %s296, 8
        %s298 = scalar_lea.vmem %s0, %s297
        %p299 = pneg %p63
        %p300 = pneg %p60
        %p301 = pneg %p84
        %p302 = pneg %p81
        %p303 = pneg %p105
        %p304 = pneg %p102
        %p305 = pneg %p126
        %p306 = pneg %p123
        %p307 = pneg %p147
        %p308 = pneg %p144
        %p309 = pneg %p168
        %p310 = pneg %p165
        %p311 = pneg %p189
        %p312 = pneg %p186
        %p313 = pneg %p223
        %p314 = pneg %p220
        %s315 = sand.u32 %s210, 1
        %s316 = scalar_lea.sflag [#allocation7], %s315
        %s317 = sand.u32 %s210, 1
        %s318 = smul.addr %s317, 2
        %s319 = scalar_lea.vmem [#allocation6], %s318
        %s320 = ssub.s32 1, %s26
        %p321 = scmp.gt.s32.totalorder %s320, 0
        %s322 = scalar_select %p321, %s320, 0
        %s323 = smul.u32 %s27, %s322
        %s324 = smul.u32 32, %s323
        %s325 = ssub.s32 25, %s324
        %s326 = smul.u32 128, %s325
        %p327 = scmp.lt.s32.totalorder %s324, 24
        %s328 = scalar_select %p327, %s324, 24
        %s329 = smul.addr %s328, 8
        %s330 = scalar_lea.vmem %s0, %s329
        %s331 = ssub.s32 1, %s26
        %p332 = scmp.gt.s32.totalorder %s331, 0
        %s333 = scalar_select %p332, %s331, 0
        %s334 = smul.u32 %s27, %s333
        %s335 = smul.u32 32, %s334
        %s336 = ssub.s32 25, %s335
        %s337 = smul.u32 128, %s336
        %s338 = ssub.s32 %s26, 1
        %p339 = scmp.gt.s32.totalorder %s338, 0
        %s340 = scalar_select %p339, %s338, 0
        %s341 = smul.u32 %s27, %s340
        %s342 = smul.u32 2, %s341
        %s344 = smul.u32 %s27, 256
        %v345 = vlaneseq
        %v346 = vshrl.u32 %v345, 7
        %v347 = vadd.s32 %v346, 8
        %v348 = vadd.s32 %v346, 16
        %v349 = vadd.s32 %v346, 24
        %v350 = vadd.s32 %v346, 32
        %v351 = vadd.s32 %v346, 40
        %v352 = vadd.s32 %v346, 48
        %v353 = vadd.s32 %v346, 56
        %v354 = vadd.s32 %v346, 64
        %v355 = vadd.s32 %v346, 72
        %v356 = vadd.s32 %v346, 80
        %v357 = vadd.s32 %v346, 88
        %v358 = vadd.s32 %v346, 96
        %v359 = vadd.s32 %v346, 104
        %v360 = vadd.s32 %v346, 112
        %v361 = vadd.s32 %v346, 120
        %v362 = vadd.s32 %v346, 128
        %v363 = vadd.s32 %v346, 136
        %v364 = vadd.s32 %v346, 144
        %v365 = vadd.s32 %v346, 152
        %v366 = vadd.s32 %v346, 160
        %v367 = vadd.s32 %v346, 168
        %v368 = vadd.s32 %v346, 176
        %v369 = vadd.s32 %v346, 184
        %v370 = vadd.s32 %v346, 192
        %v371 = vadd.s32 %v346, 200
        %v372 = vadd.s32 %v346, 208
        %v373 = vadd.s32 %v346, 216
        %v374 = vadd.s32 %v346, 224
        %v375 = vadd.s32 %v346, 232
        %v376 = vadd.s32 %v346, 240
        %v377 = vadd.s32 %v346, 248
        %v378 = vstv %s344
        %v379 = vadd.s32 %v378, %v346
        %v380 = vadd.s32 %v378, %v347
        %v381 = vadd.s32 %v378, %v348
        %v382 = vadd.s32 %v378, %v349
        %v383 = vadd.s32 %v378, %v350
        %v384 = vadd.s32 %v378, %v351
        %v385 = vadd.s32 %v378, %v352
        %v386 = vadd.s32 %v378, %v353
        %v387 = vadd.s32 %v378, %v354
        %v388 = vadd.s32 %v378, %v355
        %v389 = vadd.s32 %v378, %v356
        %v390 = vadd.s32 %v378, %v357
        %v391 = vadd.s32 %v378, %v358
        %v392 = vadd.s32 %v378, %v359
        %v393 = vadd.s32 %v378, %v360
        %v394 = vadd.s32 %v378, %v361
        %v395 = vadd.s32 %v378, %v362
        %v396 = vadd.s32 %v378, %v363
        %v397 = vadd.s32 %v378, %v364
        %v398 = vadd.s32 %v378, %v365
        %v399 = vadd.s32 %v378, %v366
        %v400 = vadd.s32 %v378, %v367
        %v401 = vadd.s32 %v378, %v368
        %v402 = vadd.s32 %v378, %v369
        %v403 = vadd.s32 %v378, %v370
        %v404 = vadd.s32 %v378, %v371
        %v405 = vadd.s32 %v378, %v372
        %v406 = vadd.s32 %v378, %v373
        %v407 = vadd.s32 %v378, %v374
        %v408 = vadd.s32 %v378, %v375
        %v409 = vadd.s32 %v378, %v376
        %v410 = vadd.s32 %v378, %v377
        %vm411 = vcmp.lt.s32.totalorder %v379, 200
        %vm412 = vcmp.lt.s32.totalorder %v380, 200
        %vm413 = vcmp.lt.s32.totalorder %v381, 200
        %vm414 = vcmp.lt.s32.totalorder %v382, 200
        %vm415 = vcmp.lt.s32.totalorder %v383, 200
        %vm416 = vcmp.lt.s32.totalorder %v384, 200
        %vm417 = vcmp.lt.s32.totalorder %v385, 200
        %vm418 = vcmp.lt.s32.totalorder %v386, 200
        %vm419 = vcmp.lt.s32.totalorder %v387, 200
        %vm420 = vcmp.lt.s32.totalorder %v388, 200
        %vm421 = vcmp.lt.s32.totalorder %v389, 200
        %vm422 = vcmp.lt.s32.totalorder %v390, 200
        %vm423 = vcmp.lt.s32.totalorder %v391, 200
        %vm424 = vcmp.lt.s32.totalorder %v392, 200
        %vm425 = vcmp.lt.s32.totalorder %v393, 200
        %vm426 = vcmp.lt.s32.totalorder %v394, 200
        %vm427 = vcmp.lt.s32.totalorder %v395, 200
        %vm428 = vcmp.lt.s32.totalorder %v396, 200
        %vm429 = vcmp.lt.s32.totalorder %v397, 200
        %vm430 = vcmp.lt.s32.totalorder %v398, 200
        %vm431 = vcmp.lt.s32.totalorder %v399, 200
        %vm432 = vcmp.lt.s32.totalorder %v400, 200
        %vm433 = vcmp.lt.s32.totalorder %v401, 200
        %vm434 = vcmp.lt.s32.totalorder %v402, 200
        %vm435 = vcmp.lt.s32.totalorder %v403, 200
        %vm436 = vcmp.lt.s32.totalorder %v404, 200
        %vm437 = vcmp.lt.s32.totalorder %v405, 200
        %vm438 = vcmp.lt.s32.totalorder %v406, 200
        %vm439 = vcmp.lt.s32.totalorder %v407, 200
        %vm440 = vcmp.lt.s32.totalorder %v408, 200
        %vm441 = vcmp.lt.s32.totalorder %v409, 200
        %vm442 = vcmp.lt.s32.totalorder %v410, 200
        %p443 = scmp.eq.s32.totalorder %s26, 0
        // Predicated region
        $region49: #{tpu_custom_call.1} parent=47 // pred_check
          %p444 = pneg %p443
        $region50: #{tpu_custom_call.1} parent=47 // pred_check_branch
          %446 = sbr.rel (%p444) target = $region52
        $region51: #{tpu_custom_call.1} parent=47 // pred_region
          %p447 = scmp.eq.s32.totalorder %s27, 0
          // Predicated region
          $region53: #{tpu_custom_call.1} parent=51 // pred_check
            %p448 = pneg %p447
          $region54: #{tpu_custom_call.1} parent=51 // pred_check_branch
            %450 = sbr.rel (%p448) target = $region56
          $region55: #{tpu_custom_call.1} parent=51 // pred_region
            %vm451 = vcmask 516096
            %452 = vst.msk [vmem:[#allocation2] sm:$0x1] %vm451, 0.0
          $region56: #{tpu_custom_call.1} parent=51 // pred_fallthru
            _
          %v453 = vld [vmem:[%s330] sm:$0xff]
          %v454 = vld [vmem:[%s330 + $0x8] sm:$0xff]
          %v455 = vld [vmem:[%s330 + $0x10] sm:$0xff]
          %v456 = vld [vmem:[%s330 + $0x18] sm:$0xff]
          %v457 = vld [vmem:[%s330 + $0x20] sm:$0xff]
          %v458 = vld [vmem:[%s330 + $0x28] sm:$0xff]
          %v459 = vld [vmem:[%s330 + $0x30] sm:$0xff]
          %v460 = vld [vmem:[%s330 + $0x38] sm:$0xff]
          %v461 = vld [vmem:[%s330 + $0x40] sm:$0xff]
          %v462 = vld [vmem:[%s330 + $0x48] sm:$0xff]
          %v463 = vld [vmem:[%s330 + $0x50] sm:$0xff]
          %v464 = vld [vmem:[%s330 + $0x58] sm:$0xff]
          %v465 = vld [vmem:[%s330 + $0x60] sm:$0xff]
          %v466 = vld [vmem:[%s330 + $0x68] sm:$0xff]
          %v467 = vld [vmem:[%s330 + $0x70] sm:$0xff]
          %v468 = vld [vmem:[%s330 + $0x78] sm:$0xff]
          %v469 = vld [vmem:[%s330 + $0x80] sm:$0xff]
          %v470 = vld [vmem:[%s330 + $0x88] sm:$0xff]
          %v471 = vld [vmem:[%s330 + $0x90] sm:$0xff]
          %v472 = vld [vmem:[%s330 + $0x98] sm:$0xff]
          %v473 = vld [vmem:[%s330 + $0xa0] sm:$0xff]
          %v474 = vld [vmem:[%s330 + $0xa8] sm:$0xff]
          %v475 = vld [vmem:[%s330 + $0xb0] sm:$0xff]
          %v476 = vld [vmem:[%s330 + $0xb8] sm:$0xff]
          %v477 = vld [vmem:[%s330 + $0xc0] sm:$0xff]
          %v478 = vld [vmem:[%s330 + $0xc8] sm:$0xff]
          %v479 = vld [vmem:[%s330 + $0xd0] sm:$0xff]
          %v480 = vld [vmem:[%s330 + $0xd8] sm:$0xff]
          %v481 = vld [vmem:[%s330 + $0xe0] sm:$0xff]
          %v482 = vld [vmem:[%s330 + $0xe8] sm:$0xff]
          %v483 = vld [vmem:[%s330 + $0xf0] sm:$0xff]
          %v484 = vld [vmem:[%s330 + $0xf8] sm:$0xff]
          %v485 = vpack.c.bf16 %v454, %v453
          %v486 = vpack.c.bf16 %v456, %v455
          %v487 = vpack.c.bf16 %v458, %v457
          %v488 = vpack.c.bf16 %v460, %v459
          %v489 = vpack.c.bf16 %v462, %v461
          %v490 = vpack.c.bf16 %v464, %v463
          %v491 = vpack.c.bf16 %v466, %v465
          %v492 = vpack.c.bf16 %v468, %v467
          %v493 = vpack.c.bf16 %v470, %v469
          %v494 = vpack.c.bf16 %v472, %v471
          %v495 = vpack.c.bf16 %v474, %v473
          %v496 = vpack.c.bf16 %v476, %v475
          %v497 = vpack.c.bf16 %v478, %v477
          %v498 = vpack.c.bf16 %v480, %v479
          %v499 = vpack.c.bf16 %v482, %v481
          %v500 = vpack.c.bf16 %v484, %v483
          %v501 = vld [vmem:[%s1] sm:$0xf]
          %v502 = vld [vmem:[%s1 + $0x4] sm:$0xf]
          %v503 = vld [vmem:[%s1 + $0x8] sm:$0xf]
          %v504 = vld [vmem:[%s1 + $0xc] sm:$0xf]
          %v505 = vld [vmem:[%s2] sm:$0x1]
          %v507 = vlaneseq
          %v508 = vshrl.u32 %v507, 7
          %v509 = vsub.s32 0, %v508
          %v510 = vrot.slane %v505, %v509
          %v516 = vunpack.c.l.b16 %v501
          %v517 = vunpack.c.l.b16 %v502
          %v518 = vunpack.c.l.b16 %v503
          %v519 = vunpack.c.l.b16 %v504
          %v520 = vpack.c.b16 %v517, %v516
          %v521 = vpack.c.b16 %v519, %v518
          %vm524 = vcmask 261120
          %v526 = vsel %vm524, %v485, 0
          %v529 = vsel %vm524, %v486, 0
          %v532 = vsel %vm524, %v487, 0
          %v535 = vsel %vm524, %v488, 0
          %v538 = vsel %vm524, %v489, 0
          %v541 = vsel %vm524, %v490, 0
          %v544 = vsel %vm524, %v491, 0
          %v547 = vsel %vm524, %v492, 0
          %v550 = vsel %vm524, %v493, 0
          %v553 = vsel %vm524, %v494, 0
          %v556 = vsel %vm524, %v495, 0
          %v559 = vsel %vm524, %v496, 0
          %v562 = vsel %vm524, %v497, 0
          %v565 = vsel %vm524, %v498, 0
          %v568 = vsel %vm524, %v499, 0
          %v571 = vsel %vm524, %v500, 0
          %573 = vmatprep.subr.bf16.mxu0 0
          %574 = vmatpush1.bf16.msra.mxu0 0
          %575 = vmatprep.subr.bf16.mxu0 0
          %576 = vmatpush1.bf16.msra.mxu0 0
          %577 = vmatprep.subr.bf16.mxu0 0
          %578 = vmatpush1.bf16.msra.mxu0 0
          %579 = vmatprep.subr.bf16.mxu0 0
          %580 = vmatpush1.bf16.msra.mxu0 0
          %581 = vmatprep.subr.bf16.mxu0 0
          %582 = vmatpush1.bf16.msra.mxu0 0
          %583 = vmatprep.subr.bf16.mxu0 0
          %584 = vmatpush1.bf16.msra.mxu0 0
          %585 = vmatprep.subr.bf16.mxu0 0
          %586 = vmatpush1.bf16.msra.mxu0 %v521
          %587 = vmatprep.subr.bf16.mxu0 0
          %588 = vmatpush1.bf16.msra.mxu0 %v520
          %589 = vmatprep.subr.bf16.mxu0 0
          %590 = vmatpush2.bf16.msra.mxu0 0
          %591 = vmatprep.subr.bf16.mxu0 0
          %592 = vmatpush2.bf16.msra.mxu0 0
          %593 = vmatprep.subr.bf16.mxu0 0
          %594 = vmatpush2.bf16.msra.mxu0 0
          %595 = vmatprep.subr.bf16.mxu0 0
          %596 = vmatpush2.bf16.msra.mxu0 0
          %597 = vmatprep.subr.bf16.mxu0 0
          %598 = vmatpush2.bf16.msra.mxu0 0
          %599 = vmatprep.subr.bf16.mxu0 0
          %600 = vmatpush2.bf16.msra.mxu0 0
          %601 = vmatprep.subr.bf16.mxu0 0
          %602 = vmatpush2.bf16.msra.mxu0 0
          %603 = vmatprep.subr.bf16.mxu0 0
          %604 = vmatpush2.bf16.msra.mxu0 0
          %605 = vmatprep.mubr.bf16.mxu0 0
          %606 = vmatmul.mubr.bf16.gmra.mxu0 %v526
          %v607 = vpop.f32.mrf.mxu0
          %v608 = vadd.f32 %v510, %v607
          %v609 = vpop.f32.mrf.mxu0
          %v610 = vpop.f32.mrf.mxu0
          %v611 = vadd.f32 %v510, %v610
          %v612 = vpop.f32.mrf.mxu0
          %613 = vmatprep.mubr.bf16.mxu0 0
          %614 = vmatmul.mubr.bf16.gmra.mxu0 %v529
          %v615 = vpop.f32.mrf.mxu0
          %v616 = vadd.f32 %v510, %v615
          %v617 = vpop.f32.mrf.mxu0
          %v618 = vpop.f32.mrf.mxu0
          %v619 = vadd.f32 %v510, %v618
          %v620 = vpop.f32.mrf.mxu0
          %621 = vmatprep.mubr.bf16.mxu0 0
          %622 = vmatmul.mubr.bf16.gmra.mxu0 %v532
          %v623 = vpop.f32.mrf.mxu0
          %v624 = vadd.f32 %v510, %v623
          %v625 = vpop.f32.mrf.mxu0
          %v626 = vpop.f32.mrf.mxu0
          %v627 = vadd.f32 %v510, %v626
          %v628 = vpop.f32.mrf.mxu0
          %629 = vmatprep.mubr.bf16.mxu0 0
          %630 = vmatmul.mubr.bf16.gmra.mxu0 %v535
          %v631 = vpop.f32.mrf.mxu0
          %v632 = vadd.f32 %v510, %v631
          %v633 = vpop.f32.mrf.mxu0
          %v634 = vpop.f32.mrf.mxu0
          %v635 = vadd.f32 %v510, %v634
          %v636 = vpop.f32.mrf.mxu0
          %637 = vmatprep.mubr.bf16.mxu0 0
          %638 = vmatmul.mubr.bf16.gmra.mxu0 %v538
          %v639 = vpop.f32.mrf.mxu0
          %v640 = vadd.f32 %v510, %v639
          %v641 = vpop.f32.mrf.mxu0
          %v642 = vpop.f32.mrf.mxu0
          %v643 = vadd.f32 %v510, %v642
          %v644 = vpop.f32.mrf.mxu0
          %645 = vmatprep.mubr.bf16.mxu0 0
          %646 = vmatmul.mubr.bf16.gmra.mxu0 %v541
          %v647 = vpop.f32.mrf.mxu0
          %v648 = vadd.f32 %v510, %v647
          %v649 = vpop.f32.mrf.mxu0
          %v650 = vpop.f32.mrf.mxu0
          %v651 = vadd.f32 %v510, %v650
          %v652 = vpop.f32.mrf.mxu0
          %653 = vmatprep.mubr.bf16.mxu0 0
          %654 = vmatmul.mubr.bf16.gmra.mxu0 %v544
          %v655 = vpop.f32.mrf.mxu0
          %v656 = vadd.f32 %v510, %v655
          %v657 = vpop.f32.mrf.mxu0
          %v658 = vpop.f32.mrf.mxu0
          %v659 = vadd.f32 %v510, %v658
          %v660 = vpop.f32.mrf.mxu0
          %661 = vmatprep.mubr.bf16.mxu0 0
          %662 = vmatmul.mubr.bf16.gmra.mxu0 %v547
          %v663 = vpop.f32.mrf.mxu0
          %v664 = vadd.f32 %v510, %v663
          %v665 = vpop.f32.mrf.mxu0
          %v666 = vpop.f32.mrf.mxu0
          %v667 = vadd.f32 %v510, %v666
          %v668 = vpop.f32.mrf.mxu0
          %669 = vmatprep.mubr.bf16.mxu0 0
          %670 = vmatmul.mubr.bf16.gmra.mxu0 %v550
          %v671 = vpop.f32.mrf.mxu0
          %v672 = vadd.f32 %v510, %v671
          %v673 = vpop.f32.mrf.mxu0
          %v674 = vpop.f32.mrf.mxu0
          %v675 = vadd.f32 %v510, %v674
          %v676 = vpop.f32.mrf.mxu0
          %677 = vmatprep.mubr.bf16.mxu0 0
          %678 = vmatmul.mubr.bf16.gmra.mxu0 %v553
          %v679 = vpop.f32.mrf.mxu0
          %v680 = vadd.f32 %v510, %v679
          %v681 = vpop.f32.mrf.mxu0
          %v682 = vpop.f32.mrf.mxu0
          %v683 = vadd.f32 %v510, %v682
          %v684 = vpop.f32.mrf.mxu0
          %685 = vmatprep.mubr.bf16.mxu0 0
          %686 = vmatmul.mubr.bf16.gmra.mxu0 %v556
          %v687 = vpop.f32.mrf.mxu0
          %v688 = vadd.f32 %v510, %v687
          %v689 = vpop.f32.mrf.mxu0
          %v690 = vpop.f32.mrf.mxu0
          %v691 = vadd.f32 %v510, %v690
          %v692 = vpop.f32.mrf.mxu0
          %693 = vmatprep.mubr.bf16.mxu0 0
          %694 = vmatmul.mubr.bf16.gmra.mxu0 %v559
          %v695 = vpop.f32.mrf.mxu0
          %v696 = vadd.f32 %v510, %v695
          %v697 = vpop.f32.mrf.mxu0
          %v698 = vpop.f32.mrf.mxu0
          %v699 = vadd.f32 %v510, %v698
          %v700 = vpop.f32.mrf.mxu0
          %701 = vmatprep.mubr.bf16.mxu0 0
          %702 = vmatmul.mubr.bf16.gmra.mxu0 %v562
          %v703 = vpop.f32.mrf.mxu0
          %v704 = vadd.f32 %v510, %v703
          %v705 = vpop.f32.mrf.mxu0
          %v706 = vpop.f32.mrf.mxu0
          %v707 = vadd.f32 %v510, %v706
          %v708 = vpop.f32.mrf.mxu0
          %709 = vmatprep.mubr.bf16.mxu0 0
          %710 = vmatmul.mubr.bf16.gmra.mxu0 %v565
          %v711 = vpop.f32.mrf.mxu0
          %v712 = vadd.f32 %v510, %v711
          %v713 = vpop.f32.mrf.mxu0
          %v714 = vpop.f32.mrf.mxu0
          %v715 = vadd.f32 %v510, %v714
          %v716 = vpop.f32.mrf.mxu0
          %717 = vmatprep.mubr.bf16.mxu0 0
          %718 = vmatmul.mubr.bf16.gmra.mxu0 %v568
          %v719 = vpop.f32.mrf.mxu0
          %v720 = vadd.f32 %v510, %v719
          %v721 = vpop.f32.mrf.mxu0
          %v722 = vpop.f32.mrf.mxu0
          %v723 = vadd.f32 %v510, %v722
          %v724 = vpop.f32.mrf.mxu0
          %725 = vmatprep.mubr.bf16.mxu0 0
          %726 = vmatmul.mubr.bf16.gmra.mxu0 %v571
          %v727 = vpop.f32.mrf.mxu0
          %v728 = vadd.f32 %v510, %v727
          %v729 = vpop.f32.mrf.mxu0
          %v730 = vpop.f32.mrf.mxu0
          %v731 = vadd.f32 %v510, %v730
          %v732 = vpop.f32.mrf.mxu0
          %733 = vdwg.mxu0
          %v734 = vmax.f32 %v608, 0.0
          %v735 = vmax.f32 %v611, 0.0
          %v736 = vmax.f32 %v616, 0.0
          %v737 = vmax.f32 %v619, 0.0
          %v738 = vmax.f32 %v624, 0.0
          %v739 = vmax.f32 %v627, 0.0
          %v740 = vmax.f32 %v632, 0.0
          %v741 = vmax.f32 %v635, 0.0
          %v742 = vmax.f32 %v640, 0.0
          %v743 = vmax.f32 %v643, 0.0
          %v744 = vmax.f32 %v648, 0.0
          %v745 = vmax.f32 %v651, 0.0
          %v746 = vmax.f32 %v656, 0.0
          %v747 = vmax.f32 %v659, 0.0
          %v748 = vmax.f32 %v664, 0.0
          %v749 = vmax.f32 %v667, 0.0
          %v750 = vmax.f32 %v672, 0.0
          %v751 = vmax.f32 %v675, 0.0
          %v752 = vmax.f32 %v680, 0.0
          %v753 = vmax.f32 %v683, 0.0
          %v754 = vmax.f32 %v688, 0.0
          %v755 = vmax.f32 %v691, 0.0
          %v756 = vmax.f32 %v696, 0.0
          %v757 = vmax.f32 %v699, 0.0
          %v758 = vmax.f32 %v704, 0.0
          %v759 = vmax.f32 %v707, 0.0
          %v760 = vmax.f32 %v712, 0.0
          %v761 = vmax.f32 %v715, 0.0
          %v762 = vmax.f32 %v720, 0.0
          %v763 = vmax.f32 %v723, 0.0
          %v764 = vmax.f32 %v728, 0.0
          %v765 = vmax.f32 %v731, 0.0
          %v766 = vsel %vm411, 1, 0
          %v767 = vsel %vm412, 1, 0
          %v768 = vsel %vm413, 1, 0
          %v769 = vsel %vm414, 1, 0
          %v770 = vsel %vm415, 1, 0
          %v771 = vsel %vm416, 1, 0
          %v772 = vsel %vm417, 1, 0
          %v773 = vsel %vm418, 1, 0
          %v774 = vsel %vm419, 1, 0
          %v775 = vsel %vm420, 1, 0
          %v776 = vsel %vm421, 1, 0
          %v777 = vsel %vm422, 1, 0
          %v778 = vsel %vm423, 1, 0
          %v779 = vsel %vm424, 1, 0
          %v780 = vsel %vm425, 1, 0
          %v781 = vsel %vm426, 1, 0
          %v782 = vsel %vm427, 1, 0
          %v783 = vsel %vm428, 1, 0
          %v784 = vsel %vm429, 1, 0
          %v785 = vsel %vm430, 1, 0
          %v786 = vsel %vm431, 1, 0
          %v787 = vsel %vm432, 1, 0
          %v788 = vsel %vm433, 1, 0
          %v789 = vsel %vm434, 1, 0
          %v790 = vsel %vm435, 1, 0
          %v791 = vsel %vm436, 1, 0
          %v792 = vsel %vm437, 1, 0
          %v793 = vsel %vm438, 1, 0
          %v794 = vsel %vm439, 1, 0
          %v795 = vsel %vm440, 1, 0
          %v796 = vsel %vm441, 1, 0
          %v797 = vsel %vm442, 1, 0
          %vm798 = vcmp.eq.s32.totalorder %v766, 1
          %vm799 = vcmp.eq.s32.totalorder %v767, 1
          %vm800 = vcmp.eq.s32.totalorder %v768, 1
          %vm801 = vcmp.eq.s32.totalorder %v769, 1
          %vm802 = vcmp.eq.s32.totalorder %v770, 1
          %vm803 = vcmp.eq.s32.totalorder %v771, 1
          %vm804 = vcmp.eq.s32.totalorder %v772, 1
          %vm805 = vcmp.eq.s32.totalorder %v773, 1
          %vm806 = vcmp.eq.s32.totalorder %v774, 1
          %vm807 = vcmp.eq.s32.totalorder %v775, 1
          %vm808 = vcmp.eq.s32.totalorder %v776, 1
          %vm809 = vcmp.eq.s32.totalorder %v777, 1
          %vm810 = vcmp.eq.s32.totalorder %v778, 1
          %vm811 = vcmp.eq.s32.totalorder %v779, 1
          %vm812 = vcmp.eq.s32.totalorder %v780, 1
          %vm813 = vcmp.eq.s32.totalorder %v781, 1
          %vm814 = vcmp.eq.s32.totalorder %v782, 1
          %vm815 = vcmp.eq.s32.totalorder %v783, 1
          %vm816 = vcmp.eq.s32.totalorder %v784, 1
          %vm817 = vcmp.eq.s32.totalorder %v785, 1
          %vm818 = vcmp.eq.s32.totalorder %v786, 1
          %vm819 = vcmp.eq.s32.totalorder %v787, 1
          %vm820 = vcmp.eq.s32.totalorder %v788, 1
          %vm821 = vcmp.eq.s32.totalorder %v789, 1
          %vm822 = vcmp.eq.s32.totalorder %v790, 1
          %vm823 = vcmp.eq.s32.totalorder %v791, 1
          %vm824 = vcmp.eq.s32.totalorder %v792, 1
          %vm825 = vcmp.eq.s32.totalorder %v793, 1
          %vm826 = vcmp.eq.s32.totalorder %v794, 1
          %vm827 = vcmp.eq.s32.totalorder %v795, 1
          %vm828 = vcmp.eq.s32.totalorder %v796, 1
          %vm829 = vcmp.eq.s32.totalorder %v797, 1
          %v830 = vsel %vm798, %v734, 0.0
          %v831 = vsel %vm799, %v735, 0.0
          %v832 = vsel %vm800, %v736, 0.0
          %v833 = vsel %vm801, %v737, 0.0
          %v834 = vsel %vm802, %v738, 0.0
          %v835 = vsel %vm803, %v739, 0.0
          %v836 = vsel %vm804, %v740, 0.0
          %v837 = vsel %vm805, %v741, 0.0
          %v838 = vsel %vm806, %v742, 0.0
          %v839 = vsel %vm807, %v743, 0.0
          %v840 = vsel %vm808, %v744, 0.0
          %v841 = vsel %vm809, %v745, 0.0
          %v842 = vsel %vm810, %v746, 0.0
          %v843 = vsel %vm811, %v747, 0.0
          %v844 = vsel %vm812, %v748, 0.0
          %v845 = vsel %vm813, %v749, 0.0
          %v846 = vsel %vm814, %v750, 0.0
          %v847 = vsel %vm815, %v751, 0.0
          %v848 = vsel %vm816, %v752, 0.0
          %v849 = vsel %vm817, %v753, 0.0
          %v850 = vsel %vm818, %v754, 0.0
          %v851 = vsel %vm819, %v755, 0.0
          %v852 = vsel %vm820, %v756, 0.0
          %v853 = vsel %vm821, %v757, 0.0
          %v854 = vsel %vm822, %v758, 0.0
          %v855 = vsel %vm823, %v759, 0.0
          %v856 = vsel %vm824, %v760, 0.0
          %v857 = vsel %vm825, %v761, 0.0
          %v858 = vsel %vm826, %v762, 0.0
          %v859 = vsel %vm827, %v763, 0.0
          %v860 = vsel %vm828, %v764, 0.0
          %v861 = vsel %vm829, %v765, 0.0
          %s862 = scalar_lea.vmem [#allocation4], %s344
          %vm863 = vcmask 523264
          %864 = vst.msk [vmem:[%s862] sm:$0xff] %vm863, %v830
          %865 = vst.msk [vmem:[%s862 + $0x8] sm:$0xff] %vm863, %v831
          %866 = vst.msk [vmem:[%s862 + $0x10] sm:$0xff] %vm863, %v832
          %867 = vst.msk [vmem:[%s862 + $0x18] sm:$0xff] %vm863, %v833
          %868 = vst.msk [vmem:[%s862 + $0x20] sm:$0xff] %vm863, %v834
          %869 = vst.msk [vmem:[%s862 + $0x28] sm:$0xff] %vm863, %v835
          %870 = vst.msk [vmem:[%s862 + $0x30] sm:$0xff] %vm863, %v836
          %871 = vst.msk [vmem:[%s862 + $0x38] sm:$0xff] %vm863, %v837
          %872 = vst.msk [vmem:[%s862 + $0x40] sm:$0xff] %vm863, %v838
          %873 = vst.msk [vmem:[%s862 + $0x48] sm:$0xff] %vm863, %v839
          %874 = vst.msk [vmem:[%s862 + $0x50] sm:$0xff] %vm863, %v840
          %875 = vst.msk [vmem:[%s862 + $0x58] sm:$0xff] %vm863, %v841
          %876 = vst.msk [vmem:[%s862 + $0x60] sm:$0xff] %vm863, %v842
          %877 = vst.msk [vmem:[%s862 + $0x68] sm:$0xff] %vm863, %v843
          %878 = vst.msk [vmem:[%s862 + $0x70] sm:$0xff] %vm863, %v844
          %879 = vst.msk [vmem:[%s862 + $0x78] sm:$0xff] %vm863, %v845
          %880 = vst.msk [vmem:[%s862 + $0x80] sm:$0xff] %vm863, %v846
          %881 = vst.msk [vmem:[%s862 + $0x88] sm:$0xff] %vm863, %v847
          %882 = vst.msk [vmem:[%s862 + $0x90] sm:$0xff] %vm863, %v848
          %883 = vst.msk [vmem:[%s862 + $0x98] sm:$0xff] %vm863, %v849
          %884 = vst.msk [vmem:[%s862 + $0xa0] sm:$0xff] %vm863, %v850
          %885 = vst.msk [vmem:[%s862 + $0xa8] sm:$0xff] %vm863, %v851
          %886 = vst.msk [vmem:[%s862 + $0xb0] sm:$0xff] %vm863, %v852
          %887 = vst.msk [vmem:[%s862 + $0xb8] sm:$0xff] %vm863, %v853
          %888 = vst.msk [vmem:[%s862 + $0xc0] sm:$0xff] %vm863, %v854
          %889 = vst.msk [vmem:[%s862 + $0xc8] sm:$0xff] %vm863, %v855
          %890 = vst.msk [vmem:[%s862 + $0xd0] sm:$0xff] %vm863, %v856
          %891 = vst.msk [vmem:[%s862 + $0xd8] sm:$0xff] %vm863, %v857
          %892 = vst.msk [vmem:[%s862 + $0xe0] sm:$0xff] %vm863, %v858
          %893 = vst.msk [vmem:[%s862 + $0xe8] sm:$0xff] %vm863, %v859
          %894 = vst.msk [vmem:[%s862 + $0xf0] sm:$0xff] %vm863, %v860
          %895 = vst.msk [vmem:[%s862 + $0xf8] sm:$0xff] %vm863, %v861
          %v896 = vld [vmem:[#allocation2] sm:$0x1]
          %v897 = vsel %vm863, %v830, 0.0
          %v898 = vsel %vm863, %v831, 0.0
          %v899 = vadd.f32 %v897, %v898
          %v900 = vsel %vm863, %v832, 0.0
          %v901 = vadd.f32 %v899, %v900
          %v902 = vsel %vm863, %v833, 0.0
          %v903 = vadd.f32 %v901, %v902
          %v904 = vsel %vm863, %v834, 0.0
          %v905 = vadd.f32 %v903, %v904
          %v906 = vsel %vm863, %v835, 0.0
          %v907 = vadd.f32 %v905, %v906
          %v908 = vsel %vm863, %v836, 0.0
          %v909 = vadd.f32 %v907, %v908
          %v910 = vsel %vm863, %v837, 0.0
          %v911 = vadd.f32 %v909, %v910
          %v912 = vsel %vm863, %v838, 0.0
          %v913 = vadd.f32 %v911, %v912
          %v914 = vsel %vm863, %v839, 0.0
          %v915 = vadd.f32 %v913, %v914
          %v916 = vsel %vm863, %v840, 0.0
          %v917 = vadd.f32 %v915, %v916
          %v918 = vsel %vm863, %v841, 0.0
          %v919 = vadd.f32 %v917, %v918
          %v920 = vsel %vm863, %v842, 0.0
          %v921 = vadd.f32 %v919, %v920
          %v922 = vsel %vm863, %v843, 0.0
          %v923 = vadd.f32 %v921, %v922
          %v924 = vsel %vm863, %v844, 0.0
          %v925 = vadd.f32 %v923, %v924
          %v926 = vsel %vm863, %v845, 0.0
          %v927 = vadd.f32 %v925, %v926
          %v928 = vsel %vm863, %v846, 0.0
          %v929 = vadd.f32 %v927, %v928
          %v930 = vsel %vm863, %v847, 0.0
          %v931 = vadd.f32 %v929, %v930
          %v932 = vsel %vm863, %v848, 0.0
          %v933 = vadd.f32 %v931, %v932
          %v934 = vsel %vm863, %v849, 0.0
          %v935 = vadd.f32 %v933, %v934
          %v936 = vsel %vm863, %v850, 0.0
          %v937 = vadd.f32 %v935, %v936
          %v938 = vsel %vm863, %v851, 0.0
          %v939 = vadd.f32 %v937, %v938
          %v940 = vsel %vm863, %v852, 0.0
          %v941 = vadd.f32 %v939, %v940
          %v942 = vsel %vm863, %v853, 0.0
          %v943 = vadd.f32 %v941, %v942
          %v944 = vsel %vm863, %v854, 0.0
          %v945 = vadd.f32 %v943, %v944
          %v946 = vsel %vm863, %v855, 0.0
          %v947 = vadd.f32 %v945, %v946
          %v948 = vsel %vm863, %v856, 0.0
          %v949 = vadd.f32 %v947, %v948
          %v950 = vsel %vm863, %v857, 0.0
          %v951 = vadd.f32 %v949, %v950
          %v952 = vsel %vm863, %v858, 0.0
          %v953 = vadd.f32 %v951, %v952
          %v954 = vsel %vm863, %v859, 0.0
          %v955 = vadd.f32 %v953, %v954
          %v956 = vsel %vm863, %v860, 0.0
          %v957 = vadd.f32 %v955, %v956
          %v958 = vsel %vm863, %v861, 0.0
          %v959 = vadd.f32 %v957, %v958
          %v960 = vrot.slane %v959, 4
          %v961 = vadd.f32 %v959, %v960
          %v962 = vrot.slane %v961, 2
          %v963 = vadd.f32 %v961, %v962
          %v964 = vrot.slane %v963, 1
          %v965 = vadd.f32 %v963, %v964
          %v966 = vadd.f32 %v896, %v965
          %vm967 = vcmask 516096
          %968 = vst.msk [vmem:[#allocation2] sm:$0x1] %vm967, %v966
        $region52: #{tpu_custom_call.1} parent=47 // pred_fallthru
          _
        %p969 = scmp.eq.s32.totalorder %s26, 1
        // Predicated region
        $region57: #{tpu_custom_call.1} parent=47 // pred_check
          %p970 = pneg %p969
        $region58: #{tpu_custom_call.1} parent=47 // pred_check_branch
          %972 = sbr.rel (%p970) target = $region60
        $region59: #{tpu_custom_call.1} parent=47 // pred_region
          %p973 = scmp.eq.s32.totalorder %s27, 0
          // Predicated region
          $region61: #{tpu_custom_call.1} parent=59 // pred_check
            %p974 = pneg %p973
          $region62: #{tpu_custom_call.1} parent=59 // pred_check_branch
            %976 = sbr.rel (%p974) target = $region64
          $region63: #{tpu_custom_call.1} parent=59 // pred_region
            %vm977 = vcmask 516096
            %978 = vst.msk [vmem:[#allocation3] sm:$0x1] %vm977, 0.0
          $region64: #{tpu_custom_call.1} parent=59 // pred_fallthru
            _
          %s979 = scalar_lea.vmem [#allocation4], %s344
          %v980 = vld [vmem:[%s979] sm:$0xff]
          %v981 = vld [vmem:[%s979 + $0x8] sm:$0xff]
          %v982 = vld [vmem:[%s979 + $0x10] sm:$0xff]
          %v983 = vld [vmem:[%s979 + $0x18] sm:$0xff]
          %v984 = vld [vmem:[%s979 + $0x20] sm:$0xff]
          %v985 = vld [vmem:[%s979 + $0x28] sm:$0xff]
          %v986 = vld [vmem:[%s979 + $0x30] sm:$0xff]
          %v987 = vld [vmem:[%s979 + $0x38] sm:$0xff]
          %v988 = vld [vmem:[%s979 + $0x40] sm:$0xff]
          %v989 = vld [vmem:[%s979 + $0x48] sm:$0xff]
          %v990 = vld [vmem:[%s979 + $0x50] sm:$0xff]
          %v991 = vld [vmem:[%s979 + $0x58] sm:$0xff]
          %v992 = vld [vmem:[%s979 + $0x60] sm:$0xff]
          %v993 = vld [vmem:[%s979 + $0x68] sm:$0xff]
          %v994 = vld [vmem:[%s979 + $0x70] sm:$0xff]
          %v995 = vld [vmem:[%s979 + $0x78] sm:$0xff]
          %v996 = vld [vmem:[%s979 + $0x80] sm:$0xff]
          %v997 = vld [vmem:[%s979 + $0x88] sm:$0xff]
          %v998 = vld [vmem:[%s979 + $0x90] sm:$0xff]
          %v999 = vld [vmem:[%s979 + $0x98] sm:$0xff]
          %v1000 = vld [vmem:[%s979 + $0xa0] sm:$0xff]
          %v1001 = vld [vmem:[%s979 + $0xa8] sm:$0xff]
          %v1002 = vld [vmem:[%s979 + $0xb0] sm:$0xff]
          %v1003 = vld [vmem:[%s979 + $0xb8] sm:$0xff]
          %v1004 = vld [vmem:[%s979 + $0xc0] sm:$0xff]
          %v1005 = vld [vmem:[%s979 + $0xc8] sm:$0xff]
          %v1006 = vld [vmem:[%s979 + $0xd0] sm:$0xff]
          %v1007 = vld [vmem:[%s979 + $0xd8] sm:$0xff]
          %v1008 = vld [vmem:[%s979 + $0xe0] sm:$0xff]
          %v1009 = vld [vmem:[%s979 + $0xe8] sm:$0xff]
          %v1010 = vld [vmem:[%s979 + $0xf0] sm:$0xff]
          %v1011 = vld [vmem:[%s979 + $0xf8] sm:$0xff]
          %v1012 = vld [vmem:[#allocation2] sm:$0x1]
          %v1013 = vmul.f32 %v1012, 0.005
          %v1015 = vlaneseq
          %v1016 = vshrl.u32 %v1015, 7
          %v1017 = vsub.s32 0, %v1016
          %v1018 = vrot.slane %v1013, %v1017
          %v1020 = vsub.f32 %v980, %v1018
          %v1021 = vsub.f32 %v981, %v1018
          %v1022 = vsub.f32 %v982, %v1018
          %v1023 = vsub.f32 %v983, %v1018
          %v1024 = vsub.f32 %v984, %v1018
          %v1025 = vsub.f32 %v985, %v1018
          %v1026 = vsub.f32 %v986, %v1018
          %v1027 = vsub.f32 %v987, %v1018
          %v1028 = vsub.f32 %v988, %v1018
          %v1029 = vsub.f32 %v989, %v1018
          %v1030 = vsub.f32 %v990, %v1018
          %v1031 = vsub.f32 %v991, %v1018
          %v1032 = vsub.f32 %v992, %v1018
          %v1033 = vsub.f32 %v993, %v1018
          %v1034 = vsub.f32 %v994, %v1018
          %v1035 = vsub.f32 %v995, %v1018
          %v1036 = vsub.f32 %v996, %v1018
          %v1037 = vsub.f32 %v997, %v1018
          %v1038 = vsub.f32 %v998, %v1018
          %v1039 = vsub.f32 %v999, %v1018
          %v1040 = vsub.f32 %v1000, %v1018
          %v1041 = vsub.f32 %v1001, %v1018
          %v1042 = vsub.f32 %v1002, %v1018
          %v1043 = vsub.f32 %v1003, %v1018
          %v1044 = vsub.f32 %v1004, %v1018
          %v1045 = vsub.f32 %v1005, %v1018
          %v1046 = vsub.f32 %v1006, %v1018
          %v1047 = vsub.f32 %v1007, %v1018
          %v1048 = vsub.f32 %v1008, %v1018
          %v1049 = vsub.f32 %v1009, %v1018
          %v1050 = vsub.f32 %v1010, %v1018
          %v1051 = vsub.f32 %v1011, %v1018
          %v1052 = vsel %vm411, 1, 0
          %v1053 = vsel %vm412, 1, 0
          %v1054 = vsel %vm413, 1, 0
          %v1055 = vsel %vm414, 1, 0
          %v1056 = vsel %vm415, 1, 0
          %v1057 = vsel %vm416, 1, 0
          %v1058 = vsel %vm417, 1, 0
          %v1059 = vsel %vm418, 1, 0
          %v1060 = vsel %vm419, 1, 0
          %v1061 = vsel %vm420, 1, 0
          %v1062 = vsel %vm421, 1, 0
          %v1063 = vsel %vm422, 1, 0
          %v1064 = vsel %vm423, 1, 0
          %v1065 = vsel %vm424, 1, 0
          %v1066 = vsel %vm425, 1, 0
          %v1067 = vsel %vm426, 1, 0
          %v1068 = vsel %vm427, 1, 0
          %v1069 = vsel %vm428, 1, 0
          %v1070 = vsel %vm429, 1, 0
          %v1071 = vsel %vm430, 1, 0
          %v1072 = vsel %vm431, 1, 0
          %v1073 = vsel %vm432, 1, 0
          %v1074 = vsel %vm433, 1, 0
          %v1075 = vsel %vm434, 1, 0
          %v1076 = vsel %vm435, 1, 0
          %v1077 = vsel %vm436, 1, 0
          %v1078 = vsel %vm437, 1, 0
          %v1079 = vsel %vm438, 1, 0
          %v1080 = vsel %vm439, 1, 0
          %v1081 = vsel %vm440, 1, 0
          %v1082 = vsel %vm441, 1, 0
          %v1083 = vsel %vm442, 1, 0
          %vm1084 = vcmp.eq.s32.totalorder %v1052, 1
          %vm1085 = vcmp.eq.s32.totalorder %v1053, 1
          %vm1086 = vcmp.eq.s32.totalorder %v1054, 1
          %vm1087 = vcmp.eq.s32.totalorder %v1055, 1
          %vm1088 = vcmp.eq.s32.totalorder %v1056, 1
          %vm1089 = vcmp.eq.s32.totalorder %v1057, 1
          %vm1090 = vcmp.eq.s32.totalorder %v1058, 1
          %vm1091 = vcmp.eq.s32.totalorder %v1059, 1
          %vm1092 = vcmp.eq.s32.totalorder %v1060, 1
          %vm1093 = vcmp.eq.s32.totalorder %v1061, 1
          %vm1094 = vcmp.eq.s32.totalorder %v1062, 1
          %vm1095 = vcmp.eq.s32.totalorder %v1063, 1
          %vm1096 = vcmp.eq.s32.totalorder %v1064, 1
          %vm1097 = vcmp.eq.s32.totalorder %v1065, 1
          %vm1098 = vcmp.eq.s32.totalorder %v1066, 1
          %vm1099 = vcmp.eq.s32.totalorder %v1067, 1
          %vm1100 = vcmp.eq.s32.totalorder %v1068, 1
          %vm1101 = vcmp.eq.s32.totalorder %v1069, 1
          %vm1102 = vcmp.eq.s32.totalorder %v1070, 1
          %vm1103 = vcmp.eq.s32.totalorder %v1071, 1
          %vm1104 = vcmp.eq.s32.totalorder %v1072, 1
          %vm1105 = vcmp.eq.s32.totalorder %v1073, 1
          %vm1106 = vcmp.eq.s32.totalorder %v1074, 1
          %vm1107 = vcmp.eq.s32.totalorder %v1075, 1
          %vm1108 = vcmp.eq.s32.totalorder %v1076, 1
          %vm1109 = vcmp.eq.s32.totalorder %v1077, 1
          %vm1110 = vcmp.eq.s32.totalorder %v1078, 1
          %vm1111 = vcmp.eq.s32.totalorder %v1079, 1
          %vm1112 = vcmp.eq.s32.totalorder %v1080, 1
          %vm1113 = vcmp.eq.s32.totalorder %v1081, 1
          %vm1114 = vcmp.eq.s32.totalorder %v1082, 1
          %vm1115 = vcmp.eq.s32.totalorder %v1083, 1
          %v1116 = vsel %vm1084, %v1020, 0.0
          %v1117 = vsel %vm1085, %v1021, 0.0
          %v1118 = vsel %vm1086, %v1022, 0.0
          %v1119 = vsel %vm1087, %v1023, 0.0
          %v1120 = vsel %vm1088, %v1024, 0.0
          %v1121 = vsel %vm1089, %v1025, 0.0
          %v1122 = vsel %vm1090, %v1026, 0.0
          %v1123 = vsel %vm1091, %v1027, 0.0
          %v1124 = vsel %vm1092, %v1028, 0.0
          %v1125 = vsel %vm1093, %v1029, 0.0
          %v1126 = vsel %vm1094, %v1030, 0.0
          %v1127 = vsel %vm1095, %v1031, 0.0
          %v1128 = vsel %vm1096, %v1032, 0.0
          %v1129 = vsel %vm1097, %v1033, 0.0
          %v1130 = vsel %vm1098, %v1034, 0.0
          %v1131 = vsel %vm1099, %v1035, 0.0
          %v1132 = vsel %vm1100, %v1036, 0.0
          %v1133 = vsel %vm1101, %v1037, 0.0
          %v1134 = vsel %vm1102, %v1038, 0.0
          %v1135 = vsel %vm1103, %v1039, 0.0
          %v1136 = vsel %vm1104, %v1040, 0.0
          %v1137 = vsel %vm1105, %v1041, 0.0
          %v1138 = vsel %vm1106, %v1042, 0.0
          %v1139 = vsel %vm1107, %v1043, 0.0
          %v1140 = vsel %vm1108, %v1044, 0.0
          %v1141 = vsel %vm1109, %v1045, 0.0
          %v1142 = vsel %vm1110, %v1046, 0.0
          %v1143 = vsel %vm1111, %v1047, 0.0
          %v1144 = vsel %vm1112, %v1048, 0.0
          %v1145 = vsel %vm1113, %v1049, 0.0
          %v1146 = vsel %vm1114, %v1050, 0.0
          %v1147 = vsel %vm1115, %v1051, 0.0
          %v1148 = vld [vmem:[#allocation3] sm:$0x1]
          %v1149 = vmul.f32 %v1116, %v1116
          %v1150 = vmul.f32 %v1117, %v1117
          %v1151 = vmul.f32 %v1118, %v1118
          %v1152 = vmul.f32 %v1119, %v1119
          %v1153 = vmul.f32 %v1120, %v1120
          %v1154 = vmul.f32 %v1121, %v1121
          %v1155 = vmul.f32 %v1122, %v1122
          %v1156 = vmul.f32 %v1123, %v1123
          %v1157 = vmul.f32 %v1124, %v1124
          %v1158 = vmul.f32 %v1125, %v1125
          %v1159 = vmul.f32 %v1126, %v1126
          %v1160 = vmul.f32 %v1127, %v1127
          %v1161 = vmul.f32 %v1128, %v1128
          %v1162 = vmul.f32 %v1129, %v1129
          %v1163 = vmul.f32 %v1130, %v1130
          %v1164 = vmul.f32 %v1131, %v1131
          %v1165 = vmul.f32 %v1132, %v1132
          %v1166 = vmul.f32 %v1133, %v1133
          %v1167 = vmul.f32 %v1134, %v1134
          %v1168 = vmul.f32 %v1135, %v1135
          %v1169 = vmul.f32 %v1136, %v1136
          %v1170 = vmul.f32 %v1137, %v1137
          %v1171 = vmul.f32 %v1138, %v1138
          %v1172 = vmul.f32 %v1139, %v1139
          %v1173 = vmul.f32 %v1140, %v1140
          %v1174 = vmul.f32 %v1141, %v1141
          %v1175 = vmul.f32 %v1142, %v1142
          %v1176 = vmul.f32 %v1143, %v1143
          %v1177 = vmul.f32 %v1144, %v1144
          %v1178 = vmul.f32 %v1145, %v1145
          %v1179 = vmul.f32 %v1146, %v1146
          %v1180 = vmul.f32 %v1147, %v1147
          %vm1181 = vcmask 523264
          %v1182 = vsel %vm1181, %v1149, 0.0
          %v1183 = vsel %vm1181, %v1150, 0.0
          %v1184 = vadd.f32 %v1182, %v1183
          %v1185 = vsel %vm1181, %v1151, 0.0
          %v1186 = vadd.f32 %v1184, %v1185
          %v1187 = vsel %vm1181, %v1152, 0.0
          %v1188 = vadd.f32 %v1186, %v1187
          %v1189 = vsel %vm1181, %v1153, 0.0
          %v1190 = vadd.f32 %v1188, %v1189
          %v1191 = vsel %vm1181, %v1154, 0.0
          %v1192 = vadd.f32 %v1190, %v1191
          %v1193 = vsel %vm1181, %v1155, 0.0
          %v1194 = vadd.f32 %v1192, %v1193
          %v1195 = vsel %vm1181, %v1156, 0.0
          %v1196 = vadd.f32 %v1194, %v1195
          %v1197 = vsel %vm1181, %v1157, 0.0
          %v1198 = vadd.f32 %v1196, %v1197
          %v1199 = vsel %vm1181, %v1158, 0.0
          %v1200 = vadd.f32 %v1198, %v1199
          %v1201 = vsel %vm1181, %v1159, 0.0
          %v1202 = vadd.f32 %v1200, %v1201
          %v1203 = vsel %vm1181, %v1160, 0.0
          %v1204 = vadd.f32 %v1202, %v1203
          %v1205 = vsel %vm1181, %v1161, 0.0
          %v1206 = vadd.f32 %v1204, %v1205
          %v1207 = vsel %vm1181, %v1162, 0.0
          %v1208 = vadd.f32 %v1206, %v1207
          %v1209 = vsel %vm1181, %v1163, 0.0
          %v1210 = vadd.f32 %v1208, %v1209
          %v1211 = vsel %vm1181, %v1164, 0.0
          %v1212 = vadd.f32 %v1210, %v1211
          %v1213 = vsel %vm1181, %v1165, 0.0
          %v1214 = vadd.f32 %v1212, %v1213
          %v1215 = vsel %vm1181, %v1166, 0.0
          %v1216 = vadd.f32 %v1214, %v1215
          %v1217 = vsel %vm1181, %v1167, 0.0
          %v1218 = vadd.f32 %v1216, %v1217
          %v1219 = vsel %vm1181, %v1168, 0.0
          %v1220 = vadd.f32 %v1218, %v1219
          %v1221 = vsel %vm1181, %v1169, 0.0
          %v1222 = vadd.f32 %v1220, %v1221
          %v1223 = vsel %vm1181, %v1170, 0.0
          %v1224 = vadd.f32 %v1222, %v1223
          %v1225 = vsel %vm1181, %v1171, 0.0
          %v1226 = vadd.f32 %v1224, %v1225
          %v1227 = vsel %vm1181, %v1172, 0.0
          %v1228 = vadd.f32 %v1226, %v1227
          %v1229 = vsel %vm1181, %v1173, 0.0
          %v1230 = vadd.f32 %v1228, %v1229
          %v1231 = vsel %vm1181, %v1174, 0.0
          %v1232 = vadd.f32 %v1230, %v1231
          %v1233 = vsel %vm1181, %v1175, 0.0
          %v1234 = vadd.f32 %v1232, %v1233
          %v1235 = vsel %vm1181, %v1176, 0.0
          %v1236 = vadd.f32 %v1234, %v1235
          %v1237 = vsel %vm1181, %v1177, 0.0
          %v1238 = vadd.f32 %v1236, %v1237
          %v1239 = vsel %vm1181, %v1178, 0.0
          %v1240 = vadd.f32 %v1238, %v1239
          %v1241 = vsel %vm1181, %v1179, 0.0
          %v1242 = vadd.f32 %v1240, %v1241
          %v1243 = vsel %vm1181, %v1180, 0.0
          %v1244 = vadd.f32 %v1242, %v1243
          %v1245 = vrot.slane %v1244, 4
          %v1246 = vadd.f32 %v1244, %v1245
          %v1247 = vrot.slane %v1246, 2
          %v1248 = vadd.f32 %v1246, %v1247
          %v1249 = vrot.slane %v1248, 1
          %v1250 = vadd.f32 %v1248, %v1249
          %v1251 = vadd.f32 %v1148, %v1250
          %vm1252 = vcmask 516096
          %1253 = vst.msk [vmem:[#allocation3] sm:$0x1] %vm1252, %v1251
        $region60: #{tpu_custom_call.1} parent=47 // pred_fallthru
          _
        %p1254 = scmp.eq.s32.totalorder %s26, 2
        // Predicated region
        $region65: #{tpu_custom_call.1} parent=47 // pred_check
          %p1255 = pneg %p1254
        $region66: #{tpu_custom_call.1} parent=47 // pred_check_branch
          %1257 = sbr.rel (%p1255) target = $region68
        $region67: #{tpu_custom_call.1} parent=47 // pred_region
          %s1258 = scalar_lea.vmem [#allocation4], %s344
          %v1259 = vld [vmem:[%s1258] sm:$0xff]
          %v1260 = vld [vmem:[%s1258 + $0x8] sm:$0xff]
          %v1261 = vld [vmem:[%s1258 + $0x10] sm:$0xff]
          %v1262 = vld [vmem:[%s1258 + $0x18] sm:$0xff]
          %v1263 = vld [vmem:[%s1258 + $0x20] sm:$0xff]
          %v1264 = vld [vmem:[%s1258 + $0x28] sm:$0xff]
          %v1265 = vld [vmem:[%s1258 + $0x30] sm:$0xff]
          %v1266 = vld [vmem:[%s1258 + $0x38] sm:$0xff]
          %v1267 = vld [vmem:[%s1258 + $0x40] sm:$0xff]
          %v1268 = vld [vmem:[%s1258 + $0x48] sm:$0xff]
          %v1269 = vld [vmem:[%s1258 + $0x50] sm:$0xff]
          %v1270 = vld [vmem:[%s1258 + $0x58] sm:$0xff]
          %v1271 = vld [vmem:[%s1258 + $0x60] sm:$0xff]
          %v1272 = vld [vmem:[%s1258 + $0x68] sm:$0xff]
          %v1273 = vld [vmem:[%s1258 + $0x70] sm:$0xff]
          %v1274 = vld [vmem:[%s1258 + $0x78] sm:$0xff]
          %v1275 = vld [vmem:[%s1258 + $0x80] sm:$0xff]
          %v1276 = vld [vmem:[%s1258 + $0x88] sm:$0xff]
          %v1277 = vld [vmem:[%s1258 + $0x90] sm:$0xff]
          %v1278 = vld [vmem:[%s1258 + $0x98] sm:$0xff]
          %v1279 = vld [vmem:[%s1258 + $0xa0] sm:$0xff]
          %v1280 = vld [vmem:[%s1258 + $0xa8] sm:$0xff]
          %v1281 = vld [vmem:[%s1258 + $0xb0] sm:$0xff]
          %v1282 = vld [vmem:[%s1258 + $0xb8] sm:$0xff]
          %v1283 = vld [vmem:[%s1258 + $0xc0] sm:$0xff]
          %v1284 = vld [vmem:[%s1258 + $0xc8] sm:$0xff]
          %v1285 = vld [vmem:[%s1258 + $0xd0] sm:$0xff]
          %v1286 = vld [vmem:[%s1258 + $0xd8] sm:$0xff]
          %v1287 = vld [vmem:[%s1258 + $0xe0] sm:$0xff]
          %v1288 = vld [vmem:[%s1258 + $0xe8] sm:$0xff]
          %v1289 = vld [vmem:[%s1258 + $0xf0] sm:$0xff]
          %v1290 = vld [vmem:[%s1258 + $0xf8] sm:$0xff]
          %v1291 = vld [vmem:[#allocation2] sm:$0x1]
          %v1292 = vmul.f32 %v1291, 0.005
          %v1293 = vld [vmem:[#allocation3] sm:$0x1]
          %v1294 = vmul.f32 %v1293, 0.005
          %v1295 = vadd.f32 %v1294, 1e-05
          %v1296 = vrsqrt.pop %v1295
          %v1297 = vld [vmem:[%s3] sm:$0x1]
          %v1298 = vmul.f32 %v1297, %v1296
          %v1299 = vld [vmem:[%s4] sm:$0x1]
          %v1300 = vmul.f32 %v1292, %v1298
          %v1301 = vsub.f32 %v1299, %v1300
          %v1303 = vlaneseq
          %v1304 = vshrl.u32 %v1303, 7
          %v1305 = vsub.s32 0, %v1304
          %v1306 = vrot.slane %v1298, %v1305
          %v1308 = vmul.f32 %v1259, %v1306
          %v1309 = vmul.f32 %v1260, %v1306
          %v1310 = vmul.f32 %v1261, %v1306
          %v1311 = vmul.f32 %v1262, %v1306
          %v1312 = vmul.f32 %v1263, %v1306
          %v1313 = vmul.f32 %v1264, %v1306
          %v1314 = vmul.f32 %v1265, %v1306
          %v1315 = vmul.f32 %v1266, %v1306
          %v1316 = vmul.f32 %v1267, %v1306
          %v1317 = vmul.f32 %v1268, %v1306
          %v1318 = vmul.f32 %v1269, %v1306
          %v1319 = vmul.f32 %v1270, %v1306
          %v1320 = vmul.f32 %v1271, %v1306
          %v1321 = vmul.f32 %v1272, %v1306
          %v1322 = vmul.f32 %v1273, %v1306
          %v1323 = vmul.f32 %v1274, %v1306
          %v1324 = vmul.f32 %v1275, %v1306
          %v1325 = vmul.f32 %v1276, %v1306
          %v1326 = vmul.f32 %v1277, %v1306
          %v1327 = vmul.f32 %v1278, %v1306
          %v1328 = vmul.f32 %v1279, %v1306
          %v1329 = vmul.f32 %v1280, %v1306
          %v1330 = vmul.f32 %v1281, %v1306
          %v1331 = vmul.f32 %v1282, %v1306
          %v1332 = vmul.f32 %v1283, %v1306
          %v1333 = vmul.f32 %v1284, %v1306
          %v1334 = vmul.f32 %v1285, %v1306
          %v1335 = vmul.f32 %v1286, %v1306
          %v1336 = vmul.f32 %v1287, %v1306
          %v1337 = vmul.f32 %v1288, %v1306
          %v1338 = vmul.f32 %v1289, %v1306
          %v1339 = vmul.f32 %v1290, %v1306
          %v1341 = vlaneseq
          %v1342 = vshrl.u32 %v1341, 7
          %v1343 = vsub.s32 0, %v1342
          %v1344 = vrot.slane %v1301, %v1343
          %v1346 = vadd.f32 %v1308, %v1344
          %v1347 = vadd.f32 %v1309, %v1344
          %v1348 = vadd.f32 %v1310, %v1344
          %v1349 = vadd.f32 %v1311, %v1344
          %v1350 = vadd.f32 %v1312, %v1344
          %v1351 = vadd.f32 %v1313, %v1344
          %v1352 = vadd.f32 %v1314, %v1344
          %v1353 = vadd.f32 %v1315, %v1344
          %v1354 = vadd.f32 %v1316, %v1344
          %v1355 = vadd.f32 %v1317, %v1344
          %v1356 = vadd.f32 %v1318, %v1344
          %v1357 = vadd.f32 %v1319, %v1344
          %v1358 = vadd.f32 %v1320, %v1344
          %v1359 = vadd.f32 %v1321, %v1344
          %v1360 = vadd.f32 %v1322, %v1344
          %v1361 = vadd.f32 %v1323, %v1344
          %v1362 = vadd.f32 %v1324, %v1344
          %v1363 = vadd.f32 %v1325, %v1344
          %v1364 = vadd.f32 %v1326, %v1344
          %v1365 = vadd.f32 %v1327, %v1344
          %v1366 = vadd.f32 %v1328, %v1344
          %v1367 = vadd.f32 %v1329, %v1344
          %v1368 = vadd.f32 %v1330, %v1344
          %v1369 = vadd.f32 %v1331, %v1344
          %v1370 = vadd.f32 %v1332, %v1344
          %v1371 = vadd.f32 %v1333, %v1344
          %v1372 = vadd.f32 %v1334, %v1344
          %v1373 = vadd.f32 %v1335, %v1344
          %v1374 = vadd.f32 %v1336, %v1344
          %v1375 = vadd.f32 %v1337, %v1344
          %v1376 = vadd.f32 %v1338, %v1344
          %v1377 = vadd.f32 %v1339, %v1344
          %v1378 = vld [vmem:[%s5] sm:$0x1]
          %v1380 = vlaneseq
          %v1381 = vshrl.u32 %v1380, 7
          %v1382 = vsub.s32 0, %v1381
          %v1383 = vrot.slane %v1378, %v1382
          %v1385 = vmul.f32 %v1346, %v1383
          %v1386 = vmul.f32 %v1347, %v1383
          %v1387 = vmul.f32 %v1348, %v1383
          %v1388 = vmul.f32 %v1349, %v1383
          %v1389 = vmul.f32 %v1350, %v1383
          %v1390 = vmul.f32 %v1351, %v1383
          %v1391 = vmul.f32 %v1352, %v1383
          %v1392 = vmul.f32 %v1353, %v1383
          %v1393 = vmul.f32 %v1354, %v1383
          %v1394 = vmul.f32 %v1355, %v1383
          %v1395 = vmul.f32 %v1356, %v1383
          %v1396 = vmul.f32 %v1357, %v1383
          %v1397 = vmul.f32 %v1358, %v1383
          %v1398 = vmul.f32 %v1359, %v1383
          %v1399 = vmul.f32 %v1360, %v1383
          %v1400 = vmul.f32 %v1361, %v1383
          %v1401 = vmul.f32 %v1362, %v1383
          %v1402 = vmul.f32 %v1363, %v1383
          %v1403 = vmul.f32 %v1364, %v1383
          %v1404 = vmul.f32 %v1365, %v1383
          %v1405 = vmul.f32 %v1366, %v1383
          %v1406 = vmul.f32 %v1367, %v1383
          %v1407 = vmul.f32 %v1368, %v1383
          %v1408 = vmul.f32 %v1369, %v1383
          %v1409 = vmul.f32 %v1370, %v1383
          %v1410 = vmul.f32 %v1371, %v1383
          %v1411 = vmul.f32 %v1372, %v1383
          %v1412 = vmul.f32 %v1373, %v1383
          %v1413 = vmul.f32 %v1374, %v1383
          %v1414 = vmul.f32 %v1375, %v1383
          %v1415 = vmul.f32 %v1376, %v1383
          %v1416 = vmul.f32 %v1377, %v1383
          %vm1417 = vcmask 523264
          %v1418 = vsel %vm1417, %v1385, 0.0
          %1419 = vadd.xlane.f32.xlu0 %v1418
          %v1420 = vpop.xlane.xlu0 %1419
          %v1421 = vsel %vm1417, %v1386, 0.0
          %1422 = vadd.xlane.f32.xlu0 %v1421
          %v1423 = vpop.xlane.xlu0 %1422
          %v1424 = vsel %vm1417, %v1387, 0.0
          %1425 = vadd.xlane.f32.xlu0 %v1424
          %v1426 = vpop.xlane.xlu0 %1425
          %v1427 = vsel %vm1417, %v1388, 0.0
          %1428 = vadd.xlane.f32.xlu0 %v1427
          %v1429 = vpop.xlane.xlu0 %1428
          %v1430 = vsel %vm1417, %v1389, 0.0
          %1431 = vadd.xlane.f32.xlu0 %v1430
          %v1432 = vpop.xlane.xlu0 %1431
          %v1433 = vsel %vm1417, %v1390, 0.0
          %1434 = vadd.xlane.f32.xlu0 %v1433
          %v1435 = vpop.xlane.xlu0 %1434
          %v1436 = vsel %vm1417, %v1391, 0.0
          %1437 = vadd.xlane.f32.xlu0 %v1436
          %v1438 = vpop.xlane.xlu0 %1437
          %v1439 = vsel %vm1417, %v1392, 0.0
          %1440 = vadd.xlane.f32.xlu0 %v1439
          %v1441 = vpop.xlane.xlu0 %1440
          %v1442 = vsel %vm1417, %v1393, 0.0
          %1443 = vadd.xlane.f32.xlu0 %v1442
          %v1444 = vpop.xlane.xlu0 %1443
          %v1445 = vsel %vm1417, %v1394, 0.0
          %1446 = vadd.xlane.f32.xlu0 %v1445
          %v1447 = vpop.xlane.xlu0 %1446
          %v1448 = vsel %vm1417, %v1395, 0.0
          %1449 = vadd.xlane.f32.xlu0 %v1448
          %v1450 = vpop.xlane.xlu0 %1449
          %v1451 = vsel %vm1417, %v1396, 0.0
          %1452 = vadd.xlane.f32.xlu0 %v1451
          %v1453 = vpop.xlane.xlu0 %1452
          %v1454 = vsel %vm1417, %v1397, 0.0
          %1455 = vadd.xlane.f32.xlu0 %v1454
          %v1456 = vpop.xlane.xlu0 %1455
          %v1457 = vsel %vm1417, %v1398, 0.0
          %1458 = vadd.xlane.f32.xlu0 %v1457
          %v1459 = vpop.xlane.xlu0 %1458
          %v1460 = vsel %vm1417, %v1399, 0.0
          %1461 = vadd.xlane.f32.xlu0 %v1460
          %v1462 = vpop.xlane.xlu0 %1461
          %v1463 = vsel %vm1417, %v1400, 0.0
          %1464 = vadd.xlane.f32.xlu0 %v1463
          %v1465 = vpop.xlane.xlu0 %1464
          %v1466 = vsel %vm1417, %v1401, 0.0
          %1467 = vadd.xlane.f32.xlu0 %v1466
          %v1468 = vpop.xlane.xlu0 %1467
          %v1469 = vsel %vm1417, %v1402, 0.0
          %1470 = vadd.xlane.f32.xlu0 %v1469
          %v1471 = vpop.xlane.xlu0 %1470
          %v1472 = vsel %vm1417, %v1403, 0.0
          %1473 = vadd.xlane.f32.xlu0 %v1472
          %v1474 = vpop.xlane.xlu0 %1473
          %v1475 = vsel %vm1417, %v1404, 0.0
          %1476 = vadd.xlane.f32.xlu0 %v1475
          %v1477 = vpop.xlane.xlu0 %1476
          %v1478 = vsel %vm1417, %v1405, 0.0
          %1479 = vadd.xlane.f32.xlu0 %v1478
          %v1480 = vpop.xlane.xlu0 %1479
          %v1481 = vsel %vm1417, %v1406, 0.0
          %1482 = vadd.xlane.f32.xlu0 %v1481
          %v1483 = vpop.xlane.xlu0 %1482
          %v1484 = vsel %vm1417, %v1407, 0.0
          %1485 = vadd.xlane.f32.xlu0 %v1484
          %v1486 = vpop.xlane.xlu0 %1485
          %v1487 = vsel %vm1417, %v1408, 0.0
          %1488 = vadd.xlane.f32.xlu0 %v1487
          %v1489 = vpop.xlane.xlu0 %1488
          %v1490 = vsel %vm1417, %v1409, 0.0
          %1491 = vadd.xlane.f32.xlu0 %v1490
          %v1492 = vpop.xlane.xlu0 %1491
          %v1493 = vsel %vm1417, %v1410, 0.0
          %1494 = vadd.xlane.f32.xlu0 %v1493
          %v1495 = vpop.xlane.xlu0 %1494
          %v1496 = vsel %vm1417, %v1411, 0.0
          %1497 = vadd.xlane.f32.xlu0 %v1496
          %v1498 = vpop.xlane.xlu0 %1497
          %v1499 = vsel %vm1417, %v1412, 0.0
          %1500 = vadd.xlane.f32.xlu0 %v1499
          %v1501 = vpop.xlane.xlu0 %1500
          %v1502 = vsel %vm1417, %v1413, 0.0
          %1503 = vadd.xlane.f32.xlu0 %v1502
          %v1504 = vpop.xlane.xlu0 %1503
          %v1505 = vsel %vm1417, %v1414, 0.0
          %1506 = vadd.xlane.f32.xlu0 %v1505
          %v1507 = vpop.xlane.xlu0 %1506
          %v1508 = vsel %vm1417, %v1415, 0.0
          %1509 = vadd.xlane.f32.xlu0 %v1508
          %v1510 = vpop.xlane.xlu0 %1509
          %v1511 = vsel %vm1417, %v1416, 0.0
          %1512 = vadd.xlane.f32.xlu0 %v1511
          %v1513 = vpop.xlane.xlu0 %1512
          %s1514 = sld [smem:[#allocation5]]
          %v1515 = vstv %s1514
          %v1516 = vadd.f32 %v1420, %v1515
          %v1517 = vadd.f32 %v1423, %v1515
          %v1518 = vadd.f32 %v1426, %v1515
          %v1519 = vadd.f32 %v1429, %v1515
          %v1520 = vadd.f32 %v1432, %v1515
          %v1521 = vadd.f32 %v1435, %v1515
          %v1522 = vadd.f32 %v1438, %v1515
          %v1523 = vadd.f32 %v1441, %v1515
          %v1524 = vadd.f32 %v1444, %v1515
          %v1525 = vadd.f32 %v1447, %v1515
          %v1526 = vadd.f32 %v1450, %v1515
          %v1527 = vadd.f32 %v1453, %v1515
          %v1528 = vadd.f32 %v1456, %v1515
          %v1529 = vadd.f32 %v1459, %v1515
          %v1530 = vadd.f32 %v1462, %v1515
          %v1531 = vadd.f32 %v1465, %v1515
          %v1532 = vadd.f32 %v1468, %v1515
          %v1533 = vadd.f32 %v1471, %v1515
          %v1534 = vadd.f32 %v1474, %v1515
          %v1535 = vadd.f32 %v1477, %v1515
          %v1536 = vadd.f32 %v1480, %v1515
          %v1537 = vadd.f32 %v1483, %v1515
          %v1538 = vadd.f32 %v1486, %v1515
          %v1539 = vadd.f32 %v1489, %v1515
          %v1540 = vadd.f32 %v1492, %v1515
          %v1541 = vadd.f32 %v1495, %v1515
          %v1542 = vadd.f32 %v1498, %v1515
          %v1543 = vadd.f32 %v1501, %v1515
          %v1544 = vadd.f32 %v1504, %v1515
          %v1545 = vadd.f32 %v1507, %v1515
          %v1546 = vadd.f32 %v1510, %v1515
          %v1547 = vadd.f32 %v1513, %v1515
          %v1548 = vsub.f32 0.0, %v1516
          %v1549 = vsub.f32 0.0, %v1517
          %v1550 = vsub.f32 0.0, %v1518
          %v1551 = vsub.f32 0.0, %v1519
          %v1552 = vsub.f32 0.0, %v1520
          %v1553 = vsub.f32 0.0, %v1521
          %v1554 = vsub.f32 0.0, %v1522
          %v1555 = vsub.f32 0.0, %v1523
          %v1556 = vsub.f32 0.0, %v1524
          %v1557 = vsub.f32 0.0, %v1525
          %v1558 = vsub.f32 0.0, %v1526
          %v1559 = vsub.f32 0.0, %v1527
          %v1560 = vsub.f32 0.0, %v1528
          %v1561 = vsub.f32 0.0, %v1529
          %v1562 = vsub.f32 0.0, %v1530
          %v1563 = vsub.f32 0.0, %v1531
          %v1564 = vsub.f32 0.0, %v1532
          %v1565 = vsub.f32 0.0, %v1533
          %v1566 = vsub.f32 0.0, %v1534
          %v1567 = vsub.f32 0.0, %v1535
          %v1568 = vsub.f32 0.0, %v1536
          %v1569 = vsub.f32 0.0, %v1537
          %v1570 = vsub.f32 0.0, %v1538
          %v1571 = vsub.f32 0.0, %v1539
          %v1572 = vsub.f32 0.0, %v1540
          %v1573 = vsub.f32 0.0, %v1541
          %v1574 = vsub.f32 0.0, %v1542
          %v1575 = vsub.f32 0.0, %v1543
          %v1576 = vsub.f32 0.0, %v1544
          %v1577 = vsub.f32 0.0, %v1545
          %v1578 = vsub.f32 0.0, %v1546
          %v1579 = vsub.f32 0.0, %v1547
          %v1580 = vmul.f32 %v1548, 1.442695
          %v1581 = vpow.pop %v1580
          %v1582 = vmul.f32 %v1549, 1.442695
          %v1583 = vpow.pop %v1582
          %v1584 = vmul.f32 %v1550, 1.442695
          %v1585 = vpow.pop %v1584
          %v1586 = vmul.f32 %v1551, 1.442695
          %v1587 = vpow.pop %v1586
          %v1588 = vmul.f32 %v1552, 1.442695
          %v1589 = vpow.pop %v1588
          %v1590 = vmul.f32 %v1553, 1.442695
          %v1591 = vpow.pop %v1590
          %v1592 = vmul.f32 %v1554, 1.442695
          %v1593 = vpow.pop %v1592
          %v1594 = vmul.f32 %v1555, 1.442695
          %v1595 = vpow.pop %v1594
          %v1596 = vmul.f32 %v1556, 1.442695
          %v1597 = vpow.pop %v1596
          %v1598 = vmul.f32 %v1557, 1.442695
          %v1599 = vpow.pop %v1598
          %v1600 = vmul.f32 %v1558, 1.442695
          %v1601 = vpow.pop %v1600
          %v1602 = vmul.f32 %v1559, 1.442695
          %v1603 = vpow.pop %v1602
          %v1604 = vmul.f32 %v1560, 1.442695
          %v1605 = vpow.pop %v1604
          %v1606 = vmul.f32 %v1561, 1.442695
          %v1607 = vpow.pop %v1606
          %v1608 = vmul.f32 %v1562, 1.442695
          %v1609 = vpow.pop %v1608
          %v1610 = vmul.f32 %v1563, 1.442695
          %v1611 = vpow.pop %v1610
          %v1612 = vmul.f32 %v1564, 1.442695
          %v1613 = vpow.pop %v1612
          %v1614 = vmul.f32 %v1565, 1.442695
          %v1615 = vpow.pop %v1614
          %v1616 = vmul.f32 %v1566, 1.442695
          %v1617 = vpow.pop %v1616
          %v1618 = vmul.f32 %v1567, 1.442695
          %v1619 = vpow.pop %v1618
          %v1620 = vmul.f32 %v1568, 1.442695
          %v1621 = vpow.pop %v1620
          %v1622 = vmul.f32 %v1569, 1.442695
          %v1623 = vpow.pop %v1622
          %v1624 = vmul.f32 %v1570, 1.442695
          %v1625 = vpow.pop %v1624
          %v1626 = vmul.f32 %v1571, 1.442695
          %v1627 = vpow.pop %v1626
          %v1628 = vmul.f32 %v1572, 1.442695
          %v1629 = vpow.pop %v1628
          %v1630 = vmul.f32 %v1573, 1.442695
          %v1631 = vpow.pop %v1630
          %v1632 = vmul.f32 %v1574, 1.442695
          %v1633 = vpow.pop %v1632
          %v1634 = vmul.f32 %v1575, 1.442695
          %v1635 = vpow.pop %v1634
          %v1636 = vmul.f32 %v1576, 1.442695
          %v1637 = vpow.pop %v1636
          %v1638 = vmul.f32 %v1577, 1.442695
          %v1639 = vpow.pop %v1638
          %v1640 = vmul.f32 %v1578, 1.442695
          %v1641 = vpow.pop %v1640
          %v1642 = vmul.f32 %v1579, 1.442695
          %v1643 = vpow.pop %v1642
          %v1644 = vadd.f32 %v1581, 1.0
          %v1645 = vadd.f32 %v1583, 1.0
          %v1646 = vadd.f32 %v1585, 1.0
          %v1647 = vadd.f32 %v1587, 1.0
          %v1648 = vadd.f32 %v1589, 1.0
          %v1649 = vadd.f32 %v1591, 1.0
          %v1650 = vadd.f32 %v1593, 1.0
          %v1651 = vadd.f32 %v1595, 1.0
          %v1652 = vadd.f32 %v1597, 1.0
          %v1653 = vadd.f32 %v1599, 1.0
          %v1654 = vadd.f32 %v1601, 1.0
          %v1655 = vadd.f32 %v1603, 1.0
          %v1656 = vadd.f32 %v1605, 1.0
          %v1657 = vadd.f32 %v1607, 1.0
          %v1658 = vadd.f32 %v1609, 1.0
          %v1659 = vadd.f32 %v1611, 1.0
          %v1660 = vadd.f32 %v1613, 1.0
          %v1661 = vadd.f32 %v1615, 1.0
          %v1662 = vadd.f32 %v1617, 1.0
          %v1663 = vadd.f32 %v1619, 1.0
          %v1664 = vadd.f32 %v1621, 1.0
          %v1665 = vadd.f32 %v1623, 1.0
          %v1666 = vadd.f32 %v1625, 1.0
          %v1667 = vadd.f32 %v1627, 1.0
          %v1668 = vadd.f32 %v1629, 1.0
          %v1669 = vadd.f32 %v1631, 1.0
          %v1670 = vadd.f32 %v1633, 1.0
          %v1671 = vadd.f32 %v1635, 1.0
          %v1672 = vadd.f32 %v1637, 1.0
          %v1673 = vadd.f32 %v1639, 1.0
          %v1674 = vadd.f32 %v1641, 1.0
          %v1675 = vadd.f32 %v1643, 1.0
          %v1676 = vrcp.pop %v1644
          %v1677 = vrcp.pop %v1645
          %v1678 = vrcp.pop %v1646
          %v1679 = vrcp.pop %v1647
          %v1680 = vrcp.pop %v1648
          %v1681 = vrcp.pop %v1649
          %v1682 = vrcp.pop %v1650
          %v1683 = vrcp.pop %v1651
          %v1684 = vrcp.pop %v1652
          %v1685 = vrcp.pop %v1653
          %v1686 = vrcp.pop %v1654
          %v1687 = vrcp.pop %v1655
          %v1688 = vrcp.pop %v1656
          %v1689 = vrcp.pop %v1657
          %v1690 = vrcp.pop %v1658
          %v1691 = vrcp.pop %v1659
          %v1692 = vrcp.pop %v1660
          %v1693 = vrcp.pop %v1661
          %v1694 = vrcp.pop %v1662
          %v1695 = vrcp.pop %v1663
          %v1696 = vrcp.pop %v1664
          %v1697 = vrcp.pop %v1665
          %v1698 = vrcp.pop %v1666
          %v1699 = vrcp.pop %v1667
          %v1700 = vrcp.pop %v1668
          %v1701 = vrcp.pop %v1669
          %v1702 = vrcp.pop %v1670
          %v1703 = vrcp.pop %v1671
          %v1704 = vrcp.pop %v1672
          %v1705 = vrcp.pop %v1673
          %v1706 = vrcp.pop %v1674
          %v1707 = vrcp.pop %v1675
          %v1740 = vlaneseq
          %v1741 = vshrl.u32 %v1740, 7
          %v1742 = vsub.s32 0, %v1741
          %v1743 = vrot.slane %v1676, %v1742
          %v1744 = vlaneseq
          %v1745 = vshrl.u32 %v1744, 7
          %v1746 = vsub.s32 1, %v1745
          %v1747 = vrot.slane %v1676, %v1746
          %v1748 = vlaneseq
          %v1749 = vshrl.u32 %v1748, 7
          %v1750 = vsub.s32 2, %v1749
          %v1751 = vrot.slane %v1676, %v1750
          %v1752 = vlaneseq
          %v1753 = vshrl.u32 %v1752, 7
          %v1754 = vsub.s32 3, %v1753
          %v1755 = vrot.slane %v1676, %v1754
          %v1756 = vlaneseq
          %v1757 = vshrl.u32 %v1756, 7
          %v1758 = vsub.s32 4, %v1757
          %v1759 = vrot.slane %v1676, %v1758
          %v1760 = vlaneseq
          %v1761 = vshrl.u32 %v1760, 7
          %v1762 = vsub.s32 5, %v1761
          %v1763 = vrot.slane %v1676, %v1762
          %v1764 = vlaneseq
          %v1765 = vshrl.u32 %v1764, 7
          %v1766 = vsub.s32 6, %v1765
          %v1767 = vrot.slane %v1676, %v1766
          %v1768 = vlaneseq
          %v1769 = vshrl.u32 %v1768, 7
          %v1770 = vsub.s32 7, %v1769
          %v1771 = vrot.slane %v1676, %v1770
          %v1772 = vlaneseq
          %v1773 = vshrl.u32 %v1772, 7
          %v1774 = vsub.s32 0, %v1773
          %v1775 = vrot.slane %v1677, %v1774
          %v1776 = vlaneseq
          %v1777 = vshrl.u32 %v1776, 7
          %v1778 = vsub.s32 1, %v1777
          %v1779 = vrot.slane %v1677, %v1778
          %v1780 = vlaneseq
          %v1781 = vshrl.u32 %v1780, 7
          %v1782 = vsub.s32 2, %v1781
          %v1783 = vrot.slane %v1677, %v1782
          %v1784 = vlaneseq
          %v1785 = vshrl.u32 %v1784, 7
          %v1786 = vsub.s32 3, %v1785
          %v1787 = vrot.slane %v1677, %v1786
          %v1788 = vlaneseq
          %v1789 = vshrl.u32 %v1788, 7
          %v1790 = vsub.s32 4, %v1789
          %v1791 = vrot.slane %v1677, %v1790
          %v1792 = vlaneseq
          %v1793 = vshrl.u32 %v1792, 7
          %v1794 = vsub.s32 5, %v1793
          %v1795 = vrot.slane %v1677, %v1794
          %v1796 = vlaneseq
          %v1797 = vshrl.u32 %v1796, 7
          %v1798 = vsub.s32 6, %v1797
          %v1799 = vrot.slane %v1677, %v1798
          %v1800 = vlaneseq
          %v1801 = vshrl.u32 %v1800, 7
          %v1802 = vsub.s32 7, %v1801
          %v1803 = vrot.slane %v1677, %v1802
          %v1804 = vlaneseq
          %v1805 = vshrl.u32 %v1804, 7
          %v1806 = vsub.s32 0, %v1805
          %v1807 = vrot.slane %v1678, %v1806
          %v1808 = vlaneseq
          %v1809 = vshrl.u32 %v1808, 7
          %v1810 = vsub.s32 1, %v1809
          %v1811 = vrot.slane %v1678, %v1810
          %v1812 = vlaneseq
          %v1813 = vshrl.u32 %v1812, 7
          %v1814 = vsub.s32 2, %v1813
          %v1815 = vrot.slane %v1678, %v1814
          %v1816 = vlaneseq
          %v1817 = vshrl.u32 %v1816, 7
          %v1818 = vsub.s32 3, %v1817
          %v1819 = vrot.slane %v1678, %v1818
          %v1820 = vlaneseq
          %v1821 = vshrl.u32 %v1820, 7
          %v1822 = vsub.s32 4, %v1821
          %v1823 = vrot.slane %v1678, %v1822
          %v1824 = vlaneseq
          %v1825 = vshrl.u32 %v1824, 7
          %v1826 = vsub.s32 5, %v1825
          %v1827 = vrot.slane %v1678, %v1826
          %v1828 = vlaneseq
          %v1829 = vshrl.u32 %v1828, 7
          %v1830 = vsub.s32 6, %v1829
          %v1831 = vrot.slane %v1678, %v1830
          %v1832 = vlaneseq
          %v1833 = vshrl.u32 %v1832, 7
          %v1834 = vsub.s32 7, %v1833
          %v1835 = vrot.slane %v1678, %v1834
          %v1836 = vlaneseq
          %v1837 = vshrl.u32 %v1836, 7
          %v1838 = vsub.s32 0, %v1837
          %v1839 = vrot.slane %v1679, %v1838
          %v1840 = vlaneseq
          %v1841 = vshrl.u32 %v1840, 7
          %v1842 = vsub.s32 1, %v1841
          %v1843 = vrot.slane %v1679, %v1842
          %v1844 = vlaneseq
          %v1845 = vshrl.u32 %v1844, 7
          %v1846 = vsub.s32 2, %v1845
          %v1847 = vrot.slane %v1679, %v1846
          %v1848 = vlaneseq
          %v1849 = vshrl.u32 %v1848, 7
          %v1850 = vsub.s32 3, %v1849
          %v1851 = vrot.slane %v1679, %v1850
          %v1852 = vlaneseq
          %v1853 = vshrl.u32 %v1852, 7
          %v1854 = vsub.s32 4, %v1853
          %v1855 = vrot.slane %v1679, %v1854
          %v1856 = vlaneseq
          %v1857 = vshrl.u32 %v1856, 7
          %v1858 = vsub.s32 5, %v1857
          %v1859 = vrot.slane %v1679, %v1858
          %v1860 = vlaneseq
          %v1861 = vshrl.u32 %v1860, 7
          %v1862 = vsub.s32 6, %v1861
          %v1863 = vrot.slane %v1679, %v1862
          %v1864 = vlaneseq
          %v1865 = vshrl.u32 %v1864, 7
          %v1866 = vsub.s32 7, %v1865
          %v1867 = vrot.slane %v1679, %v1866
          %v1868 = vlaneseq
          %v1869 = vshrl.u32 %v1868, 7
          %v1870 = vsub.s32 0, %v1869
          %v1871 = vrot.slane %v1680, %v1870
          %v1872 = vlaneseq
          %v1873 = vshrl.u32 %v1872, 7
          %v1874 = vsub.s32 1, %v1873
          %v1875 = vrot.slane %v1680, %v1874
          %v1876 = vlaneseq
          %v1877 = vshrl.u32 %v1876, 7
          %v1878 = vsub.s32 2, %v1877
          %v1879 = vrot.slane %v1680, %v1878
          %v1880 = vlaneseq
          %v1881 = vshrl.u32 %v1880, 7
          %v1882 = vsub.s32 3, %v1881
          %v1883 = vrot.slane %v1680, %v1882
          %v1884 = vlaneseq
          %v1885 = vshrl.u32 %v1884, 7
          %v1886 = vsub.s32 4, %v1885
          %v1887 = vrot.slane %v1680, %v1886
          %v1888 = vlaneseq
          %v1889 = vshrl.u32 %v1888, 7
          %v1890 = vsub.s32 5, %v1889
          %v1891 = vrot.slane %v1680, %v1890
          %v1892 = vlaneseq
          %v1893 = vshrl.u32 %v1892, 7
          %v1894 = vsub.s32 6, %v1893
          %v1895 = vrot.slane %v1680, %v1894
          %v1896 = vlaneseq
          %v1897 = vshrl.u32 %v1896, 7
          %v1898 = vsub.s32 7, %v1897
          %v1899 = vrot.slane %v1680, %v1898
          %v1900 = vlaneseq
          %v1901 = vshrl.u32 %v1900, 7
          %v1902 = vsub.s32 0, %v1901
          %v1903 = vrot.slane %v1681, %v1902
          %v1904 = vlaneseq
          %v1905 = vshrl.u32 %v1904, 7
          %v1906 = vsub.s32 1, %v1905
          %v1907 = vrot.slane %v1681, %v1906
          %v1908 = vlaneseq
          %v1909 = vshrl.u32 %v1908, 7
          %v1910 = vsub.s32 2, %v1909
          %v1911 = vrot.slane %v1681, %v1910
          %v1912 = vlaneseq
          %v1913 = vshrl.u32 %v1912, 7
          %v1914 = vsub.s32 3, %v1913
          %v1915 = vrot.slane %v1681, %v1914
          %v1916 = vlaneseq
          %v1917 = vshrl.u32 %v1916, 7
          %v1918 = vsub.s32 4, %v1917
          %v1919 = vrot.slane %v1681, %v1918
          %v1920 = vlaneseq
          %v1921 = vshrl.u32 %v1920, 7
          %v1922 = vsub.s32 5, %v1921
          %v1923 = vrot.slane %v1681, %v1922
          %v1924 = vlaneseq
          %v1925 = vshrl.u32 %v1924, 7
          %v1926 = vsub.s32 6, %v1925
          %v1927 = vrot.slane %v1681, %v1926
          %v1928 = vlaneseq
          %v1929 = vshrl.u32 %v1928, 7
          %v1930 = vsub.s32 7, %v1929
          %v1931 = vrot.slane %v1681, %v1930
          %v1932 = vlaneseq
          %v1933 = vshrl.u32 %v1932, 7
          %v1934 = vsub.s32 0, %v1933
          %v1935 = vrot.slane %v1682, %v1934
          %v1936 = vlaneseq
          %v1937 = vshrl.u32 %v1936, 7
          %v1938 = vsub.s32 1, %v1937
          %v1939 = vrot.slane %v1682, %v1938
          %v1940 = vlaneseq
          %v1941 = vshrl.u32 %v1940, 7
          %v1942 = vsub.s32 2, %v1941
          %v1943 = vrot.slane %v1682, %v1942
          %v1944 = vlaneseq
          %v1945 = vshrl.u32 %v1944, 7
          %v1946 = vsub.s32 3, %v1945
          %v1947 = vrot.slane %v1682, %v1946
          %v1948 = vlaneseq
          %v1949 = vshrl.u32 %v1948, 7
          %v1950 = vsub.s32 4, %v1949
          %v1951 = vrot.slane %v1682, %v1950
          %v1952 = vlaneseq
          %v1953 = vshrl.u32 %v1952, 7
          %v1954 = vsub.s32 5, %v1953
          %v1955 = vrot.slane %v1682, %v1954
          %v1956 = vlaneseq
          %v1957 = vshrl.u32 %v1956, 7
          %v1958 = vsub.s32 6, %v1957
          %v1959 = vrot.slane %v1682, %v1958
          %v1960 = vlaneseq
          %v1961 = vshrl.u32 %v1960, 7
          %v1962 = vsub.s32 7, %v1961
          %v1963 = vrot.slane %v1682, %v1962
          %v1964 = vlaneseq
          %v1965 = vshrl.u32 %v1964, 7
          %v1966 = vsub.s32 0, %v1965
          %v1967 = vrot.slane %v1683, %v1966
          %v1968 = vlaneseq
          %v1969 = vshrl.u32 %v1968, 7
          %v1970 = vsub.s32 1, %v1969
          %v1971 = vrot.slane %v1683, %v1970
          %v1972 = vlaneseq
          %v1973 = vshrl.u32 %v1972, 7
          %v1974 = vsub.s32 2, %v1973
          %v1975 = vrot.slane %v1683, %v1974
          %v1976 = vlaneseq
          %v1977 = vshrl.u32 %v1976, 7
          %v1978 = vsub.s32 3, %v1977
          %v1979 = vrot.slane %v1683, %v1978
          %v1980 = vlaneseq
          %v1981 = vshrl.u32 %v1980, 7
          %v1982 = vsub.s32 4, %v1981
          %v1983 = vrot.slane %v1683, %v1982
          %v1984 = vlaneseq
          %v1985 = vshrl.u32 %v1984, 7
          %v1986 = vsub.s32 5, %v1985
          %v1987 = vrot.slane %v1683, %v1986
          %v1988 = vlaneseq
          %v1989 = vshrl.u32 %v1988, 7
          %v1990 = vsub.s32 6, %v1989
          %v1991 = vrot.slane %v1683, %v1990
          %v1992 = vlaneseq
          %v1993 = vshrl.u32 %v1992, 7
          %v1994 = vsub.s32 7, %v1993
          %v1995 = vrot.slane %v1683, %v1994
          %v1996 = vlaneseq
          %v1997 = vshrl.u32 %v1996, 7
          %v1998 = vsub.s32 0, %v1997
          %v1999 = vrot.slane %v1684, %v1998
          %v2000 = vlaneseq
          %v2001 = vshrl.u32 %v2000, 7
          %v2002 = vsub.s32 1, %v2001
          %v2003 = vrot.slane %v1684, %v2002
          %v2004 = vlaneseq
          %v2005 = vshrl.u32 %v2004, 7
          %v2006 = vsub.s32 2, %v2005
          %v2007 = vrot.slane %v1684, %v2006
          %v2008 = vlaneseq
          %v2009 = vshrl.u32 %v2008, 7
          %v2010 = vsub.s32 3, %v2009
          %v2011 = vrot.slane %v1684, %v2010
          %v2012 = vlaneseq
          %v2013 = vshrl.u32 %v2012, 7
          %v2014 = vsub.s32 4, %v2013
          %v2015 = vrot.slane %v1684, %v2014
          %v2016 = vlaneseq
          %v2017 = vshrl.u32 %v2016, 7
          %v2018 = vsub.s32 5, %v2017
          %v2019 = vrot.slane %v1684, %v2018
          %v2020 = vlaneseq
          %v2021 = vshrl.u32 %v2020, 7
          %v2022 = vsub.s32 6, %v2021
          %v2023 = vrot.slane %v1684, %v2022
          %v2024 = vlaneseq
          %v2025 = vshrl.u32 %v2024, 7
          %v2026 = vsub.s32 7, %v2025
          %v2027 = vrot.slane %v1684, %v2026
          %v2028 = vlaneseq
          %v2029 = vshrl.u32 %v2028, 7
          %v2030 = vsub.s32 0, %v2029
          %v2031 = vrot.slane %v1685, %v2030
          %v2032 = vlaneseq
          %v2033 = vshrl.u32 %v2032, 7
          %v2034 = vsub.s32 1, %v2033
          %v2035 = vrot.slane %v1685, %v2034
          %v2036 = vlaneseq
          %v2037 = vshrl.u32 %v2036, 7
          %v2038 = vsub.s32 2, %v2037
          %v2039 = vrot.slane %v1685, %v2038
          %v2040 = vlaneseq
          %v2041 = vshrl.u32 %v2040, 7
          %v2042 = vsub.s32 3, %v2041
          %v2043 = vrot.slane %v1685, %v2042
          %v2044 = vlaneseq
          %v2045 = vshrl.u32 %v2044, 7
          %v2046 = vsub.s32 4, %v2045
          %v2047 = vrot.slane %v1685, %v2046
          %v2048 = vlaneseq
          %v2049 = vshrl.u32 %v2048, 7
          %v2050 = vsub.s32 5, %v2049
          %v2051 = vrot.slane %v1685, %v2050
          %v2052 = vlaneseq
          %v2053 = vshrl.u32 %v2052, 7
          %v2054 = vsub.s32 6, %v2053
          %v2055 = vrot.slane %v1685, %v2054
          %v2056 = vlaneseq
          %v2057 = vshrl.u32 %v2056, 7
          %v2058 = vsub.s32 7, %v2057
          %v2059 = vrot.slane %v1685, %v2058
          %v2060 = vlaneseq
          %v2061 = vshrl.u32 %v2060, 7
          %v2062 = vsub.s32 0, %v2061
          %v2063 = vrot.slane %v1686, %v2062
          %v2064 = vlaneseq
          %v2065 = vshrl.u32 %v2064, 7
          %v2066 = vsub.s32 1, %v2065
          %v2067 = vrot.slane %v1686, %v2066
          %v2068 = vlaneseq
          %v2069 = vshrl.u32 %v2068, 7
          %v2070 = vsub.s32 2, %v2069
          %v2071 = vrot.slane %v1686, %v2070
          %v2072 = vlaneseq
          %v2073 = vshrl.u32 %v2072, 7
          %v2074 = vsub.s32 3, %v2073
          %v2075 = vrot.slane %v1686, %v2074
          %v2076 = vlaneseq
          %v2077 = vshrl.u32 %v2076, 7
          %v2078 = vsub.s32 4, %v2077
          %v2079 = vrot.slane %v1686, %v2078
          %v2080 = vlaneseq
          %v2081 = vshrl.u32 %v2080, 7
          %v2082 = vsub.s32 5, %v2081
          %v2083 = vrot.slane %v1686, %v2082
          %v2084 = vlaneseq
          %v2085 = vshrl.u32 %v2084, 7
          %v2086 = vsub.s32 6, %v2085
          %v2087 = vrot.slane %v1686, %v2086
          %v2088 = vlaneseq
          %v2089 = vshrl.u32 %v2088, 7
          %v2090 = vsub.s32 7, %v2089
          %v2091 = vrot.slane %v1686, %v2090
          %v2092 = vlaneseq
          %v2093 = vshrl.u32 %v2092, 7
          %v2094 = vsub.s32 0, %v2093
          %v2095 = vrot.slane %v1687, %v2094
          %v2096 = vlaneseq
          %v2097 = vshrl.u32 %v2096, 7
          %v2098 = vsub.s32 1, %v2097
          %v2099 = vrot.slane %v1687, %v2098
          %v2100 = vlaneseq
          %v2101 = vshrl.u32 %v2100, 7
          %v2102 = vsub.s32 2, %v2101
          %v2103 = vrot.slane %v1687, %v2102
          %v2104 = vlaneseq
          %v2105 = vshrl.u32 %v2104, 7
          %v2106 = vsub.s32 3, %v2105
          %v2107 = vrot.slane %v1687, %v2106
          %v2108 = vlaneseq
          %v2109 = vshrl.u32 %v2108, 7
          %v2110 = vsub.s32 4, %v2109
          %v2111 = vrot.slane %v1687, %v2110
          %v2112 = vlaneseq
          %v2113 = vshrl.u32 %v2112, 7
          %v2114 = vsub.s32 5, %v2113
          %v2115 = vrot.slane %v1687, %v2114
          %v2116 = vlaneseq
          %v2117 = vshrl.u32 %v2116, 7
          %v2118 = vsub.s32 6, %v2117
          %v2119 = vrot.slane %v1687, %v2118
          %v2120 = vlaneseq
          %v2121 = vshrl.u32 %v2120, 7
          %v2122 = vsub.s32 7, %v2121
          %v2123 = vrot.slane %v1687, %v2122
          %v2124 = vlaneseq
          %v2125 = vshrl.u32 %v2124, 7
          %v2126 = vsub.s32 0, %v2125
          %v2127 = vrot.slane %v1688, %v2126
          %v2128 = vlaneseq
          %v2129 = vshrl.u32 %v2128, 7
          %v2130 = vsub.s32 1, %v2129
          %v2131 = vrot.slane %v1688, %v2130
          %v2132 = vlaneseq
          %v2133 = vshrl.u32 %v2132, 7
          %v2134 = vsub.s32 2, %v2133
          %v2135 = vrot.slane %v1688, %v2134
          %v2136 = vlaneseq
          %v2137 = vshrl.u32 %v2136, 7
          %v2138 = vsub.s32 3, %v2137
          %v2139 = vrot.slane %v1688, %v2138
          %v2140 = vlaneseq
          %v2141 = vshrl.u32 %v2140, 7
          %v2142 = vsub.s32 4, %v2141
          %v2143 = vrot.slane %v1688, %v2142
          %v2144 = vlaneseq
          %v2145 = vshrl.u32 %v2144, 7
          %v2146 = vsub.s32 5, %v2145
          %v2147 = vrot.slane %v1688, %v2146
          %v2148 = vlaneseq
          %v2149 = vshrl.u32 %v2148, 7
          %v2150 = vsub.s32 6, %v2149
          %v2151 = vrot.slane %v1688, %v2150
          %v2152 = vlaneseq
          %v2153 = vshrl.u32 %v2152, 7
          %v2154 = vsub.s32 7, %v2153
          %v2155 = vrot.slane %v1688, %v2154
          %v2156 = vlaneseq
          %v2157 = vshrl.u32 %v2156, 7
          %v2158 = vsub.s32 0, %v2157
          %v2159 = vrot.slane %v1689, %v2158
          %v2160 = vlaneseq
          %v2161 = vshrl.u32 %v2160, 7
          %v2162 = vsub.s32 1, %v2161
          %v2163 = vrot.slane %v1689, %v2162
          %v2164 = vlaneseq
          %v2165 = vshrl.u32 %v2164, 7
          %v2166 = vsub.s32 2, %v2165
          %v2167 = vrot.slane %v1689, %v2166
          %v2168 = vlaneseq
          %v2169 = vshrl.u32 %v2168, 7
          %v2170 = vsub.s32 3, %v2169
          %v2171 = vrot.slane %v1689, %v2170
          %v2172 = vlaneseq
          %v2173 = vshrl.u32 %v2172, 7
          %v2174 = vsub.s32 4, %v2173
          %v2175 = vrot.slane %v1689, %v2174
          %v2176 = vlaneseq
          %v2177 = vshrl.u32 %v2176, 7
          %v2178 = vsub.s32 5, %v2177
          %v2179 = vrot.slane %v1689, %v2178
          %v2180 = vlaneseq
          %v2181 = vshrl.u32 %v2180, 7
          %v2182 = vsub.s32 6, %v2181
          %v2183 = vrot.slane %v1689, %v2182
          %v2184 = vlaneseq
          %v2185 = vshrl.u32 %v2184, 7
          %v2186 = vsub.s32 7, %v2185
          %v2187 = vrot.slane %v1689, %v2186
          %v2188 = vlaneseq
          %v2189 = vshrl.u32 %v2188, 7
          %v2190 = vsub.s32 0, %v2189
          %v2191 = vrot.slane %v1690, %v2190
          %v2192 = vlaneseq
          %v2193 = vshrl.u32 %v2192, 7
          %v2194 = vsub.s32 1, %v2193
          %v2195 = vrot.slane %v1690, %v2194
          %v2196 = vlaneseq
          %v2197 = vshrl.u32 %v2196, 7
          %v2198 = vsub.s32 2, %v2197
          %v2199 = vrot.slane %v1690, %v2198
          %v2200 = vlaneseq
          %v2201 = vshrl.u32 %v2200, 7
          %v2202 = vsub.s32 3, %v2201
          %v2203 = vrot.slane %v1690, %v2202
          %v2204 = vlaneseq
          %v2205 = vshrl.u32 %v2204, 7
          %v2206 = vsub.s32 4, %v2205
          %v2207 = vrot.slane %v1690, %v2206
          %v2208 = vlaneseq
          %v2209 = vshrl.u32 %v2208, 7
          %v2210 = vsub.s32 5, %v2209
          %v2211 = vrot.slane %v1690, %v2210
          %v2212 = vlaneseq
          %v2213 = vshrl.u32 %v2212, 7
          %v2214 = vsub.s32 6, %v2213
          %v2215 = vrot.slane %v1690, %v2214
          %v2216 = vlaneseq
          %v2217 = vshrl.u32 %v2216, 7
          %v2218 = vsub.s32 7, %v2217
          %v2219 = vrot.slane %v1690, %v2218
          %v2220 = vlaneseq
          %v2221 = vshrl.u32 %v2220, 7
          %v2222 = vsub.s32 0, %v2221
          %v2223 = vrot.slane %v1691, %v2222
          %v2224 = vlaneseq
          %v2225 = vshrl.u32 %v2224, 7
          %v2226 = vsub.s32 1, %v2225
          %v2227 = vrot.slane %v1691, %v2226
          %v2228 = vlaneseq
          %v2229 = vshrl.u32 %v2228, 7
          %v2230 = vsub.s32 2, %v2229
          %v2231 = vrot.slane %v1691, %v2230
          %v2232 = vlaneseq
          %v2233 = vshrl.u32 %v2232, 7
          %v2234 = vsub.s32 3, %v2233
          %v2235 = vrot.slane %v1691, %v2234
          %v2236 = vlaneseq
          %v2237 = vshrl.u32 %v2236, 7
          %v2238 = vsub.s32 4, %v2237
          %v2239 = vrot.slane %v1691, %v2238
          %v2240 = vlaneseq
          %v2241 = vshrl.u32 %v2240, 7
          %v2242 = vsub.s32 5, %v2241
          %v2243 = vrot.slane %v1691, %v2242
          %v2244 = vlaneseq
          %v2245 = vshrl.u32 %v2244, 7
          %v2246 = vsub.s32 6, %v2245
          %v2247 = vrot.slane %v1691, %v2246
          %v2248 = vlaneseq
          %v2249 = vshrl.u32 %v2248, 7
          %v2250 = vsub.s32 7, %v2249
          %v2251 = vrot.slane %v1691, %v2250
          %v2252 = vlaneseq
          %v2253 = vshrl.u32 %v2252, 7
          %v2254 = vsub.s32 0, %v2253
          %v2255 = vrot.slane %v1692, %v2254
          %v2256 = vlaneseq
          %v2257 = vshrl.u32 %v2256, 7
          %v2258 = vsub.s32 1, %v2257
          %v2259 = vrot.slane %v1692, %v2258
          %v2260 = vlaneseq
          %v2261 = vshrl.u32 %v2260, 7
          %v2262 = vsub.s32 2, %v2261
          %v2263 = vrot.slane %v1692, %v2262
          %v2264 = vlaneseq
          %v2265 = vshrl.u32 %v2264, 7
          %v2266 = vsub.s32 3, %v2265
          %v2267 = vrot.slane %v1692, %v2266
          %v2268 = vlaneseq
          %v2269 = vshrl.u32 %v2268, 7
          %v2270 = vsub.s32 4, %v2269
          %v2271 = vrot.slane %v1692, %v2270
          %v2272 = vlaneseq
          %v2273 = vshrl.u32 %v2272, 7
          %v2274 = vsub.s32 5, %v2273
          %v2275 = vrot.slane %v1692, %v2274
          %v2276 = vlaneseq
          %v2277 = vshrl.u32 %v2276, 7
          %v2278 = vsub.s32 6, %v2277
          %v2279 = vrot.slane %v1692, %v2278
          %v2280 = vlaneseq
          %v2281 = vshrl.u32 %v2280, 7
          %v2282 = vsub.s32 7, %v2281
          %v2283 = vrot.slane %v1692, %v2282
          %v2284 = vlaneseq
          %v2285 = vshrl.u32 %v2284, 7
          %v2286 = vsub.s32 0, %v2285
          %v2287 = vrot.slane %v1693, %v2286
          %v2288 = vlaneseq
          %v2289 = vshrl.u32 %v2288, 7
          %v2290 = vsub.s32 1, %v2289
          %v2291 = vrot.slane %v1693, %v2290
          %v2292 = vlaneseq
          %v2293 = vshrl.u32 %v2292, 7
          %v2294 = vsub.s32 2, %v2293
          %v2295 = vrot.slane %v1693, %v2294
          %v2296 = vlaneseq
          %v2297 = vshrl.u32 %v2296, 7
          %v2298 = vsub.s32 3, %v2297
          %v2299 = vrot.slane %v1693, %v2298
          %v2300 = vlaneseq
          %v2301 = vshrl.u32 %v2300, 7
          %v2302 = vsub.s32 4, %v2301
          %v2303 = vrot.slane %v1693, %v2302
          %v2304 = vlaneseq
          %v2305 = vshrl.u32 %v2304, 7
          %v2306 = vsub.s32 5, %v2305
          %v2307 = vrot.slane %v1693, %v2306
          %v2308 = vlaneseq
          %v2309 = vshrl.u32 %v2308, 7
          %v2310 = vsub.s32 6, %v2309
          %v2311 = vrot.slane %v1693, %v2310
          %v2312 = vlaneseq
          %v2313 = vshrl.u32 %v2312, 7
          %v2314 = vsub.s32 7, %v2313
          %v2315 = vrot.slane %v1693, %v2314
          %v2316 = vlaneseq
          %v2317 = vshrl.u32 %v2316, 7
          %v2318 = vsub.s32 0, %v2317
          %v2319 = vrot.slane %v1694, %v2318
          %v2320 = vlaneseq
          %v2321 = vshrl.u32 %v2320, 7
          %v2322 = vsub.s32 1, %v2321
          %v2323 = vrot.slane %v1694, %v2322
          %v2324 = vlaneseq
          %v2325 = vshrl.u32 %v2324, 7
          %v2326 = vsub.s32 2, %v2325
          %v2327 = vrot.slane %v1694, %v2326
          %v2328 = vlaneseq
          %v2329 = vshrl.u32 %v2328, 7
          %v2330 = vsub.s32 3, %v2329
          %v2331 = vrot.slane %v1694, %v2330
          %v2332 = vlaneseq
          %v2333 = vshrl.u32 %v2332, 7
          %v2334 = vsub.s32 4, %v2333
          %v2335 = vrot.slane %v1694, %v2334
          %v2336 = vlaneseq
          %v2337 = vshrl.u32 %v2336, 7
          %v2338 = vsub.s32 5, %v2337
          %v2339 = vrot.slane %v1694, %v2338
          %v2340 = vlaneseq
          %v2341 = vshrl.u32 %v2340, 7
          %v2342 = vsub.s32 6, %v2341
          %v2343 = vrot.slane %v1694, %v2342
          %v2344 = vlaneseq
          %v2345 = vshrl.u32 %v2344, 7
          %v2346 = vsub.s32 7, %v2345
          %v2347 = vrot.slane %v1694, %v2346
          %v2348 = vlaneseq
          %v2349 = vshrl.u32 %v2348, 7
          %v2350 = vsub.s32 0, %v2349
          %v2351 = vrot.slane %v1695, %v2350
          %v2352 = vlaneseq
          %v2353 = vshrl.u32 %v2352, 7
          %v2354 = vsub.s32 1, %v2353
          %v2355 = vrot.slane %v1695, %v2354
          %v2356 = vlaneseq
          %v2357 = vshrl.u32 %v2356, 7
          %v2358 = vsub.s32 2, %v2357
          %v2359 = vrot.slane %v1695, %v2358
          %v2360 = vlaneseq
          %v2361 = vshrl.u32 %v2360, 7
          %v2362 = vsub.s32 3, %v2361
          %v2363 = vrot.slane %v1695, %v2362
          %v2364 = vlaneseq
          %v2365 = vshrl.u32 %v2364, 7
          %v2366 = vsub.s32 4, %v2365
          %v2367 = vrot.slane %v1695, %v2366
          %v2368 = vlaneseq
          %v2369 = vshrl.u32 %v2368, 7
          %v2370 = vsub.s32 5, %v2369
          %v2371 = vrot.slane %v1695, %v2370
          %v2372 = vlaneseq
          %v2373 = vshrl.u32 %v2372, 7
          %v2374 = vsub.s32 6, %v2373
          %v2375 = vrot.slane %v1695, %v2374
          %v2376 = vlaneseq
          %v2377 = vshrl.u32 %v2376, 7
          %v2378 = vsub.s32 7, %v2377
          %v2379 = vrot.slane %v1695, %v2378
          %v2380 = vlaneseq
          %v2381 = vshrl.u32 %v2380, 7
          %v2382 = vsub.s32 0, %v2381
          %v2383 = vrot.slane %v1696, %v2382
          %v2384 = vlaneseq
          %v2385 = vshrl.u32 %v2384, 7
          %v2386 = vsub.s32 1, %v2385
          %v2387 = vrot.slane %v1696, %v2386
          %v2388 = vlaneseq
          %v2389 = vshrl.u32 %v2388, 7
          %v2390 = vsub.s32 2, %v2389
          %v2391 = vrot.slane %v1696, %v2390
          %v2392 = vlaneseq
          %v2393 = vshrl.u32 %v2392, 7
          %v2394 = vsub.s32 3, %v2393
          %v2395 = vrot.slane %v1696, %v2394
          %v2396 = vlaneseq
          %v2397 = vshrl.u32 %v2396, 7
          %v2398 = vsub.s32 4, %v2397
          %v2399 = vrot.slane %v1696, %v2398
          %v2400 = vlaneseq
          %v2401 = vshrl.u32 %v2400, 7
          %v2402 = vsub.s32 5, %v2401
          %v2403 = vrot.slane %v1696, %v2402
          %v2404 = vlaneseq
          %v2405 = vshrl.u32 %v2404, 7
          %v2406 = vsub.s32 6, %v2405
          %v2407 = vrot.slane %v1696, %v2406
          %v2408 = vlaneseq
          %v2409 = vshrl.u32 %v2408, 7
          %v2410 = vsub.s32 7, %v2409
          %v2411 = vrot.slane %v1696, %v2410
          %v2412 = vlaneseq
          %v2413 = vshrl.u32 %v2412, 7
          %v2414 = vsub.s32 0, %v2413
          %v2415 = vrot.slane %v1697, %v2414
          %v2416 = vlaneseq
          %v2417 = vshrl.u32 %v2416, 7
          %v2418 = vsub.s32 1, %v2417
          %v2419 = vrot.slane %v1697, %v2418
          %v2420 = vlaneseq
          %v2421 = vshrl.u32 %v2420, 7
          %v2422 = vsub.s32 2, %v2421
          %v2423 = vrot.slane %v1697, %v2422
          %v2424 = vlaneseq
          %v2425 = vshrl.u32 %v2424, 7
          %v2426 = vsub.s32 3, %v2425
          %v2427 = vrot.slane %v1697, %v2426
          %v2428 = vlaneseq
          %v2429 = vshrl.u32 %v2428, 7
          %v2430 = vsub.s32 4, %v2429
          %v2431 = vrot.slane %v1697, %v2430
          %v2432 = vlaneseq
          %v2433 = vshrl.u32 %v2432, 7
          %v2434 = vsub.s32 5, %v2433
          %v2435 = vrot.slane %v1697, %v2434
          %v2436 = vlaneseq
          %v2437 = vshrl.u32 %v2436, 7
          %v2438 = vsub.s32 6, %v2437
          %v2439 = vrot.slane %v1697, %v2438
          %v2440 = vlaneseq
          %v2441 = vshrl.u32 %v2440, 7
          %v2442 = vsub.s32 7, %v2441
          %v2443 = vrot.slane %v1697, %v2442
          %v2444 = vlaneseq
          %v2445 = vshrl.u32 %v2444, 7
          %v2446 = vsub.s32 0, %v2445
          %v2447 = vrot.slane %v1698, %v2446
          %v2448 = vlaneseq
          %v2449 = vshrl.u32 %v2448, 7
          %v2450 = vsub.s32 1, %v2449
          %v2451 = vrot.slane %v1698, %v2450
          %v2452 = vlaneseq
          %v2453 = vshrl.u32 %v2452, 7
          %v2454 = vsub.s32 2, %v2453
          %v2455 = vrot.slane %v1698, %v2454
          %v2456 = vlaneseq
          %v2457 = vshrl.u32 %v2456, 7
          %v2458 = vsub.s32 3, %v2457
          %v2459 = vrot.slane %v1698, %v2458
          %v2460 = vlaneseq
          %v2461 = vshrl.u32 %v2460, 7
          %v2462 = vsub.s32 4, %v2461
          %v2463 = vrot.slane %v1698, %v2462
          %v2464 = vlaneseq
          %v2465 = vshrl.u32 %v2464, 7
          %v2466 = vsub.s32 5, %v2465
          %v2467 = vrot.slane %v1698, %v2466
          %v2468 = vlaneseq
          %v2469 = vshrl.u32 %v2468, 7
          %v2470 = vsub.s32 6, %v2469
          %v2471 = vrot.slane %v1698, %v2470
          %v2472 = vlaneseq
          %v2473 = vshrl.u32 %v2472, 7
          %v2474 = vsub.s32 7, %v2473
          %v2475 = vrot.slane %v1698, %v2474
          %v2476 = vlaneseq
          %v2477 = vshrl.u32 %v2476, 7
          %v2478 = vsub.s32 0, %v2477
          %v2479 = vrot.slane %v1699, %v2478
          %v2480 = vlaneseq
          %v2481 = vshrl.u32 %v2480, 7
          %v2482 = vsub.s32 1, %v2481
          %v2483 = vrot.slane %v1699, %v2482
          %v2484 = vlaneseq
          %v2485 = vshrl.u32 %v2484, 7
          %v2486 = vsub.s32 2, %v2485
          %v2487 = vrot.slane %v1699, %v2486
          %v2488 = vlaneseq
          %v2489 = vshrl.u32 %v2488, 7
          %v2490 = vsub.s32 3, %v2489
          %v2491 = vrot.slane %v1699, %v2490
          %v2492 = vlaneseq
          %v2493 = vshrl.u32 %v2492, 7
          %v2494 = vsub.s32 4, %v2493
          %v2495 = vrot.slane %v1699, %v2494
          %v2496 = vlaneseq
          %v2497 = vshrl.u32 %v2496, 7
          %v2498 = vsub.s32 5, %v2497
          %v2499 = vrot.slane %v1699, %v2498
          %v2500 = vlaneseq
          %v2501 = vshrl.u32 %v2500, 7
          %v2502 = vsub.s32 6, %v2501
          %v2503 = vrot.slane %v1699, %v2502
          %v2504 = vlaneseq
          %v2505 = vshrl.u32 %v2504, 7
          %v2506 = vsub.s32 7, %v2505
          %v2507 = vrot.slane %v1699, %v2506
          %v2508 = vlaneseq
          %v2509 = vshrl.u32 %v2508, 7
          %v2510 = vsub.s32 0, %v2509
          %v2511 = vrot.slane %v1700, %v2510
          %v2512 = vlaneseq
          %v2513 = vshrl.u32 %v2512, 7
          %v2514 = vsub.s32 1, %v2513
          %v2515 = vrot.slane %v1700, %v2514
          %v2516 = vlaneseq
          %v2517 = vshrl.u32 %v2516, 7
          %v2518 = vsub.s32 2, %v2517
          %v2519 = vrot.slane %v1700, %v2518
          %v2520 = vlaneseq
          %v2521 = vshrl.u32 %v2520, 7
          %v2522 = vsub.s32 3, %v2521
          %v2523 = vrot.slane %v1700, %v2522
          %v2524 = vlaneseq
          %v2525 = vshrl.u32 %v2524, 7
          %v2526 = vsub.s32 4, %v2525
          %v2527 = vrot.slane %v1700, %v2526
          %v2528 = vlaneseq
          %v2529 = vshrl.u32 %v2528, 7
          %v2530 = vsub.s32 5, %v2529
          %v2531 = vrot.slane %v1700, %v2530
          %v2532 = vlaneseq
          %v2533 = vshrl.u32 %v2532, 7
          %v2534 = vsub.s32 6, %v2533
          %v2535 = vrot.slane %v1700, %v2534
          %v2536 = vlaneseq
          %v2537 = vshrl.u32 %v2536, 7
          %v2538 = vsub.s32 7, %v2537
          %v2539 = vrot.slane %v1700, %v2538
          %v2540 = vlaneseq
          %v2541 = vshrl.u32 %v2540, 7
          %v2542 = vsub.s32 0, %v2541
          %v2543 = vrot.slane %v1701, %v2542
          %v2544 = vlaneseq
          %v2545 = vshrl.u32 %v2544, 7
          %v2546 = vsub.s32 1, %v2545
          %v2547 = vrot.slane %v1701, %v2546
          %v2548 = vlaneseq
          %v2549 = vshrl.u32 %v2548, 7
          %v2550 = vsub.s32 2, %v2549
          %v2551 = vrot.slane %v1701, %v2550
          %v2552 = vlaneseq
          %v2553 = vshrl.u32 %v2552, 7
          %v2554 = vsub.s32 3, %v2553
          %v2555 = vrot.slane %v1701, %v2554
          %v2556 = vlaneseq
          %v2557 = vshrl.u32 %v2556, 7
          %v2558 = vsub.s32 4, %v2557
          %v2559 = vrot.slane %v1701, %v2558
          %v2560 = vlaneseq
          %v2561 = vshrl.u32 %v2560, 7
          %v2562 = vsub.s32 5, %v2561
          %v2563 = vrot.slane %v1701, %v2562
          %v2564 = vlaneseq
          %v2565 = vshrl.u32 %v2564, 7
          %v2566 = vsub.s32 6, %v2565
          %v2567 = vrot.slane %v1701, %v2566
          %v2568 = vlaneseq
          %v2569 = vshrl.u32 %v2568, 7
          %v2570 = vsub.s32 7, %v2569
          %v2571 = vrot.slane %v1701, %v2570
          %v2572 = vlaneseq
          %v2573 = vshrl.u32 %v2572, 7
          %v2574 = vsub.s32 0, %v2573
          %v2575 = vrot.slane %v1702, %v2574
          %v2576 = vlaneseq
          %v2577 = vshrl.u32 %v2576, 7
          %v2578 = vsub.s32 1, %v2577
          %v2579 = vrot.slane %v1702, %v2578
          %v2580 = vlaneseq
          %v2581 = vshrl.u32 %v2580, 7
          %v2582 = vsub.s32 2, %v2581
          %v2583 = vrot.slane %v1702, %v2582
          %v2584 = vlaneseq
          %v2585 = vshrl.u32 %v2584, 7
          %v2586 = vsub.s32 3, %v2585
          %v2587 = vrot.slane %v1702, %v2586
          %v2588 = vlaneseq
          %v2589 = vshrl.u32 %v2588, 7
          %v2590 = vsub.s32 4, %v2589
          %v2591 = vrot.slane %v1702, %v2590
          %v2592 = vlaneseq
          %v2593 = vshrl.u32 %v2592, 7
          %v2594 = vsub.s32 5, %v2593
          %v2595 = vrot.slane %v1702, %v2594
          %v2596 = vlaneseq
          %v2597 = vshrl.u32 %v2596, 7
          %v2598 = vsub.s32 6, %v2597
          %v2599 = vrot.slane %v1702, %v2598
          %v2600 = vlaneseq
          %v2601 = vshrl.u32 %v2600, 7
          %v2602 = vsub.s32 7, %v2601
          %v2603 = vrot.slane %v1702, %v2602
          %v2604 = vlaneseq
          %v2605 = vshrl.u32 %v2604, 7
          %v2606 = vsub.s32 0, %v2605
          %v2607 = vrot.slane %v1703, %v2606
          %v2608 = vlaneseq
          %v2609 = vshrl.u32 %v2608, 7
          %v2610 = vsub.s32 1, %v2609
          %v2611 = vrot.slane %v1703, %v2610
          %v2612 = vlaneseq
          %v2613 = vshrl.u32 %v2612, 7
          %v2614 = vsub.s32 2, %v2613
          %v2615 = vrot.slane %v1703, %v2614
          %v2616 = vlaneseq
          %v2617 = vshrl.u32 %v2616, 7
          %v2618 = vsub.s32 3, %v2617
          %v2619 = vrot.slane %v1703, %v2618
          %v2620 = vlaneseq
          %v2621 = vshrl.u32 %v2620, 7
          %v2622 = vsub.s32 4, %v2621
          %v2623 = vrot.slane %v1703, %v2622
          %v2624 = vlaneseq
          %v2625 = vshrl.u32 %v2624, 7
          %v2626 = vsub.s32 5, %v2625
          %v2627 = vrot.slane %v1703, %v2626
          %v2628 = vlaneseq
          %v2629 = vshrl.u32 %v2628, 7
          %v2630 = vsub.s32 6, %v2629
          %v2631 = vrot.slane %v1703, %v2630
          %v2632 = vlaneseq
          %v2633 = vshrl.u32 %v2632, 7
          %v2634 = vsub.s32 7, %v2633
          %v2635 = vrot.slane %v1703, %v2634
          %v2636 = vlaneseq
          %v2637 = vshrl.u32 %v2636, 7
          %v2638 = vsub.s32 0, %v2637
          %v2639 = vrot.slane %v1704, %v2638
          %v2640 = vlaneseq
          %v2641 = vshrl.u32 %v2640, 7
          %v2642 = vsub.s32 1, %v2641
          %v2643 = vrot.slane %v1704, %v2642
          %v2644 = vlaneseq
          %v2645 = vshrl.u32 %v2644, 7
          %v2646 = vsub.s32 2, %v2645
          %v2647 = vrot.slane %v1704, %v2646
          %v2648 = vlaneseq
          %v2649 = vshrl.u32 %v2648, 7
          %v2650 = vsub.s32 3, %v2649
          %v2651 = vrot.slane %v1704, %v2650
          %v2652 = vlaneseq
          %v2653 = vshrl.u32 %v2652, 7
          %v2654 = vsub.s32 4, %v2653
          %v2655 = vrot.slane %v1704, %v2654
          %v2656 = vlaneseq
          %v2657 = vshrl.u32 %v2656, 7
          %v2658 = vsub.s32 5, %v2657
          %v2659 = vrot.slane %v1704, %v2658
          %v2660 = vlaneseq
          %v2661 = vshrl.u32 %v2660, 7
          %v2662 = vsub.s32 6, %v2661
          %v2663 = vrot.slane %v1704, %v2662
          %v2664 = vlaneseq
          %v2665 = vshrl.u32 %v2664, 7
          %v2666 = vsub.s32 7, %v2665
          %v2667 = vrot.slane %v1704, %v2666
          %v2668 = vlaneseq
          %v2669 = vshrl.u32 %v2668, 7
          %v2670 = vsub.s32 0, %v2669
          %v2671 = vrot.slane %v1705, %v2670
          %v2672 = vlaneseq
          %v2673 = vshrl.u32 %v2672, 7
          %v2674 = vsub.s32 1, %v2673
          %v2675 = vrot.slane %v1705, %v2674
          %v2676 = vlaneseq
          %v2677 = vshrl.u32 %v2676, 7
          %v2678 = vsub.s32 2, %v2677
          %v2679 = vrot.slane %v1705, %v2678
          %v2680 = vlaneseq
          %v2681 = vshrl.u32 %v2680, 7
          %v2682 = vsub.s32 3, %v2681
          %v2683 = vrot.slane %v1705, %v2682
          %v2684 = vlaneseq
          %v2685 = vshrl.u32 %v2684, 7
          %v2686 = vsub.s32 4, %v2685
          %v2687 = vrot.slane %v1705, %v2686
          %v2688 = vlaneseq
          %v2689 = vshrl.u32 %v2688, 7
          %v2690 = vsub.s32 5, %v2689
          %v2691 = vrot.slane %v1705, %v2690
          %v2692 = vlaneseq
          %v2693 = vshrl.u32 %v2692, 7
          %v2694 = vsub.s32 6, %v2693
          %v2695 = vrot.slane %v1705, %v2694
          %v2696 = vlaneseq
          %v2697 = vshrl.u32 %v2696, 7
          %v2698 = vsub.s32 7, %v2697
          %v2699 = vrot.slane %v1705, %v2698
          %v2700 = vlaneseq
          %v2701 = vshrl.u32 %v2700, 7
          %v2702 = vsub.s32 0, %v2701
          %v2703 = vrot.slane %v1706, %v2702
          %v2704 = vlaneseq
          %v2705 = vshrl.u32 %v2704, 7
          %v2706 = vsub.s32 1, %v2705
          %v2707 = vrot.slane %v1706, %v2706
          %v2708 = vlaneseq
          %v2709 = vshrl.u32 %v2708, 7
          %v2710 = vsub.s32 2, %v2709
          %v2711 = vrot.slane %v1706, %v2710
          %v2712 = vlaneseq
          %v2713 = vshrl.u32 %v2712, 7
          %v2714 = vsub.s32 3, %v2713
          %v2715 = vrot.slane %v1706, %v2714
          %v2716 = vlaneseq
          %v2717 = vshrl.u32 %v2716, 7
          %v2718 = vsub.s32 4, %v2717
          %v2719 = vrot.slane %v1706, %v2718
          %v2720 = vlaneseq
          %v2721 = vshrl.u32 %v2720, 7
          %v2722 = vsub.s32 5, %v2721
          %v2723 = vrot.slane %v1706, %v2722
          %v2724 = vlaneseq
          %v2725 = vshrl.u32 %v2724, 7
          %v2726 = vsub.s32 6, %v2725
          %v2727 = vrot.slane %v1706, %v2726
          %v2728 = vlaneseq
          %v2729 = vshrl.u32 %v2728, 7
          %v2730 = vsub.s32 7, %v2729
          %v2731 = vrot.slane %v1706, %v2730
          %v2732 = vlaneseq
          %v2733 = vshrl.u32 %v2732, 7
          %v2734 = vsub.s32 0, %v2733
          %v2735 = vrot.slane %v1707, %v2734
          %v2736 = vlaneseq
          %v2737 = vshrl.u32 %v2736, 7
          %v2738 = vsub.s32 1, %v2737
          %v2739 = vrot.slane %v1707, %v2738
          %v2740 = vlaneseq
          %v2741 = vshrl.u32 %v2740, 7
          %v2742 = vsub.s32 2, %v2741
          %v2743 = vrot.slane %v1707, %v2742
          %v2744 = vlaneseq
          %v2745 = vshrl.u32 %v2744, 7
          %v2746 = vsub.s32 3, %v2745
          %v2747 = vrot.slane %v1707, %v2746
          %v2748 = vlaneseq
          %v2749 = vshrl.u32 %v2748, 7
          %v2750 = vsub.s32 4, %v2749
          %v2751 = vrot.slane %v1707, %v2750
          %v2752 = vlaneseq
          %v2753 = vshrl.u32 %v2752, 7
          %v2754 = vsub.s32 5, %v2753
          %v2755 = vrot.slane %v1707, %v2754
          %v2756 = vlaneseq
          %v2757 = vshrl.u32 %v2756, 7
          %v2758 = vsub.s32 6, %v2757
          %v2759 = vrot.slane %v1707, %v2758
          %v2760 = vlaneseq
          %v2761 = vshrl.u32 %v2760, 7
          %v2762 = vsub.s32 7, %v2761
          %v2763 = vrot.slane %v1707, %v2762
          %v2764 = vcombine.low %v1743, %v1747
          %v2765 = vcombine.low %v1751, %v1755
          %v2766 = vcombine.low %v1759, %v1763
          %v2767 = vcombine.low %v1767, %v1771
          %v2769 = vunpack.c.l.s4 1966171168
          %v2770 = vunpack.c.0.s8 %v2769
          %v2771 = vlaneseq
          %v2772 = vshrl.u32 %v2771, 7
          %v2773 = vsub.s32 %v2770, %v2772
          %v2774 = vrot.slane %v2764, %v2773
          %v2776 = vunpack.c.l.s4 1966171168
          %v2777 = vunpack.c.0.s8 %v2776
          %v2778 = vlaneseq
          %v2779 = vshrl.u32 %v2778, 7
          %v2780 = vsub.s32 %v2777, %v2779
          %v2781 = vrot.slane %v2765, %v2780
          %v2783 = vunpack.c.l.s4 1966171168
          %v2784 = vunpack.c.0.s8 %v2783
          %v2785 = vlaneseq
          %v2786 = vshrl.u32 %v2785, 7
          %v2787 = vsub.s32 %v2784, %v2786
          %v2788 = vrot.slane %v2766, %v2787
          %v2790 = vunpack.c.l.s4 1966171168
          %v2791 = vunpack.c.0.s8 %v2790
          %v2792 = vlaneseq
          %v2793 = vshrl.u32 %v2792, 7
          %v2794 = vsub.s32 %v2791, %v2793
          %v2795 = vrot.slane %v2767, %v2794
          %v2796 = vcombine.low %v2774, %v2781
          %v2797 = vcombine.low %v2788, %v2795
          %v2799 = vunpack.c.l.s4 1966171168
          %v2800 = vunpack.c.0.s8 %v2799
          %v2801 = vlaneseq
          %v2802 = vshrl.u32 %v2801, 7
          %v2803 = vsub.s32 %v2800, %v2802
          %v2804 = vrot.slane %v2796, %v2803
          %v2806 = vunpack.c.l.s4 1966171168
          %v2807 = vunpack.c.0.s8 %v2806
          %v2808 = vlaneseq
          %v2809 = vshrl.u32 %v2808, 7
          %v2810 = vsub.s32 %v2807, %v2809
          %v2811 = vrot.slane %v2797, %v2810
          %v2812 = vcombine.low %v2804, %v2811
          %v2813 = vcombine.low %v1775, %v1779
          %v2814 = vcombine.low %v1783, %v1787
          %v2815 = vcombine.low %v1791, %v1795
          %v2816 = vcombine.low %v1799, %v1803
          %v2818 = vunpack.c.l.s4 1966171168
          %v2819 = vunpack.c.0.s8 %v2818
          %v2820 = vlaneseq
          %v2821 = vshrl.u32 %v2820, 7
          %v2822 = vsub.s32 %v2819, %v2821
          %v2823 = vrot.slane %v2813, %v2822
          %v2825 = vunpack.c.l.s4 1966171168
          %v2826 = vunpack.c.0.s8 %v2825
          %v2827 = vlaneseq
          %v2828 = vshrl.u32 %v2827, 7
          %v2829 = vsub.s32 %v2826, %v2828
          %v2830 = vrot.slane %v2814, %v2829
          %v2832 = vunpack.c.l.s4 1966171168
          %v2833 = vunpack.c.0.s8 %v2832
          %v2834 = vlaneseq
          %v2835 = vshrl.u32 %v2834, 7
          %v2836 = vsub.s32 %v2833, %v2835
          %v2837 = vrot.slane %v2815, %v2836
          %v2839 = vunpack.c.l.s4 1966171168
          %v2840 = vunpack.c.0.s8 %v2839
          %v2841 = vlaneseq
          %v2842 = vshrl.u32 %v2841, 7
          %v2843 = vsub.s32 %v2840, %v2842
          %v2844 = vrot.slane %v2816, %v2843
          %v2845 = vcombine.low %v2823, %v2830
          %v2846 = vcombine.low %v2837, %v2844
          %v2848 = vunpack.c.l.s4 1966171168
          %v2849 = vunpack.c.0.s8 %v2848
          %v2850 = vlaneseq
          %v2851 = vshrl.u32 %v2850, 7
          %v2852 = vsub.s32 %v2849, %v2851
          %v2853 = vrot.slane %v2845, %v2852
          %v2855 = vunpack.c.l.s4 1966171168
          %v2856 = vunpack.c.0.s8 %v2855
          %v2857 = vlaneseq
          %v2858 = vshrl.u32 %v2857, 7
          %v2859 = vsub.s32 %v2856, %v2858
          %v2860 = vrot.slane %v2846, %v2859
          %v2861 = vcombine.low %v2853, %v2860
          %v2862 = vcombine.low %v1807, %v1811
          %v2863 = vcombine.low %v1815, %v1819
          %v2864 = vcombine.low %v1823, %v1827
          %v2865 = vcombine.low %v1831, %v1835
          %v2867 = vunpack.c.l.s4 1966171168
          %v2868 = vunpack.c.0.s8 %v2867
          %v2869 = vlaneseq
          %v2870 = vshrl.u32 %v2869, 7
          %v2871 = vsub.s32 %v2868, %v2870
          %v2872 = vrot.slane %v2862, %v2871
          %v2874 = vunpack.c.l.s4 1966171168
          %v2875 = vunpack.c.0.s8 %v2874
          %v2876 = vlaneseq
          %v2877 = vshrl.u32 %v2876, 7
          %v2878 = vsub.s32 %v2875, %v2877
          %v2879 = vrot.slane %v2863, %v2878
          %v2881 = vunpack.c.l.s4 1966171168
          %v2882 = vunpack.c.0.s8 %v2881
          %v2883 = vlaneseq
          %v2884 = vshrl.u32 %v2883, 7
          %v2885 = vsub.s32 %v2882, %v2884
          %v2886 = vrot.slane %v2864, %v2885
          %v2888 = vunpack.c.l.s4 1966171168
          %v2889 = vunpack.c.0.s8 %v2888
          %v2890 = vlaneseq
          %v2891 = vshrl.u32 %v2890, 7
          %v2892 = vsub.s32 %v2889, %v2891
          %v2893 = vrot.slane %v2865, %v2892
          %v2894 = vcombine.low %v2872, %v2879
          %v2895 = vcombine.low %v2886, %v2893
          %v2897 = vunpack.c.l.s4 1966171168
          %v2898 = vunpack.c.0.s8 %v2897
          %v2899 = vlaneseq
          %v2900 = vshrl.u32 %v2899, 7
          %v2901 = vsub.s32 %v2898, %v2900
          %v2902 = vrot.slane %v2894, %v2901
          %v2904 = vunpack.c.l.s4 1966171168
          %v2905 = vunpack.c.0.s8 %v2904
          %v2906 = vlaneseq
          %v2907 = vshrl.u32 %v2906, 7
          %v2908 = vsub.s32 %v2905, %v2907
          %v2909 = vrot.slane %v2895, %v2908
          %v2910 = vcombine.low %v2902, %v2909
          %v2911 = vcombine.low %v1839, %v1843
          %v2912 = vcombine.low %v1847, %v1851
          %v2913 = vcombine.low %v1855, %v1859
          %v2914 = vcombine.low %v1863, %v1867
          %v2916 = vunpack.c.l.s4 1966171168
          %v2917 = vunpack.c.0.s8 %v2916
          %v2918 = vlaneseq
          %v2919 = vshrl.u32 %v2918, 7
          %v2920 = vsub.s32 %v2917, %v2919
          %v2921 = vrot.slane %v2911, %v2920
          %v2923 = vunpack.c.l.s4 1966171168
          %v2924 = vunpack.c.0.s8 %v2923
          %v2925 = vlaneseq
          %v2926 = vshrl.u32 %v2925, 7
          %v2927 = vsub.s32 %v2924, %v2926
          %v2928 = vrot.slane %v2912, %v2927
          %v2930 = vunpack.c.l.s4 1966171168
          %v2931 = vunpack.c.0.s8 %v2930
          %v2932 = vlaneseq
          %v2933 = vshrl.u32 %v2932, 7
          %v2934 = vsub.s32 %v2931, %v2933
          %v2935 = vrot.slane %v2913, %v2934
          %v2937 = vunpack.c.l.s4 1966171168
          %v2938 = vunpack.c.0.s8 %v2937
          %v2939 = vlaneseq
          %v2940 = vshrl.u32 %v2939, 7
          %v2941 = vsub.s32 %v2938, %v2940
          %v2942 = vrot.slane %v2914, %v2941
          %v2943 = vcombine.low %v2921, %v2928
          %v2944 = vcombine.low %v2935, %v2942
          %v2946 = vunpack.c.l.s4 1966171168
          %v2947 = vunpack.c.0.s8 %v2946
          %v2948 = vlaneseq
          %v2949 = vshrl.u32 %v2948, 7
          %v2950 = vsub.s32 %v2947, %v2949
          %v2951 = vrot.slane %v2943, %v2950
          %v2953 = vunpack.c.l.s4 1966171168
          %v2954 = vunpack.c.0.s8 %v2953
          %v2955 = vlaneseq
          %v2956 = vshrl.u32 %v2955, 7
          %v2957 = vsub.s32 %v2954, %v2956
          %v2958 = vrot.slane %v2944, %v2957
          %v2959 = vcombine.low %v2951, %v2958
          %v2960 = vcombine.low %v1871, %v1875
          %v2961 = vcombine.low %v1879, %v1883
          %v2962 = vcombine.low %v1887, %v1891
          %v2963 = vcombine.low %v1895, %v1899
          %v2965 = vunpack.c.l.s4 1966171168
          %v2966 = vunpack.c.0.s8 %v2965
          %v2967 = vlaneseq
          %v2968 = vshrl.u32 %v2967, 7
          %v2969 = vsub.s32 %v2966, %v2968
          %v2970 = vrot.slane %v2960, %v2969
          %v2972 = vunpack.c.l.s4 1966171168
          %v2973 = vunpack.c.0.s8 %v2972
          %v2974 = vlaneseq
          %v2975 = vshrl.u32 %v2974, 7
          %v2976 = vsub.s32 %v2973, %v2975
          %v2977 = vrot.slane %v2961, %v2976
          %v2979 = vunpack.c.l.s4 1966171168
          %v2980 = vunpack.c.0.s8 %v2979
          %v2981 = vlaneseq
          %v2982 = vshrl.u32 %v2981, 7
          %v2983 = vsub.s32 %v2980, %v2982
          %v2984 = vrot.slane %v2962, %v2983
          %v2986 = vunpack.c.l.s4 1966171168
          %v2987 = vunpack.c.0.s8 %v2986
          %v2988 = vlaneseq
          %v2989 = vshrl.u32 %v2988, 7
          %v2990 = vsub.s32 %v2987, %v2989
          %v2991 = vrot.slane %v2963, %v2990
          %v2992 = vcombine.low %v2970, %v2977
          %v2993 = vcombine.low %v2984, %v2991
          %v2995 = vunpack.c.l.s4 1966171168
          %v2996 = vunpack.c.0.s8 %v2995
          %v2997 = vlaneseq
          %v2998 = vshrl.u32 %v2997, 7
          %v2999 = vsub.s32 %v2996, %v2998
          %v3000 = vrot.slane %v2992, %v2999
          %v3002 = vunpack.c.l.s4 1966171168
          %v3003 = vunpack.c.0.s8 %v3002
          %v3004 = vlaneseq
          %v3005 = vshrl.u32 %v3004, 7
          %v3006 = vsub.s32 %v3003, %v3005
          %v3007 = vrot.slane %v2993, %v3006
          %v3008 = vcombine.low %v3000, %v3007
          %v3009 = vcombine.low %v1903, %v1907
          %v3010 = vcombine.low %v1911, %v1915
          %v3011 = vcombine.low %v1919, %v1923
          %v3012 = vcombine.low %v1927, %v1931
          %v3014 = vunpack.c.l.s4 1966171168
          %v3015 = vunpack.c.0.s8 %v3014
          %v3016 = vlaneseq
          %v3017 = vshrl.u32 %v3016, 7
          %v3018 = vsub.s32 %v3015, %v3017
          %v3019 = vrot.slane %v3009, %v3018
          %v3021 = vunpack.c.l.s4 1966171168
          %v3022 = vunpack.c.0.s8 %v3021
          %v3023 = vlaneseq
          %v3024 = vshrl.u32 %v3023, 7
          %v3025 = vsub.s32 %v3022, %v3024
          %v3026 = vrot.slane %v3010, %v3025
          %v3028 = vunpack.c.l.s4 1966171168
          %v3029 = vunpack.c.0.s8 %v3028
          %v3030 = vlaneseq
          %v3031 = vshrl.u32 %v3030, 7
          %v3032 = vsub.s32 %v3029, %v3031
          %v3033 = vrot.slane %v3011, %v3032
          %v3035 = vunpack.c.l.s4 1966171168
          %v3036 = vunpack.c.0.s8 %v3035
          %v3037 = vlaneseq
          %v3038 = vshrl.u32 %v3037, 7
          %v3039 = vsub.s32 %v3036, %v3038
          %v3040 = vrot.slane %v3012, %v3039
          %v3041 = vcombine.low %v3019, %v3026
          %v3042 = vcombine.low %v3033, %v3040
          %v3044 = vunpack.c.l.s4 1966171168
          %v3045 = vunpack.c.0.s8 %v3044
          %v3046 = vlaneseq
          %v3047 = vshrl.u32 %v3046, 7
          %v3048 = vsub.s32 %v3045, %v3047
          %v3049 = vrot.slane %v3041, %v3048
          %v3051 = vunpack.c.l.s4 1966171168
          %v3052 = vunpack.c.0.s8 %v3051
          %v3053 = vlaneseq
          %v3054 = vshrl.u32 %v3053, 7
          %v3055 = vsub.s32 %v3052, %v3054
          %v3056 = vrot.slane %v3042, %v3055
          %v3057 = vcombine.low %v3049, %v3056
          %v3058 = vcombine.low %v1935, %v1939
          %v3059 = vcombine.low %v1943, %v1947
          %v3060 = vcombine.low %v1951, %v1955
          %v3061 = vcombine.low %v1959, %v1963
          %v3063 = vunpack.c.l.s4 1966171168
          %v3064 = vunpack.c.0.s8 %v3063
          %v3065 = vlaneseq
          %v3066 = vshrl.u32 %v3065, 7
          %v3067 = vsub.s32 %v3064, %v3066
          %v3068 = vrot.slane %v3058, %v3067
          %v3070 = vunpack.c.l.s4 1966171168
          %v3071 = vunpack.c.0.s8 %v3070
          %v3072 = vlaneseq
          %v3073 = vshrl.u32 %v3072, 7
          %v3074 = vsub.s32 %v3071, %v3073
          %v3075 = vrot.slane %v3059, %v3074
          %v3077 = vunpack.c.l.s4 1966171168
          %v3078 = vunpack.c.0.s8 %v3077
          %v3079 = vlaneseq
          %v3080 = vshrl.u32 %v3079, 7
          %v3081 = vsub.s32 %v3078, %v3080
          %v3082 = vrot.slane %v3060, %v3081
          %v3084 = vunpack.c.l.s4 1966171168
          %v3085 = vunpack.c.0.s8 %v3084
          %v3086 = vlaneseq
          %v3087 = vshrl.u32 %v3086, 7
          %v3088 = vsub.s32 %v3085, %v3087
          %v3089 = vrot.slane %v3061, %v3088
          %v3090 = vcombine.low %v3068, %v3075
          %v3091 = vcombine.low %v3082, %v3089
          %v3093 = vunpack.c.l.s4 1966171168
          %v3094 = vunpack.c.0.s8 %v3093
          %v3095 = vlaneseq
          %v3096 = vshrl.u32 %v3095, 7
          %v3097 = vsub.s32 %v3094, %v3096
          %v3098 = vrot.slane %v3090, %v3097
          %v3100 = vunpack.c.l.s4 1966171168
          %v3101 = vunpack.c.0.s8 %v3100
          %v3102 = vlaneseq
          %v3103 = vshrl.u32 %v3102, 7
          %v3104 = vsub.s32 %v3101, %v3103
          %v3105 = vrot.slane %v3091, %v3104
          %v3106 = vcombine.low %v3098, %v3105
          %v3107 = vcombine.low %v1967, %v1971
          %v3108 = vcombine.low %v1975, %v1979
          %v3109 = vcombine.low %v1983, %v1987
          %v3110 = vcombine.low %v1991, %v1995
          %v3112 = vunpack.c.l.s4 1966171168
          %v3113 = vunpack.c.0.s8 %v3112
          %v3114 = vlaneseq
          %v3115 = vshrl.u32 %v3114, 7
          %v3116 = vsub.s32 %v3113, %v3115
          %v3117 = vrot.slane %v3107, %v3116
          %v3119 = vunpack.c.l.s4 1966171168
          %v3120 = vunpack.c.0.s8 %v3119
          %v3121 = vlaneseq
          %v3122 = vshrl.u32 %v3121, 7
          %v3123 = vsub.s32 %v3120, %v3122
          %v3124 = vrot.slane %v3108, %v3123
          %v3126 = vunpack.c.l.s4 1966171168
          %v3127 = vunpack.c.0.s8 %v3126
          %v3128 = vlaneseq
          %v3129 = vshrl.u32 %v3128, 7
          %v3130 = vsub.s32 %v3127, %v3129
          %v3131 = vrot.slane %v3109, %v3130
          %v3133 = vunpack.c.l.s4 1966171168
          %v3134 = vunpack.c.0.s8 %v3133
          %v3135 = vlaneseq
          %v3136 = vshrl.u32 %v3135, 7
          %v3137 = vsub.s32 %v3134, %v3136
          %v3138 = vrot.slane %v3110, %v3137
          %v3139 = vcombine.low %v3117, %v3124
          %v3140 = vcombine.low %v3131, %v3138
          %v3142 = vunpack.c.l.s4 1966171168
          %v3143 = vunpack.c.0.s8 %v3142
          %v3144 = vlaneseq
          %v3145 = vshrl.u32 %v3144, 7
          %v3146 = vsub.s32 %v3143, %v3145
          %v3147 = vrot.slane %v3139, %v3146
          %v3149 = vunpack.c.l.s4 1966171168
          %v3150 = vunpack.c.0.s8 %v3149
          %v3151 = vlaneseq
          %v3152 = vshrl.u32 %v3151, 7
          %v3153 = vsub.s32 %v3150, %v3152
          %v3154 = vrot.slane %v3140, %v3153
          %v3155 = vcombine.low %v3147, %v3154
          %v3156 = vcombine.low %v1999, %v2003
          %v3157 = vcombine.low %v2007, %v2011
          %v3158 = vcombine.low %v2015, %v2019
          %v3159 = vcombine.low %v2023, %v2027
          %v3161 = vunpack.c.l.s4 1966171168
          %v3162 = vunpack.c.0.s8 %v3161
          %v3163 = vlaneseq
          %v3164 = vshrl.u32 %v3163, 7
          %v3165 = vsub.s32 %v3162, %v3164
          %v3166 = vrot.slane %v3156, %v3165
          %v3168 = vunpack.c.l.s4 1966171168
          %v3169 = vunpack.c.0.s8 %v3168
          %v3170 = vlaneseq
          %v3171 = vshrl.u32 %v3170, 7
          %v3172 = vsub.s32 %v3169, %v3171
          %v3173 = vrot.slane %v3157, %v3172
          %v3175 = vunpack.c.l.s4 1966171168
          %v3176 = vunpack.c.0.s8 %v3175
          %v3177 = vlaneseq
          %v3178 = vshrl.u32 %v3177, 7
          %v3179 = vsub.s32 %v3176, %v3178
          %v3180 = vrot.slane %v3158, %v3179
          %v3182 = vunpack.c.l.s4 1966171168
          %v3183 = vunpack.c.0.s8 %v3182
          %v3184 = vlaneseq
          %v3185 = vshrl.u32 %v3184, 7
          %v3186 = vsub.s32 %v3183, %v3185
          %v3187 = vrot.slane %v3159, %v3186
          %v3188 = vcombine.low %v3166, %v3173
          %v3189 = vcombine.low %v3180, %v3187
          %v3191 = vunpack.c.l.s4 1966171168
          %v3192 = vunpack.c.0.s8 %v3191
          %v3193 = vlaneseq
          %v3194 = vshrl.u32 %v3193, 7
          %v3195 = vsub.s32 %v3192, %v3194
          %v3196 = vrot.slane %v3188, %v3195
          %v3198 = vunpack.c.l.s4 1966171168
          %v3199 = vunpack.c.0.s8 %v3198
          %v3200 = vlaneseq
          %v3201 = vshrl.u32 %v3200, 7
          %v3202 = vsub.s32 %v3199, %v3201
          %v3203 = vrot.slane %v3189, %v3202
          %v3204 = vcombine.low %v3196, %v3203
          %v3205 = vcombine.low %v2031, %v2035
          %v3206 = vcombine.low %v2039, %v2043
          %v3207 = vcombine.low %v2047, %v2051
          %v3208 = vcombine.low %v2055, %v2059
          %v3210 = vunpack.c.l.s4 1966171168
          %v3211 = vunpack.c.0.s8 %v3210
          %v3212 = vlaneseq
          %v3213 = vshrl.u32 %v3212, 7
          %v3214 = vsub.s32 %v3211, %v3213
          %v3215 = vrot.slane %v3205, %v3214
          %v3217 = vunpack.c.l.s4 1966171168
          %v3218 = vunpack.c.0.s8 %v3217
          %v3219 = vlaneseq
          %v3220 = vshrl.u32 %v3219, 7
          %v3221 = vsub.s32 %v3218, %v3220
          %v3222 = vrot.slane %v3206, %v3221
          %v3224 = vunpack.c.l.s4 1966171168
          %v3225 = vunpack.c.0.s8 %v3224
          %v3226 = vlaneseq
          %v3227 = vshrl.u32 %v3226, 7
          %v3228 = vsub.s32 %v3225, %v3227
          %v3229 = vrot.slane %v3207, %v3228
          %v3231 = vunpack.c.l.s4 1966171168
          %v3232 = vunpack.c.0.s8 %v3231
          %v3233 = vlaneseq
          %v3234 = vshrl.u32 %v3233, 7
          %v3235 = vsub.s32 %v3232, %v3234
          %v3236 = vrot.slane %v3208, %v3235
          %v3237 = vcombine.low %v3215, %v3222
          %v3238 = vcombine.low %v3229, %v3236
          %v3240 = vunpack.c.l.s4 1966171168
          %v3241 = vunpack.c.0.s8 %v3240
          %v3242 = vlaneseq
          %v3243 = vshrl.u32 %v3242, 7
          %v3244 = vsub.s32 %v3241, %v3243
          %v3245 = vrot.slane %v3237, %v3244
          %v3247 = vunpack.c.l.s4 1966171168
          %v3248 = vunpack.c.0.s8 %v3247
          %v3249 = vlaneseq
          %v3250 = vshrl.u32 %v3249, 7
          %v3251 = vsub.s32 %v3248, %v3250
          %v3252 = vrot.slane %v3238, %v3251
          %v3253 = vcombine.low %v3245, %v3252
          %v3254 = vcombine.low %v2063, %v2067
          %v3255 = vcombine.low %v2071, %v2075
          %v3256 = vcombine.low %v2079, %v2083
          %v3257 = vcombine.low %v2087, %v2091
          %v3259 = vunpack.c.l.s4 1966171168
          %v3260 = vunpack.c.0.s8 %v3259
          %v3261 = vlaneseq
          %v3262 = vshrl.u32 %v3261, 7
          %v3263 = vsub.s32 %v3260, %v3262
          %v3264 = vrot.slane %v3254, %v3263
          %v3266 = vunpack.c.l.s4 1966171168
          %v3267 = vunpack.c.0.s8 %v3266
          %v3268 = vlaneseq
          %v3269 = vshrl.u32 %v3268, 7
          %v3270 = vsub.s32 %v3267, %v3269
          %v3271 = vrot.slane %v3255, %v3270
          %v3273 = vunpack.c.l.s4 1966171168
          %v3274 = vunpack.c.0.s8 %v3273
          %v3275 = vlaneseq
          %v3276 = vshrl.u32 %v3275, 7
          %v3277 = vsub.s32 %v3274, %v3276
          %v3278 = vrot.slane %v3256, %v3277
          %v3280 = vunpack.c.l.s4 1966171168
          %v3281 = vunpack.c.0.s8 %v3280
          %v3282 = vlaneseq
          %v3283 = vshrl.u32 %v3282, 7
          %v3284 = vsub.s32 %v3281, %v3283
          %v3285 = vrot.slane %v3257, %v3284
          %v3286 = vcombine.low %v3264, %v3271
          %v3287 = vcombine.low %v3278, %v3285
          %v3289 = vunpack.c.l.s4 1966171168
          %v3290 = vunpack.c.0.s8 %v3289
          %v3291 = vlaneseq
          %v3292 = vshrl.u32 %v3291, 7
          %v3293 = vsub.s32 %v3290, %v3292
          %v3294 = vrot.slane %v3286, %v3293
          %v3296 = vunpack.c.l.s4 1966171168
          %v3297 = vunpack.c.0.s8 %v3296
          %v3298 = vlaneseq
          %v3299 = vshrl.u32 %v3298, 7
          %v3300 = vsub.s32 %v3297, %v3299
          %v3301 = vrot.slane %v3287, %v3300
          %v3302 = vcombine.low %v3294, %v3301
          %v3303 = vcombine.low %v2095, %v2099
          %v3304 = vcombine.low %v2103, %v2107
          %v3305 = vcombine.low %v2111, %v2115
          %v3306 = vcombine.low %v2119, %v2123
          %v3308 = vunpack.c.l.s4 1966171168
          %v3309 = vunpack.c.0.s8 %v3308
          %v3310 = vlaneseq
          %v3311 = vshrl.u32 %v3310, 7
          %v3312 = vsub.s32 %v3309, %v3311
          %v3313 = vrot.slane %v3303, %v3312
          %v3315 = vunpack.c.l.s4 1966171168
          %v3316 = vunpack.c.0.s8 %v3315
          %v3317 = vlaneseq
          %v3318 = vshrl.u32 %v3317, 7
          %v3319 = vsub.s32 %v3316, %v3318
          %v3320 = vrot.slane %v3304, %v3319
          %v3322 = vunpack.c.l.s4 1966171168
          %v3323 = vunpack.c.0.s8 %v3322
          %v3324 = vlaneseq
          %v3325 = vshrl.u32 %v3324, 7
          %v3326 = vsub.s32 %v3323, %v3325
          %v3327 = vrot.slane %v3305, %v3326
          %v3329 = vunpack.c.l.s4 1966171168
          %v3330 = vunpack.c.0.s8 %v3329
          %v3331 = vlaneseq
          %v3332 = vshrl.u32 %v3331, 7
          %v3333 = vsub.s32 %v3330, %v3332
          %v3334 = vrot.slane %v3306, %v3333
          %v3335 = vcombine.low %v3313, %v3320
          %v3336 = vcombine.low %v3327, %v3334
          %v3338 = vunpack.c.l.s4 1966171168
          %v3339 = vunpack.c.0.s8 %v3338
          %v3340 = vlaneseq
          %v3341 = vshrl.u32 %v3340, 7
          %v3342 = vsub.s32 %v3339, %v3341
          %v3343 = vrot.slane %v3335, %v3342
          %v3345 = vunpack.c.l.s4 1966171168
          %v3346 = vunpack.c.0.s8 %v3345
          %v3347 = vlaneseq
          %v3348 = vshrl.u32 %v3347, 7
          %v3349 = vsub.s32 %v3346, %v3348
          %v3350 = vrot.slane %v3336, %v3349
          %v3351 = vcombine.low %v3343, %v3350
          %v3352 = vcombine.low %v2127, %v2131
          %v3353 = vcombine.low %v2135, %v2139
          %v3354 = vcombine.low %v2143, %v2147
          %v3355 = vcombine.low %v2151, %v2155
          %v3357 = vunpack.c.l.s4 1966171168
          %v3358 = vunpack.c.0.s8 %v3357
          %v3359 = vlaneseq
          %v3360 = vshrl.u32 %v3359, 7
          %v3361 = vsub.s32 %v3358, %v3360
          %v3362 = vrot.slane %v3352, %v3361
          %v3364 = vunpack.c.l.s4 1966171168
          %v3365 = vunpack.c.0.s8 %v3364
          %v3366 = vlaneseq
          %v3367 = vshrl.u32 %v3366, 7
          %v3368 = vsub.s32 %v3365, %v3367
          %v3369 = vrot.slane %v3353, %v3368
          %v3371 = vunpack.c.l.s4 1966171168
          %v3372 = vunpack.c.0.s8 %v3371
          %v3373 = vlaneseq
          %v3374 = vshrl.u32 %v3373, 7
          %v3375 = vsub.s32 %v3372, %v3374
          %v3376 = vrot.slane %v3354, %v3375
          %v3378 = vunpack.c.l.s4 1966171168
          %v3379 = vunpack.c.0.s8 %v3378
          %v3380 = vlaneseq
          %v3381 = vshrl.u32 %v3380, 7
          %v3382 = vsub.s32 %v3379, %v3381
          %v3383 = vrot.slane %v3355, %v3382
          %v3384 = vcombine.low %v3362, %v3369
          %v3385 = vcombine.low %v3376, %v3383
          %v3387 = vunpack.c.l.s4 1966171168
          %v3388 = vunpack.c.0.s8 %v3387
          %v3389 = vlaneseq
          %v3390 = vshrl.u32 %v3389, 7
          %v3391 = vsub.s32 %v3388, %v3390
          %v3392 = vrot.slane %v3384, %v3391
          %v3394 = vunpack.c.l.s4 1966171168
          %v3395 = vunpack.c.0.s8 %v3394
          %v3396 = vlaneseq
          %v3397 = vshrl.u32 %v3396, 7
          %v3398 = vsub.s32 %v3395, %v3397
          %v3399 = vrot.slane %v3385, %v3398
          %v3400 = vcombine.low %v3392, %v3399
          %v3401 = vcombine.low %v2159, %v2163
          %v3402 = vcombine.low %v2167, %v2171
          %v3403 = vcombine.low %v2175, %v2179
          %v3404 = vcombine.low %v2183, %v2187
          %v3406 = vunpack.c.l.s4 1966171168
          %v3407 = vunpack.c.0.s8 %v3406
          %v3408 = vlaneseq
          %v3409 = vshrl.u32 %v3408, 7
          %v3410 = vsub.s32 %v3407, %v3409
          %v3411 = vrot.slane %v3401, %v3410
          %v3413 = vunpack.c.l.s4 1966171168
          %v3414 = vunpack.c.0.s8 %v3413
          %v3415 = vlaneseq
          %v3416 = vshrl.u32 %v3415, 7
          %v3417 = vsub.s32 %v3414, %v3416
          %v3418 = vrot.slane %v3402, %v3417
          %v3420 = vunpack.c.l.s4 1966171168
          %v3421 = vunpack.c.0.s8 %v3420
          %v3422 = vlaneseq
          %v3423 = vshrl.u32 %v3422, 7
          %v3424 = vsub.s32 %v3421, %v3423
          %v3425 = vrot.slane %v3403, %v3424
          %v3427 = vunpack.c.l.s4 1966171168
          %v3428 = vunpack.c.0.s8 %v3427
          %v3429 = vlaneseq
          %v3430 = vshrl.u32 %v3429, 7
          %v3431 = vsub.s32 %v3428, %v3430
          %v3432 = vrot.slane %v3404, %v3431
          %v3433 = vcombine.low %v3411, %v3418
          %v3434 = vcombine.low %v3425, %v3432
          %v3436 = vunpack.c.l.s4 1966171168
          %v3437 = vunpack.c.0.s8 %v3436
          %v3438 = vlaneseq
          %v3439 = vshrl.u32 %v3438, 7
          %v3440 = vsub.s32 %v3437, %v3439
          %v3441 = vrot.slane %v3433, %v3440
          %v3443 = vunpack.c.l.s4 1966171168
          %v3444 = vunpack.c.0.s8 %v3443
          %v3445 = vlaneseq
          %v3446 = vshrl.u32 %v3445, 7
          %v3447 = vsub.s32 %v3444, %v3446
          %v3448 = vrot.slane %v3434, %v3447
          %v3449 = vcombine.low %v3441, %v3448
          %v3450 = vcombine.low %v2191, %v2195
          %v3451 = vcombine.low %v2199, %v2203
          %v3452 = vcombine.low %v2207, %v2211
          %v3453 = vcombine.low %v2215, %v2219
          %v3455 = vunpack.c.l.s4 1966171168
          %v3456 = vunpack.c.0.s8 %v3455
          %v3457 = vlaneseq
          %v3458 = vshrl.u32 %v3457, 7
          %v3459 = vsub.s32 %v3456, %v3458
          %v3460 = vrot.slane %v3450, %v3459
          %v3462 = vunpack.c.l.s4 1966171168
          %v3463 = vunpack.c.0.s8 %v3462
          %v3464 = vlaneseq
          %v3465 = vshrl.u32 %v3464, 7
          %v3466 = vsub.s32 %v3463, %v3465
          %v3467 = vrot.slane %v3451, %v3466
          %v3469 = vunpack.c.l.s4 1966171168
          %v3470 = vunpack.c.0.s8 %v3469
          %v3471 = vlaneseq
          %v3472 = vshrl.u32 %v3471, 7
          %v3473 = vsub.s32 %v3470, %v3472
          %v3474 = vrot.slane %v3452, %v3473
          %v3476 = vunpack.c.l.s4 1966171168
          %v3477 = vunpack.c.0.s8 %v3476
          %v3478 = vlaneseq
          %v3479 = vshrl.u32 %v3478, 7
          %v3480 = vsub.s32 %v3477, %v3479
          %v3481 = vrot.slane %v3453, %v3480
          %v3482 = vcombine.low %v3460, %v3467
          %v3483 = vcombine.low %v3474, %v3481
          %v3485 = vunpack.c.l.s4 1966171168
          %v3486 = vunpack.c.0.s8 %v3485
          %v3487 = vlaneseq
          %v3488 = vshrl.u32 %v3487, 7
          %v3489 = vsub.s32 %v3486, %v3488
          %v3490 = vrot.slane %v3482, %v3489
          %v3492 = vunpack.c.l.s4 1966171168
          %v3493 = vunpack.c.0.s8 %v3492
          %v3494 = vlaneseq
          %v3495 = vshrl.u32 %v3494, 7
          %v3496 = vsub.s32 %v3493, %v3495
          %v3497 = vrot.slane %v3483, %v3496
          %v3498 = vcombine.low %v3490, %v3497
          %v3499 = vcombine.low %v2223, %v2227
          %v3500 = vcombine.low %v2231, %v2235
          %v3501 = vcombine.low %v2239, %v2243
          %v3502 = vcombine.low %v2247, %v2251
          %v3504 = vunpack.c.l.s4 1966171168
          %v3505 = vunpack.c.0.s8 %v3504
          %v3506 = vlaneseq
          %v3507 = vshrl.u32 %v3506, 7
          %v3508 = vsub.s32 %v3505, %v3507
          %v3509 = vrot.slane %v3499, %v3508
          %v3511 = vunpack.c.l.s4 1966171168
          %v3512 = vunpack.c.0.s8 %v3511
          %v3513 = vlaneseq
          %v3514 = vshrl.u32 %v3513, 7
          %v3515 = vsub.s32 %v3512, %v3514
          %v3516 = vrot.slane %v3500, %v3515
          %v3518 = vunpack.c.l.s4 1966171168
          %v3519 = vunpack.c.0.s8 %v3518
          %v3520 = vlaneseq
          %v3521 = vshrl.u32 %v3520, 7
          %v3522 = vsub.s32 %v3519, %v3521
          %v3523 = vrot.slane %v3501, %v3522
          %v3525 = vunpack.c.l.s4 1966171168
          %v3526 = vunpack.c.0.s8 %v3525
          %v3527 = vlaneseq
          %v3528 = vshrl.u32 %v3527, 7
          %v3529 = vsub.s32 %v3526, %v3528
          %v3530 = vrot.slane %v3502, %v3529
          %v3531 = vcombine.low %v3509, %v3516
          %v3532 = vcombine.low %v3523, %v3530
          %v3534 = vunpack.c.l.s4 1966171168
          %v3535 = vunpack.c.0.s8 %v3534
          %v3536 = vlaneseq
          %v3537 = vshrl.u32 %v3536, 7
          %v3538 = vsub.s32 %v3535, %v3537
          %v3539 = vrot.slane %v3531, %v3538
          %v3541 = vunpack.c.l.s4 1966171168
          %v3542 = vunpack.c.0.s8 %v3541
          %v3543 = vlaneseq
          %v3544 = vshrl.u32 %v3543, 7
          %v3545 = vsub.s32 %v3542, %v3544
          %v3546 = vrot.slane %v3532, %v3545
          %v3547 = vcombine.low %v3539, %v3546
          %v3548 = vcombine.low %v2255, %v2259
          %v3549 = vcombine.low %v2263, %v2267
          %v3550 = vcombine.low %v2271, %v2275
          %v3551 = vcombine.low %v2279, %v2283
          %v3553 = vunpack.c.l.s4 1966171168
          %v3554 = vunpack.c.0.s8 %v3553
          %v3555 = vlaneseq
          %v3556 = vshrl.u32 %v3555, 7
          %v3557 = vsub.s32 %v3554, %v3556
          %v3558 = vrot.slane %v3548, %v3557
          %v3560 = vunpack.c.l.s4 1966171168
          %v3561 = vunpack.c.0.s8 %v3560
          %v3562 = vlaneseq
          %v3563 = vshrl.u32 %v3562, 7
          %v3564 = vsub.s32 %v3561, %v3563
          %v3565 = vrot.slane %v3549, %v3564
          %v3567 = vunpack.c.l.s4 1966171168
          %v3568 = vunpack.c.0.s8 %v3567
          %v3569 = vlaneseq
          %v3570 = vshrl.u32 %v3569, 7
          %v3571 = vsub.s32 %v3568, %v3570
          %v3572 = vrot.slane %v3550, %v3571
          %v3574 = vunpack.c.l.s4 1966171168
          %v3575 = vunpack.c.0.s8 %v3574
          %v3576 = vlaneseq
          %v3577 = vshrl.u32 %v3576, 7
          %v3578 = vsub.s32 %v3575, %v3577
          %v3579 = vrot.slane %v3551, %v3578
          %v3580 = vcombine.low %v3558, %v3565
          %v3581 = vcombine.low %v3572, %v3579
          %v3583 = vunpack.c.l.s4 1966171168
          %v3584 = vunpack.c.0.s8 %v3583
          %v3585 = vlaneseq
          %v3586 = vshrl.u32 %v3585, 7
          %v3587 = vsub.s32 %v3584, %v3586
          %v3588 = vrot.slane %v3580, %v3587
          %v3590 = vunpack.c.l.s4 1966171168
          %v3591 = vunpack.c.0.s8 %v3590
          %v3592 = vlaneseq
          %v3593 = vshrl.u32 %v3592, 7
          %v3594 = vsub.s32 %v3591, %v3593
          %v3595 = vrot.slane %v3581, %v3594
          %v3596 = vcombine.low %v3588, %v3595
          %v3597 = vcombine.low %v2287, %v2291
          %v3598 = vcombine.low %v2295, %v2299
          %v3599 = vcombine.low %v2303, %v2307
          %v3600 = vcombine.low %v2311, %v2315
          %v3602 = vunpack.c.l.s4 1966171168
          %v3603 = vunpack.c.0.s8 %v3602
          %v3604 = vlaneseq
          %v3605 = vshrl.u32 %v3604, 7
          %v3606 = vsub.s32 %v3603, %v3605
          %v3607 = vrot.slane %v3597, %v3606
          %v3609 = vunpack.c.l.s4 1966171168
          %v3610 = vunpack.c.0.s8 %v3609
          %v3611 = vlaneseq
          %v3612 = vshrl.u32 %v3611, 7
          %v3613 = vsub.s32 %v3610, %v3612
          %v3614 = vrot.slane %v3598, %v3613
          %v3616 = vunpack.c.l.s4 1966171168
          %v3617 = vunpack.c.0.s8 %v3616
          %v3618 = vlaneseq
          %v3619 = vshrl.u32 %v3618, 7
          %v3620 = vsub.s32 %v3617, %v3619
          %v3621 = vrot.slane %v3599, %v3620
          %v3623 = vunpack.c.l.s4 1966171168
          %v3624 = vunpack.c.0.s8 %v3623
          %v3625 = vlaneseq
          %v3626 = vshrl.u32 %v3625, 7
          %v3627 = vsub.s32 %v3624, %v3626
          %v3628 = vrot.slane %v3600, %v3627
          %v3629 = vcombine.low %v3607, %v3614
          %v3630 = vcombine.low %v3621, %v3628
          %v3632 = vunpack.c.l.s4 1966171168
          %v3633 = vunpack.c.0.s8 %v3632
          %v3634 = vlaneseq
          %v3635 = vshrl.u32 %v3634, 7
          %v3636 = vsub.s32 %v3633, %v3635
          %v3637 = vrot.slane %v3629, %v3636
          %v3639 = vunpack.c.l.s4 1966171168
          %v3640 = vunpack.c.0.s8 %v3639
          %v3641 = vlaneseq
          %v3642 = vshrl.u32 %v3641, 7
          %v3643 = vsub.s32 %v3640, %v3642
          %v3644 = vrot.slane %v3630, %v3643
          %v3645 = vcombine.low %v3637, %v3644
          %v3646 = vcombine.low %v2319, %v2323
          %v3647 = vcombine.low %v2327, %v2331
          %v3648 = vcombine.low %v2335, %v2339
          %v3649 = vcombine.low %v2343, %v2347
          %v3651 = vunpack.c.l.s4 1966171168
          %v3652 = vunpack.c.0.s8 %v3651
          %v3653 = vlaneseq
          %v3654 = vshrl.u32 %v3653, 7
          %v3655 = vsub.s32 %v3652, %v3654
          %v3656 = vrot.slane %v3646, %v3655
          %v3658 = vunpack.c.l.s4 1966171168
          %v3659 = vunpack.c.0.s8 %v3658
          %v3660 = vlaneseq
          %v3661 = vshrl.u32 %v3660, 7
          %v3662 = vsub.s32 %v3659, %v3661
          %v3663 = vrot.slane %v3647, %v3662
          %v3665 = vunpack.c.l.s4 1966171168
          %v3666 = vunpack.c.0.s8 %v3665
          %v3667 = vlaneseq
          %v3668 = vshrl.u32 %v3667, 7
          %v3669 = vsub.s32 %v3666, %v3668
          %v3670 = vrot.slane %v3648, %v3669
          %v3672 = vunpack.c.l.s4 1966171168
          %v3673 = vunpack.c.0.s8 %v3672
          %v3674 = vlaneseq
          %v3675 = vshrl.u32 %v3674, 7
          %v3676 = vsub.s32 %v3673, %v3675
          %v3677 = vrot.slane %v3649, %v3676
          %v3678 = vcombine.low %v3656, %v3663
          %v3679 = vcombine.low %v3670, %v3677
          %v3681 = vunpack.c.l.s4 1966171168
          %v3682 = vunpack.c.0.s8 %v3681
          %v3683 = vlaneseq
          %v3684 = vshrl.u32 %v3683, 7
          %v3685 = vsub.s32 %v3682, %v3684
          %v3686 = vrot.slane %v3678, %v3685
          %v3688 = vunpack.c.l.s4 1966171168
          %v3689 = vunpack.c.0.s8 %v3688
          %v3690 = vlaneseq
          %v3691 = vshrl.u32 %v3690, 7
          %v3692 = vsub.s32 %v3689, %v3691
          %v3693 = vrot.slane %v3679, %v3692
          %v3694 = vcombine.low %v3686, %v3693
          %v3695 = vcombine.low %v2351, %v2355
          %v3696 = vcombine.low %v2359, %v2363
          %v3697 = vcombine.low %v2367, %v2371
          %v3698 = vcombine.low %v2375, %v2379
          %v3700 = vunpack.c.l.s4 1966171168
          %v3701 = vunpack.c.0.s8 %v3700
          %v3702 = vlaneseq
          %v3703 = vshrl.u32 %v3702, 7
          %v3704 = vsub.s32 %v3701, %v3703
          %v3705 = vrot.slane %v3695, %v3704
          %v3707 = vunpack.c.l.s4 1966171168
          %v3708 = vunpack.c.0.s8 %v3707
          %v3709 = vlaneseq
          %v3710 = vshrl.u32 %v3709, 7
          %v3711 = vsub.s32 %v3708, %v3710
          %v3712 = vrot.slane %v3696, %v3711
          %v3714 = vunpack.c.l.s4 1966171168
          %v3715 = vunpack.c.0.s8 %v3714
          %v3716 = vlaneseq
          %v3717 = vshrl.u32 %v3716, 7
          %v3718 = vsub.s32 %v3715, %v3717
          %v3719 = vrot.slane %v3697, %v3718
          %v3721 = vunpack.c.l.s4 1966171168
          %v3722 = vunpack.c.0.s8 %v3721
          %v3723 = vlaneseq
          %v3724 = vshrl.u32 %v3723, 7
          %v3725 = vsub.s32 %v3722, %v3724
          %v3726 = vrot.slane %v3698, %v3725
          %v3727 = vcombine.low %v3705, %v3712
          %v3728 = vcombine.low %v3719, %v3726
          %v3730 = vunpack.c.l.s4 1966171168
          %v3731 = vunpack.c.0.s8 %v3730
          %v3732 = vlaneseq
          %v3733 = vshrl.u32 %v3732, 7
          %v3734 = vsub.s32 %v3731, %v3733
          %v3735 = vrot.slane %v3727, %v3734
          %v3737 = vunpack.c.l.s4 1966171168
          %v3738 = vunpack.c.0.s8 %v3737
          %v3739 = vlaneseq
          %v3740 = vshrl.u32 %v3739, 7
          %v3741 = vsub.s32 %v3738, %v3740
          %v3742 = vrot.slane %v3728, %v3741
          %v3743 = vcombine.low %v3735, %v3742
          %v3744 = vcombine.low %v2383, %v2387
          %v3745 = vcombine.low %v2391, %v2395
          %v3746 = vcombine.low %v2399, %v2403
          %v3747 = vcombine.low %v2407, %v2411
          %v3749 = vunpack.c.l.s4 1966171168
          %v3750 = vunpack.c.0.s8 %v3749
          %v3751 = vlaneseq
          %v3752 = vshrl.u32 %v3751, 7
          %v3753 = vsub.s32 %v3750, %v3752
          %v3754 = vrot.slane %v3744, %v3753
          %v3756 = vunpack.c.l.s4 1966171168
          %v3757 = vunpack.c.0.s8 %v3756
          %v3758 = vlaneseq
          %v3759 = vshrl.u32 %v3758, 7
          %v3760 = vsub.s32 %v3757, %v3759
          %v3761 = vrot.slane %v3745, %v3760
          %v3763 = vunpack.c.l.s4 1966171168
          %v3764 = vunpack.c.0.s8 %v3763
          %v3765 = vlaneseq
          %v3766 = vshrl.u32 %v3765, 7
          %v3767 = vsub.s32 %v3764, %v3766
          %v3768 = vrot.slane %v3746, %v3767
          %v3770 = vunpack.c.l.s4 1966171168
          %v3771 = vunpack.c.0.s8 %v3770
          %v3772 = vlaneseq
          %v3773 = vshrl.u32 %v3772, 7
          %v3774 = vsub.s32 %v3771, %v3773
          %v3775 = vrot.slane %v3747, %v3774
          %v3776 = vcombine.low %v3754, %v3761
          %v3777 = vcombine.low %v3768, %v3775
          %v3779 = vunpack.c.l.s4 1966171168
          %v3780 = vunpack.c.0.s8 %v3779
          %v3781 = vlaneseq
          %v3782 = vshrl.u32 %v3781, 7
          %v3783 = vsub.s32 %v3780, %v3782
          %v3784 = vrot.slane %v3776, %v3783
          %v3786 = vunpack.c.l.s4 1966171168
          %v3787 = vunpack.c.0.s8 %v3786
          %v3788 = vlaneseq
          %v3789 = vshrl.u32 %v3788, 7
          %v3790 = vsub.s32 %v3787, %v3789
          %v3791 = vrot.slane %v3777, %v3790
          %v3792 = vcombine.low %v3784, %v3791
          %v3793 = vcombine.low %v2415, %v2419
          %v3794 = vcombine.low %v2423, %v2427
          %v3795 = vcombine.low %v2431, %v2435
          %v3796 = vcombine.low %v2439, %v2443
          %v3798 = vunpack.c.l.s4 1966171168
          %v3799 = vunpack.c.0.s8 %v3798
          %v3800 = vlaneseq
          %v3801 = vshrl.u32 %v3800, 7
          %v3802 = vsub.s32 %v3799, %v3801
          %v3803 = vrot.slane %v3793, %v3802
          %v3805 = vunpack.c.l.s4 1966171168
          %v3806 = vunpack.c.0.s8 %v3805
          %v3807 = vlaneseq
          %v3808 = vshrl.u32 %v3807, 7
          %v3809 = vsub.s32 %v3806, %v3808
          %v3810 = vrot.slane %v3794, %v3809
          %v3812 = vunpack.c.l.s4 1966171168
          %v3813 = vunpack.c.0.s8 %v3812
          %v3814 = vlaneseq
          %v3815 = vshrl.u32 %v3814, 7
          %v3816 = vsub.s32 %v3813, %v3815
          %v3817 = vrot.slane %v3795, %v3816
          %v3819 = vunpack.c.l.s4 1966171168
          %v3820 = vunpack.c.0.s8 %v3819
          %v3821 = vlaneseq
          %v3822 = vshrl.u32 %v3821, 7
          %v3823 = vsub.s32 %v3820, %v3822
          %v3824 = vrot.slane %v3796, %v3823
          %v3825 = vcombine.low %v3803, %v3810
          %v3826 = vcombine.low %v3817, %v3824
          %v3828 = vunpack.c.l.s4 1966171168
          %v3829 = vunpack.c.0.s8 %v3828
          %v3830 = vlaneseq
          %v3831 = vshrl.u32 %v3830, 7
          %v3832 = vsub.s32 %v3829, %v3831
          %v3833 = vrot.slane %v3825, %v3832
          %v3835 = vunpack.c.l.s4 1966171168
          %v3836 = vunpack.c.0.s8 %v3835
          %v3837 = vlaneseq
          %v3838 = vshrl.u32 %v3837, 7
          %v3839 = vsub.s32 %v3836, %v3838
          %v3840 = vrot.slane %v3826, %v3839
          %v3841 = vcombine.low %v3833, %v3840
          %v3842 = vcombine.low %v2447, %v2451
          %v3843 = vcombine.low %v2455, %v2459
          %v3844 = vcombine.low %v2463, %v2467
          %v3845 = vcombine.low %v2471, %v2475
          %v3847 = vunpack.c.l.s4 1966171168
          %v3848 = vunpack.c.0.s8 %v3847
          %v3849 = vlaneseq
          %v3850 = vshrl.u32 %v3849, 7
          %v3851 = vsub.s32 %v3848, %v3850
          %v3852 = vrot.slane %v3842, %v3851
          %v3854 = vunpack.c.l.s4 1966171168
          %v3855 = vunpack.c.0.s8 %v3854
          %v3856 = vlaneseq
          %v3857 = vshrl.u32 %v3856, 7
          %v3858 = vsub.s32 %v3855, %v3857
          %v3859 = vrot.slane %v3843, %v3858
          %v3861 = vunpack.c.l.s4 1966171168
          %v3862 = vunpack.c.0.s8 %v3861
          %v3863 = vlaneseq
          %v3864 = vshrl.u32 %v3863, 7
          %v3865 = vsub.s32 %v3862, %v3864
          %v3866 = vrot.slane %v3844, %v3865
          %v3868 = vunpack.c.l.s4 1966171168
          %v3869 = vunpack.c.0.s8 %v3868
          %v3870 = vlaneseq
          %v3871 = vshrl.u32 %v3870, 7
          %v3872 = vsub.s32 %v3869, %v3871
          %v3873 = vrot.slane %v3845, %v3872
          %v3874 = vcombine.low %v3852, %v3859
          %v3875 = vcombine.low %v3866, %v3873
          %v3877 = vunpack.c.l.s4 1966171168
          %v3878 = vunpack.c.0.s8 %v3877
          %v3879 = vlaneseq
          %v3880 = vshrl.u32 %v3879, 7
          %v3881 = vsub.s32 %v3878, %v3880
          %v3882 = vrot.slane %v3874, %v3881
          %v3884 = vunpack.c.l.s4 1966171168
          %v3885 = vunpack.c.0.s8 %v3884
          %v3886 = vlaneseq
          %v3887 = vshrl.u32 %v3886, 7
          %v3888 = vsub.s32 %v3885, %v3887
          %v3889 = vrot.slane %v3875, %v3888
          %v3890 = vcombine.low %v3882, %v3889
          %v3891 = vcombine.low %v2479, %v2483
          %v3892 = vcombine.low %v2487, %v2491
          %v3893 = vcombine.low %v2495, %v2499
          %v3894 = vcombine.low %v2503, %v2507
          %v3896 = vunpack.c.l.s4 1966171168
          %v3897 = vunpack.c.0.s8 %v3896
          %v3898 = vlaneseq
          %v3899 = vshrl.u32 %v3898, 7
          %v3900 = vsub.s32 %v3897, %v3899
          %v3901 = vrot.slane %v3891, %v3900
          %v3903 = vunpack.c.l.s4 1966171168
          %v3904 = vunpack.c.0.s8 %v3903
          %v3905 = vlaneseq
          %v3906 = vshrl.u32 %v3905, 7
          %v3907 = vsub.s32 %v3904, %v3906
          %v3908 = vrot.slane %v3892, %v3907
          %v3910 = vunpack.c.l.s4 1966171168
          %v3911 = vunpack.c.0.s8 %v3910
          %v3912 = vlaneseq
          %v3913 = vshrl.u32 %v3912, 7
          %v3914 = vsub.s32 %v3911, %v3913
          %v3915 = vrot.slane %v3893, %v3914
          %v3917 = vunpack.c.l.s4 1966171168
          %v3918 = vunpack.c.0.s8 %v3917
          %v3919 = vlaneseq
          %v3920 = vshrl.u32 %v3919, 7
          %v3921 = vsub.s32 %v3918, %v3920
          %v3922 = vrot.slane %v3894, %v3921
          %v3923 = vcombine.low %v3901, %v3908
          %v3924 = vcombine.low %v3915, %v3922
          %v3926 = vunpack.c.l.s4 1966171168
          %v3927 = vunpack.c.0.s8 %v3926
          %v3928 = vlaneseq
          %v3929 = vshrl.u32 %v3928, 7
          %v3930 = vsub.s32 %v3927, %v3929
          %v3931 = vrot.slane %v3923, %v3930
          %v3933 = vunpack.c.l.s4 1966171168
          %v3934 = vunpack.c.0.s8 %v3933
          %v3935 = vlaneseq
          %v3936 = vshrl.u32 %v3935, 7
          %v3937 = vsub.s32 %v3934, %v3936
          %v3938 = vrot.slane %v3924, %v3937
          %v3939 = vcombine.low %v3931, %v3938
          %v3940 = vcombine.low %v2511, %v2515
          %v3941 = vcombine.low %v2519, %v2523
          %v3942 = vcombine.low %v2527, %v2531
          %v3943 = vcombine.low %v2535, %v2539
          %v3945 = vunpack.c.l.s4 1966171168
          %v3946 = vunpack.c.0.s8 %v3945
          %v3947 = vlaneseq
          %v3948 = vshrl.u32 %v3947, 7
          %v3949 = vsub.s32 %v3946, %v3948
          %v3950 = vrot.slane %v3940, %v3949
          %v3952 = vunpack.c.l.s4 1966171168
          %v3953 = vunpack.c.0.s8 %v3952
          %v3954 = vlaneseq
          %v3955 = vshrl.u32 %v3954, 7
          %v3956 = vsub.s32 %v3953, %v3955
          %v3957 = vrot.slane %v3941, %v3956
          %v3959 = vunpack.c.l.s4 1966171168
          %v3960 = vunpack.c.0.s8 %v3959
          %v3961 = vlaneseq
          %v3962 = vshrl.u32 %v3961, 7
          %v3963 = vsub.s32 %v3960, %v3962
          %v3964 = vrot.slane %v3942, %v3963
          %v3966 = vunpack.c.l.s4 1966171168
          %v3967 = vunpack.c.0.s8 %v3966
          %v3968 = vlaneseq
          %v3969 = vshrl.u32 %v3968, 7
          %v3970 = vsub.s32 %v3967, %v3969
          %v3971 = vrot.slane %v3943, %v3970
          %v3972 = vcombine.low %v3950, %v3957
          %v3973 = vcombine.low %v3964, %v3971
          %v3975 = vunpack.c.l.s4 1966171168
          %v3976 = vunpack.c.0.s8 %v3975
          %v3977 = vlaneseq
          %v3978 = vshrl.u32 %v3977, 7
          %v3979 = vsub.s32 %v3976, %v3978
          %v3980 = vrot.slane %v3972, %v3979
          %v3982 = vunpack.c.l.s4 1966171168
          %v3983 = vunpack.c.0.s8 %v3982
          %v3984 = vlaneseq
          %v3985 = vshrl.u32 %v3984, 7
          %v3986 = vsub.s32 %v3983, %v3985
          %v3987 = vrot.slane %v3973, %v3986
          %v3988 = vcombine.low %v3980, %v3987
          %v3989 = vcombine.low %v2543, %v2547
          %v3990 = vcombine.low %v2551, %v2555
          %v3991 = vcombine.low %v2559, %v2563
          %v3992 = vcombine.low %v2567, %v2571
          %v3994 = vunpack.c.l.s4 1966171168
          %v3995 = vunpack.c.0.s8 %v3994
          %v3996 = vlaneseq
          %v3997 = vshrl.u32 %v3996, 7
          %v3998 = vsub.s32 %v3995, %v3997
          %v3999 = vrot.slane %v3989, %v3998
          %v4001 = vunpack.c.l.s4 1966171168
          %v4002 = vunpack.c.0.s8 %v4001
          %v4003 = vlaneseq
          %v4004 = vshrl.u32 %v4003, 7
          %v4005 = vsub.s32 %v4002, %v4004
          %v4006 = vrot.slane %v3990, %v4005
          %v4008 = vunpack.c.l.s4 1966171168
          %v4009 = vunpack.c.0.s8 %v4008
          %v4010 = vlaneseq
          %v4011 = vshrl.u32 %v4010, 7
          %v4012 = vsub.s32 %v4009, %v4011
          %v4013 = vrot.slane %v3991, %v4012
          %v4015 = vunpack.c.l.s4 1966171168
          %v4016 = vunpack.c.0.s8 %v4015
          %v4017 = vlaneseq
          %v4018 = vshrl.u32 %v4017, 7
          %v4019 = vsub.s32 %v4016, %v4018
          %v4020 = vrot.slane %v3992, %v4019
          %v4021 = vcombine.low %v3999, %v4006
          %v4022 = vcombine.low %v4013, %v4020
          %v4024 = vunpack.c.l.s4 1966171168
          %v4025 = vunpack.c.0.s8 %v4024
          %v4026 = vlaneseq
          %v4027 = vshrl.u32 %v4026, 7
          %v4028 = vsub.s32 %v4025, %v4027
          %v4029 = vrot.slane %v4021, %v4028
          %v4031 = vunpack.c.l.s4 1966171168
          %v4032 = vunpack.c.0.s8 %v4031
          %v4033 = vlaneseq
          %v4034 = vshrl.u32 %v4033, 7
          %v4035 = vsub.s32 %v4032, %v4034
          %v4036 = vrot.slane %v4022, %v4035
          %v4037 = vcombine.low %v4029, %v4036
          %v4038 = vcombine.low %v2575, %v2579
          %v4039 = vcombine.low %v2583, %v2587
          %v4040 = vcombine.low %v2591, %v2595
          %v4041 = vcombine.low %v2599, %v2603
          %v4043 = vunpack.c.l.s4 1966171168
          %v4044 = vunpack.c.0.s8 %v4043
          %v4045 = vlaneseq
          %v4046 = vshrl.u32 %v4045, 7
          %v4047 = vsub.s32 %v4044, %v4046
          %v4048 = vrot.slane %v4038, %v4047
          %v4050 = vunpack.c.l.s4 1966171168
          %v4051 = vunpack.c.0.s8 %v4050
          %v4052 = vlaneseq
          %v4053 = vshrl.u32 %v4052, 7
          %v4054 = vsub.s32 %v4051, %v4053
          %v4055 = vrot.slane %v4039, %v4054
          %v4057 = vunpack.c.l.s4 1966171168
          %v4058 = vunpack.c.0.s8 %v4057
          %v4059 = vlaneseq
          %v4060 = vshrl.u32 %v4059, 7
          %v4061 = vsub.s32 %v4058, %v4060
          %v4062 = vrot.slane %v4040, %v4061
          %v4064 = vunpack.c.l.s4 1966171168
          %v4065 = vunpack.c.0.s8 %v4064
          %v4066 = vlaneseq
          %v4067 = vshrl.u32 %v4066, 7
          %v4068 = vsub.s32 %v4065, %v4067
          %v4069 = vrot.slane %v4041, %v4068
          %v4070 = vcombine.low %v4048, %v4055
          %v4071 = vcombine.low %v4062, %v4069
          %v4073 = vunpack.c.l.s4 1966171168
          %v4074 = vunpack.c.0.s8 %v4073
          %v4075 = vlaneseq
          %v4076 = vshrl.u32 %v4075, 7
          %v4077 = vsub.s32 %v4074, %v4076
          %v4078 = vrot.slane %v4070, %v4077
          %v4080 = vunpack.c.l.s4 1966171168
          %v4081 = vunpack.c.0.s8 %v4080
          %v4082 = vlaneseq
          %v4083 = vshrl.u32 %v4082, 7
          %v4084 = vsub.s32 %v4081, %v4083
          %v4085 = vrot.slane %v4071, %v4084
          %v4086 = vcombine.low %v4078, %v4085
          %v4087 = vcombine.low %v2607, %v2611
          %v4088 = vcombine.low %v2615, %v2619
          %v4089 = vcombine.low %v2623, %v2627
          %v4090 = vcombine.low %v2631, %v2635
          %v4092 = vunpack.c.l.s4 1966171168
          %v4093 = vunpack.c.0.s8 %v4092
          %v4094 = vlaneseq
          %v4095 = vshrl.u32 %v4094, 7
          %v4096 = vsub.s32 %v4093, %v4095
          %v4097 = vrot.slane %v4087, %v4096
          %v4099 = vunpack.c.l.s4 1966171168
          %v4100 = vunpack.c.0.s8 %v4099
          %v4101 = vlaneseq
          %v4102 = vshrl.u32 %v4101, 7
          %v4103 = vsub.s32 %v4100, %v4102
          %v4104 = vrot.slane %v4088, %v4103
          %v4106 = vunpack.c.l.s4 1966171168
          %v4107 = vunpack.c.0.s8 %v4106
          %v4108 = vlaneseq
          %v4109 = vshrl.u32 %v4108, 7
          %v4110 = vsub.s32 %v4107, %v4109
          %v4111 = vrot.slane %v4089, %v4110
          %v4113 = vunpack.c.l.s4 1966171168
          %v4114 = vunpack.c.0.s8 %v4113
          %v4115 = vlaneseq
          %v4116 = vshrl.u32 %v4115, 7
          %v4117 = vsub.s32 %v4114, %v4116
          %v4118 = vrot.slane %v4090, %v4117
          %v4119 = vcombine.low %v4097, %v4104
          %v4120 = vcombine.low %v4111, %v4118
          %v4122 = vunpack.c.l.s4 1966171168
          %v4123 = vunpack.c.0.s8 %v4122
          %v4124 = vlaneseq
          %v4125 = vshrl.u32 %v4124, 7
          %v4126 = vsub.s32 %v4123, %v4125
          %v4127 = vrot.slane %v4119, %v4126
          %v4129 = vunpack.c.l.s4 1966171168
          %v4130 = vunpack.c.0.s8 %v4129
          %v4131 = vlaneseq
          %v4132 = vshrl.u32 %v4131, 7
          %v4133 = vsub.s32 %v4130, %v4132
          %v4134 = vrot.slane %v4120, %v4133
          %v4135 = vcombine.low %v4127, %v4134
          %v4136 = vcombine.low %v2639, %v2643
          %v4137 = vcombine.low %v2647, %v2651
          %v4138 = vcombine.low %v2655, %v2659
          %v4139 = vcombine.low %v2663, %v2667
          %v4141 = vunpack.c.l.s4 1966171168
          %v4142 = vunpack.c.0.s8 %v4141
          %v4143 = vlaneseq
          %v4144 = vshrl.u32 %v4143, 7
          %v4145 = vsub.s32 %v4142, %v4144
          %v4146 = vrot.slane %v4136, %v4145
          %v4148 = vunpack.c.l.s4 1966171168
          %v4149 = vunpack.c.0.s8 %v4148
          %v4150 = vlaneseq
          %v4151 = vshrl.u32 %v4150, 7
          %v4152 = vsub.s32 %v4149, %v4151
          %v4153 = vrot.slane %v4137, %v4152
          %v4155 = vunpack.c.l.s4 1966171168
          %v4156 = vunpack.c.0.s8 %v4155
          %v4157 = vlaneseq
          %v4158 = vshrl.u32 %v4157, 7
          %v4159 = vsub.s32 %v4156, %v4158
          %v4160 = vrot.slane %v4138, %v4159
          %v4162 = vunpack.c.l.s4 1966171168
          %v4163 = vunpack.c.0.s8 %v4162
          %v4164 = vlaneseq
          %v4165 = vshrl.u32 %v4164, 7
          %v4166 = vsub.s32 %v4163, %v4165
          %v4167 = vrot.slane %v4139, %v4166
          %v4168 = vcombine.low %v4146, %v4153
          %v4169 = vcombine.low %v4160, %v4167
          %v4171 = vunpack.c.l.s4 1966171168
          %v4172 = vunpack.c.0.s8 %v4171
          %v4173 = vlaneseq
          %v4174 = vshrl.u32 %v4173, 7
          %v4175 = vsub.s32 %v4172, %v4174
          %v4176 = vrot.slane %v4168, %v4175
          %v4178 = vunpack.c.l.s4 1966171168
          %v4179 = vunpack.c.0.s8 %v4178
          %v4180 = vlaneseq
          %v4181 = vshrl.u32 %v4180, 7
          %v4182 = vsub.s32 %v4179, %v4181
          %v4183 = vrot.slane %v4169, %v4182
          %v4184 = vcombine.low %v4176, %v4183
          %v4185 = vcombine.low %v2671, %v2675
          %v4186 = vcombine.low %v2679, %v2683
          %v4187 = vcombine.low %v2687, %v2691
          %v4188 = vcombine.low %v2695, %v2699
          %v4190 = vunpack.c.l.s4 1966171168
          %v4191 = vunpack.c.0.s8 %v4190
          %v4192 = vlaneseq
          %v4193 = vshrl.u32 %v4192, 7
          %v4194 = vsub.s32 %v4191, %v4193
          %v4195 = vrot.slane %v4185, %v4194
          %v4197 = vunpack.c.l.s4 1966171168
          %v4198 = vunpack.c.0.s8 %v4197
          %v4199 = vlaneseq
          %v4200 = vshrl.u32 %v4199, 7
          %v4201 = vsub.s32 %v4198, %v4200
          %v4202 = vrot.slane %v4186, %v4201
          %v4204 = vunpack.c.l.s4 1966171168
          %v4205 = vunpack.c.0.s8 %v4204
          %v4206 = vlaneseq
          %v4207 = vshrl.u32 %v4206, 7
          %v4208 = vsub.s32 %v4205, %v4207
          %v4209 = vrot.slane %v4187, %v4208
          %v4211 = vunpack.c.l.s4 1966171168
          %v4212 = vunpack.c.0.s8 %v4211
          %v4213 = vlaneseq
          %v4214 = vshrl.u32 %v4213, 7
          %v4215 = vsub.s32 %v4212, %v4214
          %v4216 = vrot.slane %v4188, %v4215
          %v4217 = vcombine.low %v4195, %v4202
          %v4218 = vcombine.low %v4209, %v4216
          %v4220 = vunpack.c.l.s4 1966171168
          %v4221 = vunpack.c.0.s8 %v4220
          %v4222 = vlaneseq
          %v4223 = vshrl.u32 %v4222, 7
          %v4224 = vsub.s32 %v4221, %v4223
          %v4225 = vrot.slane %v4217, %v4224
          %v4227 = vunpack.c.l.s4 1966171168
          %v4228 = vunpack.c.0.s8 %v4227
          %v4229 = vlaneseq
          %v4230 = vshrl.u32 %v4229, 7
          %v4231 = vsub.s32 %v4228, %v4230
          %v4232 = vrot.slane %v4218, %v4231
          %v4233 = vcombine.low %v4225, %v4232
          %v4234 = vcombine.low %v2703, %v2707
          %v4235 = vcombine.low %v2711, %v2715
          %v4236 = vcombine.low %v2719, %v2723
          %v4237 = vcombine.low %v2727, %v2731
          %v4239 = vunpack.c.l.s4 1966171168
          %v4240 = vunpack.c.0.s8 %v4239
          %v4241 = vlaneseq
          %v4242 = vshrl.u32 %v4241, 7
          %v4243 = vsub.s32 %v4240, %v4242
          %v4244 = vrot.slane %v4234, %v4243
          %v4246 = vunpack.c.l.s4 1966171168
          %v4247 = vunpack.c.0.s8 %v4246
          %v4248 = vlaneseq
          %v4249 = vshrl.u32 %v4248, 7
          %v4250 = vsub.s32 %v4247, %v4249
          %v4251 = vrot.slane %v4235, %v4250
          %v4253 = vunpack.c.l.s4 1966171168
          %v4254 = vunpack.c.0.s8 %v4253
          %v4255 = vlaneseq
          %v4256 = vshrl.u32 %v4255, 7
          %v4257 = vsub.s32 %v4254, %v4256
          %v4258 = vrot.slane %v4236, %v4257
          %v4260 = vunpack.c.l.s4 1966171168
          %v4261 = vunpack.c.0.s8 %v4260
          %v4262 = vlaneseq
          %v4263 = vshrl.u32 %v4262, 7
          %v4264 = vsub.s32 %v4261, %v4263
          %v4265 = vrot.slane %v4237, %v4264
          %v4266 = vcombine.low %v4244, %v4251
          %v4267 = vcombine.low %v4258, %v4265
          %v4269 = vunpack.c.l.s4 1966171168
          %v4270 = vunpack.c.0.s8 %v4269
          %v4271 = vlaneseq
          %v4272 = vshrl.u32 %v4271, 7
          %v4273 = vsub.s32 %v4270, %v4272
          %v4274 = vrot.slane %v4266, %v4273
          %v4276 = vunpack.c.l.s4 1966171168
          %v4277 = vunpack.c.0.s8 %v4276
          %v4278 = vlaneseq
          %v4279 = vshrl.u32 %v4278, 7
          %v4280 = vsub.s32 %v4277, %v4279
          %v4281 = vrot.slane %v4267, %v4280
          %v4282 = vcombine.low %v4274, %v4281
          %v4283 = vcombine.low %v2735, %v2739
          %v4284 = vcombine.low %v2743, %v2747
          %v4285 = vcombine.low %v2751, %v2755
          %v4286 = vcombine.low %v2759, %v2763
          %v4288 = vunpack.c.l.s4 1966171168
          %v4289 = vunpack.c.0.s8 %v4288
          %v4290 = vlaneseq
          %v4291 = vshrl.u32 %v4290, 7
          %v4292 = vsub.s32 %v4289, %v4291
          %v4293 = vrot.slane %v4283, %v4292
          %v4295 = vunpack.c.l.s4 1966171168
          %v4296 = vunpack.c.0.s8 %v4295
          %v4297 = vlaneseq
          %v4298 = vshrl.u32 %v4297, 7
          %v4299 = vsub.s32 %v4296, %v4298
          %v4300 = vrot.slane %v4284, %v4299
          %v4302 = vunpack.c.l.s4 1966171168
          %v4303 = vunpack.c.0.s8 %v4302
          %v4304 = vlaneseq
          %v4305 = vshrl.u32 %v4304, 7
          %v4306 = vsub.s32 %v4303, %v4305
          %v4307 = vrot.slane %v4285, %v4306
          %v4309 = vunpack.c.l.s4 1966171168
          %v4310 = vunpack.c.0.s8 %v4309
          %v4311 = vlaneseq
          %v4312 = vshrl.u32 %v4311, 7
          %v4313 = vsub.s32 %v4310, %v4312
          %v4314 = vrot.slane %v4286, %v4313
          %v4315 = vcombine.low %v4293, %v4300
          %v4316 = vcombine.low %v4307, %v4314
          %v4318 = vunpack.c.l.s4 1966171168
          %v4319 = vunpack.c.0.s8 %v4318
          %v4320 = vlaneseq
          %v4321 = vshrl.u32 %v4320, 7
          %v4322 = vsub.s32 %v4319, %v4321
          %v4323 = vrot.slane %v4315, %v4322
          %v4325 = vunpack.c.l.s4 1966171168
          %v4326 = vunpack.c.0.s8 %v4325
          %v4327 = vlaneseq
          %v4328 = vshrl.u32 %v4327, 7
          %v4329 = vsub.s32 %v4326, %v4328
          %v4330 = vrot.slane %v4316, %v4329
          %v4331 = vcombine.low %v4323, %v4330
          %4332 = vset.pattern.permute.xlu0 0
          %4333 = vperm.xlu0 %4332, %v2812
          %v4334 = vpop.permute.xlu0 %4333
          %4335 = vset.pattern.permute.xlu0 0
          %4336 = vperm.xlu0 %4335, %v2861
          %v4337 = vpop.permute.xlu0 %4336
          %4338 = vset.pattern.permute.xlu0 0
          %4339 = vperm.xlu0 %4338, %v2910
          %v4340 = vpop.permute.xlu0 %4339
          %4341 = vset.pattern.permute.xlu0 0
          %4342 = vperm.xlu0 %4341, %v2959
          %v4343 = vpop.permute.xlu0 %4342
          %4344 = vset.pattern.permute.xlu0 0
          %4345 = vperm.xlu0 %4344, %v3008
          %v4346 = vpop.permute.xlu0 %4345
          %4347 = vset.pattern.permute.xlu0 0
          %4348 = vperm.xlu0 %4347, %v3057
          %v4349 = vpop.permute.xlu0 %4348
          %4350 = vset.pattern.permute.xlu0 0
          %4351 = vperm.xlu0 %4350, %v3106
          %v4352 = vpop.permute.xlu0 %4351
          %4353 = vset.pattern.permute.xlu0 0
          %4354 = vperm.xlu0 %4353, %v3155
          %v4355 = vpop.permute.xlu0 %4354
          %4356 = vset.pattern.permute.xlu0 0
          %4357 = vperm.xlu0 %4356, %v3204
          %v4358 = vpop.permute.xlu0 %4357
          %4359 = vset.pattern.permute.xlu0 0
          %4360 = vperm.xlu0 %4359, %v3253
          %v4361 = vpop.permute.xlu0 %4360
          %4362 = vset.pattern.permute.xlu0 0
          %4363 = vperm.xlu0 %4362, %v3302
          %v4364 = vpop.permute.xlu0 %4363
          %4365 = vset.pattern.permute.xlu0 0
          %4366 = vperm.xlu0 %4365, %v3351
          %v4367 = vpop.permute.xlu0 %4366
          %4368 = vset.pattern.permute.xlu0 0
          %4369 = vperm.xlu0 %4368, %v3400
          %v4370 = vpop.permute.xlu0 %4369
          %4371 = vset.pattern.permute.xlu0 0
          %4372 = vperm.xlu0 %4371, %v3449
          %v4373 = vpop.permute.xlu0 %4372
          %4374 = vset.pattern.permute.xlu0 0
          %4375 = vperm.xlu0 %4374, %v3498
          %v4376 = vpop.permute.xlu0 %4375
          %4377 = vset.pattern.permute.xlu0 0
          %4378 = vperm.xlu0 %4377, %v3547
          %v4379 = vpop.permute.xlu0 %4378
          %4380 = vset.pattern.permute.xlu0 0
          %4381 = vperm.xlu0 %4380, %v3596
          %v4382 = vpop.permute.xlu0 %4381
          %4383 = vset.pattern.permute.xlu0 0
          %4384 = vperm.xlu0 %4383, %v3645
          %v4385 = vpop.permute.xlu0 %4384
          %4386 = vset.pattern.permute.xlu0 0
          %4387 = vperm.xlu0 %4386, %v3694
          %v4388 = vpop.permute.xlu0 %4387
          %4389 = vset.pattern.permute.xlu0 0
          %4390 = vperm.xlu0 %4389, %v3743
          %v4391 = vpop.permute.xlu0 %4390
          %4392 = vset.pattern.permute.xlu0 0
          %4393 = vperm.xlu0 %4392, %v3792
          %v4394 = vpop.permute.xlu0 %4393
          %4395 = vset.pattern.permute.xlu0 0
          %4396 = vperm.xlu0 %4395, %v3841
          %v4397 = vpop.permute.xlu0 %4396
          %4398 = vset.pattern.permute.xlu0 0
          %4399 = vperm.xlu0 %4398, %v3890
          %v4400 = vpop.permute.xlu0 %4399
          %4401 = vset.pattern.permute.xlu0 0
          %4402 = vperm.xlu0 %4401, %v3939
          %v4403 = vpop.permute.xlu0 %4402
          %4404 = vset.pattern.permute.xlu0 0
          %4405 = vperm.xlu0 %4404, %v3988
          %v4406 = vpop.permute.xlu0 %4405
          %4407 = vset.pattern.permute.xlu0 0
          %4408 = vperm.xlu0 %4407, %v4037
          %v4409 = vpop.permute.xlu0 %4408
          %4410 = vset.pattern.permute.xlu0 0
          %4411 = vperm.xlu0 %4410, %v4086
          %v4412 = vpop.permute.xlu0 %4411
          %4413 = vset.pattern.permute.xlu0 0
          %4414 = vperm.xlu0 %4413, %v4135
          %v4415 = vpop.permute.xlu0 %4414
          %4416 = vset.pattern.permute.xlu0 0
          %4417 = vperm.xlu0 %4416, %v4184
          %v4418 = vpop.permute.xlu0 %4417
          %4419 = vset.pattern.permute.xlu0 0
          %4420 = vperm.xlu0 %4419, %v4233
          %v4421 = vpop.permute.xlu0 %4420
          %4422 = vset.pattern.permute.xlu0 0
          %4423 = vperm.xlu0 %4422, %v4282
          %v4424 = vpop.permute.xlu0 %4423
          %4425 = vset.pattern.permute.xlu0 0
          %4426 = vperm.xlu0 %4425, %v4331
          %v4427 = vpop.permute.xlu0 %4426
          %v4428 = vlaneseq
          %v4429 = vand.u32 %v4428, 127
          %v4430 = vlaneseq
          %v4431 = vshrl.u32 %v4430, 7
          %v4432 = vsub.s32 %v4429, %v4431
          %v4433 = vrot.slane %v4334, %v4432
          %v4434 = vadd.s32 %v4429, 4294967288
          %v4435 = vlaneseq
          %v4436 = vshrl.u32 %v4435, 7
          %v4437 = vsub.s32 %v4434, %v4436
          %v4438 = vrot.slane %v4337, %v4437
          %vm4439 = vcmask 130112
          %v4440 = vsel %vm4439, %v4438, %v4433
          %v4441 = vadd.s32 %v4429, 4294967280
          %v4442 = vlaneseq
          %v4443 = vshrl.u32 %v4442, 7
          %v4444 = vsub.s32 %v4441, %v4443
          %v4445 = vrot.slane %v4340, %v4444
          %vm4446 = vcmask 195712
          %v4447 = vsel %vm4446, %v4445, %v4440
          %v4448 = vadd.s32 %v4429, 4294967272
          %v4449 = vlaneseq
          %v4450 = vshrl.u32 %v4449, 7
          %v4451 = vsub.s32 %v4448, %v4450
          %v4452 = vrot.slane %v4343, %v4451
          %vm4453 = vcmask 261312
          %v4454 = vsel %vm4453, %v4452, %v4447
          %v4455 = vadd.s32 %v4429, 4294967264
          %v4456 = vlaneseq
          %v4457 = vshrl.u32 %v4456, 7
          %v4458 = vsub.s32 %v4455, %v4457
          %v4459 = vrot.slane %v4346, %v4458
          %vm4460 = vcmask 326912
          %v4461 = vsel %vm4460, %v4459, %v4454
          %v4462 = vadd.s32 %v4429, 4294967256
          %v4463 = vlaneseq
          %v4464 = vshrl.u32 %v4463, 7
          %v4465 = vsub.s32 %v4462, %v4464
          %v4466 = vrot.slane %v4349, %v4465
          %vm4467 = vcmask 392512
          %v4468 = vsel %vm4467, %v4466, %v4461
          %v4469 = vadd.s32 %v4429, 4294967248
          %v4470 = vlaneseq
          %v4471 = vshrl.u32 %v4470, 7
          %v4472 = vsub.s32 %v4469, %v4471
          %v4473 = vrot.slane %v4352, %v4472
          %vm4474 = vcmask 458112
          %v4475 = vsel %vm4474, %v4473, %v4468
          %v4476 = vadd.s32 %v4429, 4294967240
          %v4477 = vlaneseq
          %v4478 = vshrl.u32 %v4477, 7
          %v4479 = vsub.s32 %v4476, %v4478
          %v4480 = vrot.slane %v4355, %v4479
          %vm4481 = vcmask 523712
          %v4482 = vsel %vm4481, %v4480, %v4475
          %v4483 = vadd.s32 %v4429, 4294967232
          %v4484 = vlaneseq
          %v4485 = vshrl.u32 %v4484, 7
          %v4486 = vsub.s32 %v4483, %v4485
          %v4487 = vrot.slane %v4358, %v4486
          %vm4488 = vcmask 589312
          %v4489 = vsel %vm4488, %v4487, %v4482
          %v4490 = vadd.s32 %v4429, 4294967224
          %v4491 = vlaneseq
          %v4492 = vshrl.u32 %v4491, 7
          %v4493 = vsub.s32 %v4490, %v4492
          %v4494 = vrot.slane %v4361, %v4493
          %vm4495 = vcmask 654912
          %v4496 = vsel %vm4495, %v4494, %v4489
          %v4497 = vadd.s32 %v4429, 4294967216
          %v4498 = vlaneseq
          %v4499 = vshrl.u32 %v4498, 7
          %v4500 = vsub.s32 %v4497, %v4499
          %v4501 = vrot.slane %v4364, %v4500
          %vm4502 = vcmask 720512
          %v4503 = vsel %vm4502, %v4501, %v4496
          %v4504 = vadd.s32 %v4429, 4294967208
          %v4505 = vlaneseq
          %v4506 = vshrl.u32 %v4505, 7
          %v4507 = vsub.s32 %v4504, %v4506
          %v4508 = vrot.slane %v4367, %v4507
          %vm4509 = vcmask 786112
          %v4510 = vsel %vm4509, %v4508, %v4503
          %v4511 = vadd.s32 %v4429, 4294967200
          %v4512 = vlaneseq
          %v4513 = vshrl.u32 %v4512, 7
          %v4514 = vsub.s32 %v4511, %v4513
          %v4515 = vrot.slane %v4370, %v4514
          %vm4516 = vcmask 851712
          %v4517 = vsel %vm4516, %v4515, %v4510
          %v4518 = vadd.s32 %v4429, 4294967192
          %v4519 = vlaneseq
          %v4520 = vshrl.u32 %v4519, 7
          %v4521 = vsub.s32 %v4518, %v4520
          %v4522 = vrot.slane %v4373, %v4521
          %vm4523 = vcmask 917312
          %v4524 = vsel %vm4523, %v4522, %v4517
          %v4525 = vadd.s32 %v4429, 4294967184
          %v4526 = vlaneseq
          %v4527 = vshrl.u32 %v4526, 7
          %v4528 = vsub.s32 %v4525, %v4527
          %v4529 = vrot.slane %v4376, %v4528
          %vm4530 = vcmask 982912
          %v4531 = vsel %vm4530, %v4529, %v4524
          %v4532 = vadd.s32 %v4429, 4294967176
          %v4533 = vlaneseq
          %v4534 = vshrl.u32 %v4533, 7
          %v4535 = vsub.s32 %v4532, %v4534
          %v4536 = vrot.slane %v4379, %v4535
          %vm4537 = vcmask 1048512
          %v4538 = vsel %vm4537, %v4536, %v4531
          %v4539 = vlaneseq
          %v4540 = vshrl.u32 %v4539, 7
          %v4541 = vsub.s32 %v4429, %v4540
          %v4542 = vrot.slane %v4382, %v4541
          %v4543 = vlaneseq
          %v4544 = vshrl.u32 %v4543, 7
          %v4545 = vsub.s32 %v4434, %v4544
          %v4546 = vrot.slane %v4385, %v4545
          %v4547 = vsel %vm4439, %v4546, %v4542
          %v4548 = vlaneseq
          %v4549 = vshrl.u32 %v4548, 7
          %v4550 = vsub.s32 %v4441, %v4549
          %v4551 = vrot.slane %v4388, %v4550
          %v4552 = vsel %vm4446, %v4551, %v4547
          %v4553 = vlaneseq
          %v4554 = vshrl.u32 %v4553, 7
          %v4555 = vsub.s32 %v4448, %v4554
          %v4556 = vrot.slane %v4391, %v4555
          %v4557 = vsel %vm4453, %v4556, %v4552
          %v4558 = vlaneseq
          %v4559 = vshrl.u32 %v4558, 7
          %v4560 = vsub.s32 %v4455, %v4559
          %v4561 = vrot.slane %v4394, %v4560
          %v4562 = vsel %vm4460, %v4561, %v4557
          %v4563 = vlaneseq
          %v4564 = vshrl.u32 %v4563, 7
          %v4565 = vsub.s32 %v4462, %v4564
          %v4566 = vrot.slane %v4397, %v4565
          %v4567 = vsel %vm4467, %v4566, %v4562
          %v4568 = vlaneseq
          %v4569 = vshrl.u32 %v4568, 7
          %v4570 = vsub.s32 %v4469, %v4569
          %v4571 = vrot.slane %v4400, %v4570
          %v4572 = vsel %vm4474, %v4571, %v4567
          %v4573 = vlaneseq
          %v4574 = vshrl.u32 %v4573, 7
          %v4575 = vsub.s32 %v4476, %v4574
          %v4576 = vrot.slane %v4403, %v4575
          %v4577 = vsel %vm4481, %v4576, %v4572
          %v4578 = vlaneseq
          %v4579 = vshrl.u32 %v4578, 7
          %v4580 = vsub.s32 %v4483, %v4579
          %v4581 = vrot.slane %v4406, %v4580
          %v4582 = vsel %vm4488, %v4581, %v4577
          %v4583 = vlaneseq
          %v4584 = vshrl.u32 %v4583, 7
          %v4585 = vsub.s32 %v4490, %v4584
          %v4586 = vrot.slane %v4409, %v4585
          %v4587 = vsel %vm4495, %v4586, %v4582
          %v4588 = vlaneseq
          %v4589 = vshrl.u32 %v4588, 7
          %v4590 = vsub.s32 %v4497, %v4589
          %v4591 = vrot.slane %v4412, %v4590
          %v4592 = vsel %vm4502, %v4591, %v4587
          %v4593 = vlaneseq
          %v4594 = vshrl.u32 %v4593, 7
          %v4595 = vsub.s32 %v4504, %v4594
          %v4596 = vrot.slane %v4415, %v4595
          %v4597 = vsel %vm4509, %v4596, %v4592
          %v4598 = vlaneseq
          %v4599 = vshrl.u32 %v4598, 7
          %v4600 = vsub.s32 %v4511, %v4599
          %v4601 = vrot.slane %v4418, %v4600
          %v4602 = vsel %vm4516, %v4601, %v4597
          %v4603 = vlaneseq
          %v4604 = vshrl.u32 %v4603, 7
          %v4605 = vsub.s32 %v4518, %v4604
          %v4606 = vrot.slane %v4421, %v4605
          %v4607 = vsel %vm4523, %v4606, %v4602
          %v4608 = vlaneseq
          %v4609 = vshrl.u32 %v4608, 7
          %v4610 = vsub.s32 %v4525, %v4609
          %v4611 = vrot.slane %v4424, %v4610
          %v4612 = vsel %vm4530, %v4611, %v4607
          %v4613 = vlaneseq
          %v4614 = vshrl.u32 %v4613, 7
          %v4615 = vsub.s32 %v4532, %v4614
          %v4616 = vrot.slane %v4427, %v4615
          %v4617 = vsel %vm4537, %v4616, %v4612
          %v4618 = vcombine.low %v4538, %v4617
          %v4620 = vunpack.c.l.s4 1966171168
          %v4621 = vunpack.c.0.s8 %v4620
          %v4622 = vlaneseq
          %v4623 = vshrl.u32 %v4622, 7
          %v4624 = vsub.s32 %v4621, %v4623
          %v4625 = vrot.slane %v4618, %v4624
          %v4627 = vunpack.c.l.s4 1966171168
          %v4628 = vunpack.c.0.s8 %v4627
          %v4629 = vlaneseq
          %v4630 = vshrl.u32 %v4629, 7
          %v4631 = vsub.s32 %v4628, %v4630
          %v4632 = vrot.slane %v4625, %v4631
          %v4634 = vlaneseq
          %vm4635 = vcmp.ge.s32.totalorder %v4634, 0
          %vm4636 = vcmp.lt.s32.totalorder %v4634, 256
          %vm4637 = vmand %vm4635, %vm4636
          %4638 = vst.msk [vmem:[%s319] sm:$0x3] %vm4637, %v4632
        $region68: #{tpu_custom_call.1} parent=47 // pred_fallthru
          _
        %s4639 = sand.u32 %s210, 1
        %s4640 = scalar_lea.sflag [#allocation7], %s4639
        %s4641 = sand.u32 %s210, 1
        %s4642 = smul.addr %s4641, 2
        %s4643 = scalar_lea.vmem [#allocation6], %s4642
        // Predicated region
        $region69: #{tpu_custom_call.1} parent=47 // pred_check
          %p4644 = pneg %p220
        $region70: #{tpu_custom_call.1} parent=47 // pred_check_branch
          %4646 = sbr.rel (%p4644) target = $region72
        $region71: #{tpu_custom_call.1} parent=47 // pred_region
          %s4647 = ssub.s32 %s26, 1
          %p4648 = scmp.gt.s32.totalorder %s4647, 0
          %s4649 = scalar_select %p4648, %s4647, 0
          %s4650 = smul.u32 %s27, %s4649
          %s4651 = smul.u32 2, %s4650
          %s4653 = ssub.s32 32, 32
          %4654 = vsyncadd %s4640, %s4653
          %s4655 = smul.addr %s4651, 16
          %s4656 = scalar_lea.hbm %s7, %s4655
          %s4658 = sshll.u32 %s4643, 4
          %s4659 = int_to_ptr.vmem [resolvable:$true] %s4658
          %4661 = dma.vmem_to_hbm [thread:$0]  %s4659, 32, %s4656, %s4640
        $region72: #{tpu_custom_call.1} parent=47 // pred_fallthru
          _
      $region48: #{tpu_custom_call.1} parent=5 // pred_fallthru
        _
      %p4662 = scmp.le.s32.totalorder 2, %s17
      // Predicated region
      $region73: #{tpu_custom_call.1} parent=5 // pred_check
        %p4663 = pneg %p4662
      $region74: #{tpu_custom_call.1} parent=5 // pred_check_branch
        %4665 = sbr.rel (%p4663) target = $region76
      $region75: #{tpu_custom_call.1} parent=5 // pred_region
        %s4666 = ssub.s32 %s17, 2
        // Predicated region
        $region77: #{tpu_custom_call.1} parent=75 // pred_check
          %p4667 = pneg %p226
        $region78: #{tpu_custom_call.1} parent=75 // pred_check_branch
          %4669 = sbr.rel (%p4667) target = $region80
        $region79: #{tpu_custom_call.1} parent=75 // pred_region
          %s4670 = sand.u32 %s211, 1
          %s4671 = scalar_lea.sflag [#allocation7], %s4670
          %s4672 = sand.u32 %s211, 1
          %s4673 = smul.addr %s4672, 2
          %s4674 = scalar_lea.vmem [#allocation6], %s4673
          %4675 = dma.done %s4671, 32
        $region80: #{tpu_custom_call.1} parent=75 // pred_fallthru
          _
      $region76: #{tpu_custom_call.1} parent=5 // pred_fallthru
        _
    $region6: #{tpu_custom_call.1} parent=1 // loop_footer
      %s21 = sadd.s32 1, %s17
    $region7: #{tpu_custom_call.1} parent=1 // loop_footer_branch
      %16 = sbr.rel target = $region3
    $region8: #{tpu_custom_call.1} parent=1 // loop_exit
      _
    %4676 = vsyncpa [#allocation7], 1
    %s4677 = scalar_lea.sflag [#allocation7], 1
    %4678 = vsyncpa %s4677, 1

</llo_original>
